<compile_context>
chip_gen: v7x
topology: tpu7x:2x2x1
jax: 0.10.0
libtpu: 0.0.40
codegen_flags: <defaults>
</compile_context>

<pallas_src>
import functools

import jax
import jax.numpy as jnp
from jax.experimental import pallas as pl
from jax.experimental.pallas import tpu as pltpu


# ----------------------------------------------------------------------------
# Fused Pallas kernel: cv1 (1x1 + BN + SiLU) -> n x (3x3 + BN + SiLU) -> +y
# ----------------------------------------------------------------------------
def _c1_fused_kernel(x_ref, m_ref, w1_ref, b1_ref, w3_ref, b3_ref, o_ref, *,
                     H, W, E, n):
    P = (H + 2) * (W + 2)           # rows of the zero-padded flattened image
    c2 = o_ref.shape[-1]

    def silu(a):
        # exp -> EUP, approx reciprocal -> EUP; VPU stays free.
        return a * pl.reciprocal(1.0 + jnp.exp(-a), approx=True)

    mask = m_ref[...]               # (P + 2E, 1): 1.0 on interior rows else 0

    # --- cv1: 1x1 conv (folded BN) + SiLU on the extended padded flat slab.
    #     The mask zeroes padding/extension rows so the result is exactly the
    #     zero-padded y that the 3x3 conv needs. ---
    a = jnp.dot(x_ref[0], w1_ref[...], preferred_element_type=jnp.float32)
    y = silu(a + b1_ref[...]) * mask                 # (P + 2E, c2) f32
    res = y[E:E + P, :]                              # residual, aligned w/ out
    z_ext = y.astype(jnp.bfloat16)                   # conv input (bf16 for MXU)

    z = None
    for ci in range(n):
        acc = jnp.zeros((P, c2), jnp.float32)
        for dh in range(3):
            for dw in range(3):
                s = (dh - 1) * (W + 2) + (dw - 1)    # flat row shift of tap
                tap = z_ext[E + s:E + s + P, :]      # (P, c2) bf16, in VMEM
                acc = acc + jnp.dot(tap, w3_ref[ci * 9 + dh * 3 + dw],
                                    preferred_element_type=jnp.float32)
        z = silu(acc + b3_ref[ci])                   # (P, c2) f32
        if ci + 1 < n:
            # re-embed into the extended zero-padded flat layout for next conv
            zm = (z * mask[E:E + P, :]).astype(jnp.bfloat16)
            zeros = jnp.zeros((E, c2), jnp.bfloat16)
            z_ext = jnp.concatenate([zeros, zm, zeros], axis=0)

    o_ref[0] = z + res


def c1_forward(x_nchw, params, n=1):
    """C1 forward. x_nchw: (B, c1, H, W) f32 -> (B, c2, H, W) f32."""
    w1, b1, w3, b3 = params["w1"], params["b1"], params["w3"], params["b3"]
    B, c1, H, W = x_nchw.shape
    c2 = w1.shape[1]
    P = (H + 2) * (W + 2)
    E = W + 3                      # flat-row extension so all tap reads are in-bounds
    PE = P + 2 * E

    # NHWC -> spatial zero-pad -> flatten -> extend -> bf16 (fused by XLA).
    x = jnp.transpose(x_nchw, (0, 2, 3, 1)).astype(jnp.float32)
    xp = jnp.pad(x, ((0, 0), (1, 1), (1, 1), (0, 0)))
    x_ext = jnp.pad(xp.reshape(B, P, c1),
                    ((0, 0), (E, E), (0, 0))).astype(jnp.bfloat16)

    # interior-row mask in the extended flat layout (shared across the batch)
    m2 = jnp.zeros((H + 2, W + 2), jnp.float32).at[1:H + 1, 1:W + 1].set(1.0)
    mask = jnp.pad(m2.reshape(P), (E, E)).reshape(PE, 1)

    out_pf = pl.pallas_call(
        functools.partial(_c1_fused_kernel, H=H, W=W, E=E, n=n),
        out_shape=jax.ShapeDtypeStruct((B, P, c2), jnp.float32),
        grid=(B,),
        in_specs=[
            pl.BlockSpec((1, PE, c1), lambda b: (b, 0, 0)),       # x (per image)
            pl.BlockSpec((PE, 1), lambda b: (0, 0)),              # mask
            pl.BlockSpec((c1, c2), lambda b: (0, 0)),             # w1 (resident)
            pl.BlockSpec((1, c2), lambda b: (0, 0)),              # b1
            pl.BlockSpec((n * 9, c2, c2), lambda b: (0, 0, 0)),   # w3 (resident)
            pl.BlockSpec((n, 1, c2), lambda b: (0, 0, 0)),        # b3
        ],
        out_specs=pl.BlockSpec((1, P, c2), lambda b: (b, 0, 0)),
        compiler_params=pltpu.CompilerParams(
            dimension_semantics=("parallel",)),
    )(x_ext, mask, w1.astype(jnp.bfloat16), b1.reshape(1, c2),
      w3.astype(jnp.bfloat16), b3.reshape(n, 1, c2))

    # drop the padded border rows and return NCHW
    out = out_pf.reshape(B, H + 2, W + 2, c2)[:, 1:H + 1, 1:W + 1, :]
    return jnp.transpose(out, (0, 3, 1, 2))


# ----------------------------------------------------------------------------
# Synthetic parameters (PyTorch layouts, BatchNorm folded in eval mode)
# ----------------------------------------------------------------------------
def init_params(key, c1, c2, n=1, eps=1e-5):
    ks = iter(jax.random.split(key, 3 * (n + 1)))
    # cv1: Conv2d(c1, c2, 1, bias=False) + BN(c2)
    w = jax.random.normal(next(ks), (c2, c1, 1, 1), jnp.float32) * 0.2
    gamma = 1.0 + 0.1 * jax.random.normal(next(ks), (c2,), jnp.float32)
    beta = 0.1 * jax.random.normal(next(ks), (c2,), jnp.float32)
    scale = gamma / jnp.sqrt(1.0 + eps)        # running_var=1, running_mean=0
    w1 = jnp.transpose(w, (2, 3, 1, 0)).reshape(c1, c2) * scale[None, :]
    b1 = beta
    # m: n x [Conv2d(c2, c2, 3, pad=1, bias=False) + BN(c2)]
    w3_list, b3_list = [], []
    for _ in range(n):
        w = jax.random.normal(next(ks), (c2, c2, 3, 3), jnp.float32) * 0.1
        gamma = 1.0 + 0.1 * jax.random.normal(next(ks), (c2,), jnp.float32)
        beta = 0.1 * jax.random.normal(next(ks), (c2,), jnp.float32)
        scale = gamma / jnp.sqrt(1.0 + eps)
        # (c2out, c2in, 3, 3) -> taps ordered (dh, dw): (9, c2in, c2out)
        wt = jnp.transpose(w, (2, 3, 1, 0)).reshape(9, c2, c2)
        w3_list.append(wt * scale[None, None, :])
        b3_list.append(beta)
    return {"w1": w1, "b1": b1,
            "w3": jnp.concatenate(w3_list, axis=0),     # (n*9, c2, c2)
            "b3": jnp.stack(b3_list, axis=0)}           # (n, c2)


# ----------------------------------------------------------------------------
# Pure-JAX reference (f32) for a tolerance check
# ----------------------------------------------------------------------------
def c1_reference(x_nchw, params, n=1):
    x = jnp.transpose(x_nchw, (0, 2, 3, 1)).astype(jnp.float32)
    B, H, W, _ = x.shape
    c2 = params["w1"].shape[1]
    y = jax.nn.silu(jnp.einsum("bhwc,cd->bhwd", x, params["w1"]) + params["b1"])
    z = y
    for ci in range(n):
        zp = jnp.pad(z, ((0, 0), (1, 1), (1, 1), (0, 0)))
        acc = jnp.zeros((B, H, W, c2), jnp.float32)
        for dh in range(3):
            for dw in range(3):
                acc = acc + jnp.einsum("bhwc,cd->bhwd",
                                       zp[:, dh:dh + H, dw:dw + W, :],
                                       params["w3"][ci * 9 + dh * 3 + dw])
        z = jax.nn.silu(acc + params["b3"][ci])
    return jnp.transpose(z + y, (0, 3, 1, 2))


if __name__ == "__main__":
    key = jax.random.PRNGKey(0)
    kx, kp = jax.random.split(key)

    B, c1, c2, H, W, n = 2, 4, 8, 16, 16, 1
    x = jax.random.normal(kx, (B, c1, H, W), jnp.float32)
    params = init_params(kp, c1, c2, n=n)

    fwd = jax.jit(lambda xx, pp: c1_forward(xx, pp, n=n))
    out = jax.block_until_ready(fwd(x, params))

    assert out.shape == (B, c2, H, W), out.shape
    assert bool(jnp.all(jnp.isfinite(out)))

    # loose tolerance: kernel uses bf16 MXU inputs + approx reciprocal
    ref = c1_reference(x, params, n=n)
    max_err = float(jnp.max(jnp.abs(out - ref)))
    assert bool(jnp.allclose(out, ref, atol=5e-2, rtol=1e-1)), max_err

    print("KERNEL_OK")
</pallas_src>

<mosaic_0001>
module attributes {stable_mosaic.version = 11 : i64} {
  func.func @_c1_fused_kernel(%arg0: i32, %arg1: memref<1x362x4xbf16, #tpu.memory_space<vmem>>, %arg2: memref<362x1xf32, #tpu.memory_space<vmem>>, %arg3: memref<4x8xbf16, #tpu.memory_space<vmem>>, %arg4: memref<1x8xf32, #tpu.memory_space<vmem>>, %arg5: memref<9x8x8xbf16, #tpu.memory_space<vmem>>, %arg6: memref<1x1x8xf32, #tpu.memory_space<vmem>>, %arg7: memref<1x324x8xf32, #tpu.memory_space<vmem>>) attributes {dimension_semantics = [#tpu.dimension_semantics<parallel>], iteration_bounds = array<i64: 2>, scalar_prefetch = 0 : i64, scratch_operands = 0 : i64, tpu.core_type = #tpu.core_type<tc>, window_params = [{transform_indices = @transform_0, window_bounds = array<i64: 1, 362, 4>}, {pipeline_mode = #tpu.pipeline_mode<synchronous>, transform_indices = @transform_1, window_bounds = array<i64: 362, 1>}, {pipeline_mode = #tpu.pipeline_mode<synchronous>, transform_indices = @transform_2, window_bounds = array<i64: 4, 8>}, {pipeline_mode = #tpu.pipeline_mode<synchronous>, transform_indices = @transform_3, window_bounds = array<i64: 1, 8>}, {pipeline_mode = #tpu.pipeline_mode<synchronous>, transform_indices = @transform_4, window_bounds = array<i64: 9, 8, 8>}, {pipeline_mode = #tpu.pipeline_mode<synchronous>, transform_indices = @transform_5, window_bounds = array<i64: 1, 1, 8>}, {transform_indices = @transform_6, window_bounds = array<i64: 1, 324, 8>}]} {
    %c0 = arith.constant 0 : index
    %c0_0 = arith.constant 0 : index
    %0 = vector.load %arg2[%c0, %c0_0] : memref<362x1xf32, #tpu.memory_space<vmem>>, vector<362x1xf32>
    %c0_1 = arith.constant 0 : index
    %c0_2 = arith.constant 0 : index
    %c0_3 = arith.constant 0 : index
    %1 = vector.load %arg1[%c0_1, %c0_2, %c0_3] : memref<1x362x4xbf16, #tpu.memory_space<vmem>>, vector<1x362x4xbf16>
    %2 = vector.shape_cast %1 : vector<1x362x4xbf16> to vector<362x4xbf16>
    %c0_4 = arith.constant 0 : index
    %c0_5 = arith.constant 0 : index
    %3 = vector.load %arg3[%c0_4, %c0_5] : memref<4x8xbf16, #tpu.memory_space<vmem>>, vector<4x8xbf16>
    %cst = arith.constant dense<0.000000e+00> : vector<362x8xf32>
    %4 = tpu.matmul %2, %3, %cst {dimension_numbers = #tpu.dot_dimension_numbers<[1], [0], [0], [1], [0, 0, 1, 1], [], []>} : vector<362x4xbf16>, vector<4x8xbf16>, vector<362x8xf32> -> vector<362x8xf32>
    %c0_6 = arith.constant 0 : index
    %c0_7 = arith.constant 0 : index
    %5 = vector.load %arg4[%c0_6, %c0_7] : memref<1x8xf32, #tpu.memory_space<vmem>>, vector<1x8xf32>
    %6 = vector.broadcast %5 : vector<1x8xf32> to vector<362x8xf32>
    %7 = arith.addf %4, %6 : vector<362x8xf32>
    %cst_8 = arith.constant 0.000000e+00 : f32
    %8 = vector.broadcast %cst_8 : f32 to vector<362x8xf32>
    %9 = arith.subf %8, %7 : vector<362x8xf32>
    %10 = math.exp %9 : vector<362x8xf32>
    %cst_9 = arith.constant 1.000000e+00 : f32
    %11 = vector.broadcast %cst_9 : f32 to vector<362x8xf32>
    %12 = arith.addf %11, %10 : vector<362x8xf32>
    %13 = tpu.reciprocal %12 {approx = true} : vector<362x8xf32> -> vector<362x8xf32>
    %14 = arith.mulf %7, %13 : vector<362x8xf32>
    %15 = vector.broadcast %0 : vector<362x1xf32> to vector<362x8xf32>
    %16 = arith.mulf %14, %15 : vector<362x8xf32>
    %17 = vector.extract_strided_slice %16 {offsets = [19, 0], sizes = [324, 8], strides = [1, 1]} : vector<362x8xf32> to vector<324x8xf32>
    %18 = arith.truncf %16 : vector<362x8xf32> to vector<362x8xbf16>
    %cst_10 = arith.constant 0.000000e+00 : f32
    %19 = vector.broadcast %cst_10 : f32 to vector<324x8xf32>
    %20 = vector.extract_strided_slice %18 {offsets = [0, 0], sizes = [324, 8], strides = [1, 1]} : vector<362x8xbf16> to vector<324x8xbf16>
    %c0_11 = arith.constant 0 : index
    %c0_12 = arith.constant 0 : index
    %c0_13 = arith.constant 0 : index
    %21 = vector.load %arg5[%c0_11, %c0_12, %c0_13] : memref<9x8x8xbf16, #tpu.memory_space<vmem>>, vector<1x8x8xbf16>
    %22 = vector.shape_cast %21 : vector<1x8x8xbf16> to vector<8x8xbf16>
    %cst_14 = arith.constant dense<0.000000e+00> : vector<324x8xf32>
    %23 = tpu.matmul %20, %22, %cst_14 {dimension_numbers = #tpu.dot_dimension_numbers<[1], [0], [0], [1], [0, 0, 1, 1], [], []>} : vector<324x8xbf16>, vector<8x8xbf16>, vector<324x8xf32> -> vector<324x8xf32>
    %24 = arith.addf %19, %23 : vector<324x8xf32>
    %25 = vector.extract_strided_slice %18 {offsets = [1, 0], sizes = [324, 8], strides = [1, 1]} : vector<362x8xbf16> to vector<324x8xbf16>
    %c1 = arith.constant 1 : index
    %c0_15 = arith.constant 0 : index
    %c0_16 = arith.constant 0 : index
    %26 = vector.load %arg5[%c1, %c0_15, %c0_16] : memref<9x8x8xbf16, #tpu.memory_space<vmem>>, vector<1x8x8xbf16>
    %27 = vector.shape_cast %26 : vector<1x8x8xbf16> to vector<8x8xbf16>
    %cst_17 = arith.constant dense<0.000000e+00> : vector<324x8xf32>
    %28 = tpu.matmul %25, %27, %cst_17 {dimension_numbers = #tpu.dot_dimension_numbers<[1], [0], [0], [1], [0, 0, 1, 1], [], []>} : vector<324x8xbf16>, vector<8x8xbf16>, vector<324x8xf32> -> vector<324x8xf32>
    %29 = arith.addf %24, %28 : vector<324x8xf32>
    %30 = vector.extract_strided_slice %18 {offsets = [2, 0], sizes = [324, 8], strides = [1, 1]} : vector<362x8xbf16> to vector<324x8xbf16>
    %c2 = arith.constant 2 : index
    %c0_18 = arith.constant 0 : index
    %c0_19 = arith.constant 0 : index
    %31 = vector.load %arg5[%c2, %c0_18, %c0_19] : memref<9x8x8xbf16, #tpu.memory_space<vmem>>, vector<1x8x8xbf16>
    %32 = vector.shape_cast %31 : vector<1x8x8xbf16> to vector<8x8xbf16>
    %cst_20 = arith.constant dense<0.000000e+00> : vector<324x8xf32>
    %33 = tpu.matmul %30, %32, %cst_20 {dimension_numbers = #tpu.dot_dimension_numbers<[1], [0], [0], [1], [0, 0, 1, 1], [], []>} : vector<324x8xbf16>, vector<8x8xbf16>, vector<324x8xf32> -> vector<324x8xf32>
    %34 = arith.addf %29, %33 : vector<324x8xf32>
    %35 = vector.extract_strided_slice %18 {offsets = [18, 0], sizes = [324, 8], strides = [1, 1]} : vector<362x8xbf16> to vector<324x8xbf16>
    %c3 = arith.constant 3 : index
    %c0_21 = arith.constant 0 : index
    %c0_22 = arith.constant 0 : index
    %36 = vector.load %arg5[%c3, %c0_21, %c0_22] : memref<9x8x8xbf16, #tpu.memory_space<vmem>>, vector<1x8x8xbf16>
    %37 = vector.shape_cast %36 : vector<1x8x8xbf16> to vector<8x8xbf16>
    %cst_23 = arith.constant dense<0.000000e+00> : vector<324x8xf32>
    %38 = tpu.matmul %35, %37, %cst_23 {dimension_numbers = #tpu.dot_dimension_numbers<[1], [0], [0], [1], [0, 0, 1, 1], [], []>} : vector<324x8xbf16>, vector<8x8xbf16>, vector<324x8xf32> -> vector<324x8xf32>
    %39 = arith.addf %34, %38 : vector<324x8xf32>
    %40 = vector.extract_strided_slice %18 {offsets = [19, 0], sizes = [324, 8], strides = [1, 1]} : vector<362x8xbf16> to vector<324x8xbf16>
    %c4 = arith.constant 4 : index
    %c0_24 = arith.constant 0 : index
    %c0_25 = arith.constant 0 : index
    %41 = vector.load %arg5[%c4, %c0_24, %c0_25] : memref<9x8x8xbf16, #tpu.memory_space<vmem>>, vector<1x8x8xbf16>
    %42 = vector.shape_cast %41 : vector<1x8x8xbf16> to vector<8x8xbf16>
    %cst_26 = arith.constant dense<0.000000e+00> : vector<324x8xf32>
    %43 = tpu.matmul %40, %42, %cst_26 {dimension_numbers = #tpu.dot_dimension_numbers<[1], [0], [0], [1], [0, 0, 1, 1], [], []>} : vector<324x8xbf16>, vector<8x8xbf16>, vector<324x8xf32> -> vector<324x8xf32>
    %44 = arith.addf %39, %43 : vector<324x8xf32>
    %45 = vector.extract_strided_slice %18 {offsets = [20, 0], sizes = [324, 8], strides = [1, 1]} : vector<362x8xbf16> to vector<324x8xbf16>
    %c5 = arith.constant 5 : index
    %c0_27 = arith.constant 0 : index
    %c0_28 = arith.constant 0 : index
    %46 = vector.load %arg5[%c5, %c0_27, %c0_28] : memref<9x8x8xbf16, #tpu.memory_space<vmem>>, vector<1x8x8xbf16>
    %47 = vector.shape_cast %46 : vector<1x8x8xbf16> to vector<8x8xbf16>
    %cst_29 = arith.constant dense<0.000000e+00> : vector<324x8xf32>
    %48 = tpu.matmul %45, %47, %cst_29 {dimension_numbers = #tpu.dot_dimension_numbers<[1], [0], [0], [1], [0, 0, 1, 1], [], []>} : vector<324x8xbf16>, vector<8x8xbf16>, vector<324x8xf32> -> vector<324x8xf32>
    %49 = arith.addf %44, %48 : vector<324x8xf32>
    %50 = vector.extract_strided_slice %18 {offsets = [36, 0], sizes = [324, 8], strides = [1, 1]} : vector<362x8xbf16> to vector<324x8xbf16>
    %c6 = arith.constant 6 : index
    %c0_30 = arith.constant 0 : index
    %c0_31 = arith.constant 0 : index
    %51 = vector.load %arg5[%c6, %c0_30, %c0_31] : memref<9x8x8xbf16, #tpu.memory_space<vmem>>, vector<1x8x8xbf16>
    %52 = vector.shape_cast %51 : vector<1x8x8xbf16> to vector<8x8xbf16>
    %cst_32 = arith.constant dense<0.000000e+00> : vector<324x8xf32>
    %53 = tpu.matmul %50, %52, %cst_32 {dimension_numbers = #tpu.dot_dimension_numbers<[1], [0], [0], [1], [0, 0, 1, 1], [], []>} : vector<324x8xbf16>, vector<8x8xbf16>, vector<324x8xf32> -> vector<324x8xf32>
    %54 = arith.addf %49, %53 : vector<324x8xf32>
    %55 = vector.extract_strided_slice %18 {offsets = [37, 0], sizes = [324, 8], strides = [1, 1]} : vector<362x8xbf16> to vector<324x8xbf16>
    %c7 = arith.constant 7 : index
    %c0_33 = arith.constant 0 : index
    %c0_34 = arith.constant 0 : index
    %56 = vector.load %arg5[%c7, %c0_33, %c0_34] : memref<9x8x8xbf16, #tpu.memory_space<vmem>>, vector<1x8x8xbf16>
    %57 = vector.shape_cast %56 : vector<1x8x8xbf16> to vector<8x8xbf16>
    %cst_35 = arith.constant dense<0.000000e+00> : vector<324x8xf32>
    %58 = tpu.matmul %55, %57, %cst_35 {dimension_numbers = #tpu.dot_dimension_numbers<[1], [0], [0], [1], [0, 0, 1, 1], [], []>} : vector<324x8xbf16>, vector<8x8xbf16>, vector<324x8xf32> -> vector<324x8xf32>
    %59 = arith.addf %54, %58 : vector<324x8xf32>
    %60 = vector.extract_strided_slice %18 {offsets = [38, 0], sizes = [324, 8], strides = [1, 1]} : vector<362x8xbf16> to vector<324x8xbf16>
    %c8 = arith.constant 8 : index
    %c0_36 = arith.constant 0 : index
    %c0_37 = arith.constant 0 : index
    %61 = vector.load %arg5[%c8, %c0_36, %c0_37] : memref<9x8x8xbf16, #tpu.memory_space<vmem>>, vector<1x8x8xbf16>
    %62 = vector.shape_cast %61 : vector<1x8x8xbf16> to vector<8x8xbf16>
    %cst_38 = arith.constant dense<0.000000e+00> : vector<324x8xf32>
    %63 = tpu.matmul %60, %62, %cst_38 {dimension_numbers = #tpu.dot_dimension_numbers<[1], [0], [0], [1], [0, 0, 1, 1], [], []>} : vector<324x8xbf16>, vector<8x8xbf16>, vector<324x8xf32> -> vector<324x8xf32>
    %64 = arith.addf %59, %63 : vector<324x8xf32>
    %c0_39 = arith.constant 0 : index
    %c0_40 = arith.constant 0 : index
    %c0_41 = arith.constant 0 : index
    %65 = vector.load %arg6[%c0_39, %c0_40, %c0_41] : memref<1x1x8xf32, #tpu.memory_space<vmem>>, vector<1x1x8xf32>
    %66 = vector.shape_cast %65 : vector<1x1x8xf32> to vector<1x8xf32>
    %67 = vector.broadcast %66 : vector<1x8xf32> to vector<324x8xf32>
    %68 = arith.addf %64, %67 : vector<324x8xf32>
    %cst_42 = arith.constant 0.000000e+00 : f32
    %69 = vector.broadcast %cst_42 : f32 to vector<324x8xf32>
    %70 = arith.subf %69, %68 : vector<324x8xf32>
    %71 = math.exp %70 : vector<324x8xf32>
    %cst_43 = arith.constant 1.000000e+00 : f32
    %72 = vector.broadcast %cst_43 : f32 to vector<324x8xf32>
    %73 = arith.addf %72, %71 : vector<324x8xf32>
    %74 = tpu.reciprocal %73 {approx = true} : vector<324x8xf32> -> vector<324x8xf32>
    %75 = arith.mulf %68, %74 : vector<324x8xf32>
    %76 = arith.addf %75, %17 : vector<324x8xf32>
    %c0_44 = arith.constant 0 : index
    %c0_45 = arith.constant 0 : index
    %c0_46 = arith.constant 0 : index
    %77 = vector.load %arg7[%c0_44, %c0_45, %c0_46] : memref<1x324x8xf32, #tpu.memory_space<vmem>>, vector<1x324x8xf32>
    %78 = vector.shape_cast %77 : vector<1x324x8xf32> to vector<324x8xf32>
    %79 = vector.shape_cast %76 : vector<324x8xf32> to vector<1x324x8xf32>
    tpu.vector_store %arg7[%c0_44, %c0_45, %c0_46], %79 {strides = array<i32>} : memref<1x324x8xf32, #tpu.memory_space<vmem>>, vector<1x324x8xf32>,
    return
  }
  func.func @transform_0(%arg0: i32) -> (i32, i32, i32) {
    %c0_i32 = arith.constant 0 : i32
    %c0_i32_0 = arith.constant 0 : i32
    %c0_i32_1 = arith.constant 0 : i32
    return %arg0, %c0_i32, %c0_i32_0 : i32, i32, i32
  }
  func.func @transform_1(%arg0: i32) -> (i32, i32) {
    %c0_i32 = arith.constant 0 : i32
    %c0_i32_0 = arith.constant 0 : i32
    %c0_i32_1 = arith.constant 0 : i32
    return %c0_i32, %c0_i32_0 : i32, i32
  }
  func.func @transform_2(%arg0: i32) -> (i32, i32) {
    %c0_i32 = arith.constant 0 : i32
    %c0_i32_0 = arith.constant 0 : i32
    %c0_i32_1 = arith.constant 0 : i32
    return %c0_i32, %c0_i32_0 : i32, i32
  }
  func.func @transform_3(%arg0: i32) -> (i32, i32) {
    %c0_i32 = arith.constant 0 : i32
    %c0_i32_0 = arith.constant 0 : i32
    %c0_i32_1 = arith.constant 0 : i32
    return %c0_i32, %c0_i32_0 : i32, i32
  }
  func.func @transform_4(%arg0: i32) -> (i32, i32, i32) {
    %c0_i32 = arith.constant 0 : i32
    %c0_i32_0 = arith.constant 0 : i32
    %c0_i32_1 = arith.constant 0 : i32
    %c0_i32_2 = arith.constant 0 : i32
    return %c0_i32, %c0_i32_0, %c0_i32_1 : i32, i32, i32
  }
  func.func @transform_5(%arg0: i32) -> (i32, i32, i32) {
    %c0_i32 = arith.constant 0 : i32
    %c0_i32_0 = arith.constant 0 : i32
    %c0_i32_1 = arith.constant 0 : i32
    %c0_i32_2 = arith.constant 0 : i32
    return %c0_i32, %c0_i32_0, %c0_i32_1 : i32, i32, i32
  }
  func.func @transform_6(%arg0: i32) -> (i32, i32, i32) {
    %c0_i32 = arith.constant 0 : i32
    %c0_i32_0 = arith.constant 0 : i32
    %c0_i32_1 = arith.constant 0 : i32
    return %arg0, %c0_i32, %c0_i32_0 : i32, i32, i32
  }
}

</mosaic_0001>

<llo_original>
// kernel: _lambda_.1
$region0: #{_lambda_.1}
  #allocation0 [shape = 'u32[]', space=smem, size = 0x4, offset = 0x4, fixed_abs, tag = 'smem constant byte address 0x4 - core index']
  #allocation1 [shape = 'u32[144,128]{1,0:T(1,128)}', space=vmem, size = 0x12000, scoped, tag = 'internal scratch']
  %s0 = inlined_call_operand.vmem [shape: bf16[2,362,4], index: 0, kind: input, shape index: {}]
  %s1 = inlined_call_operand.vmem [shape: f32[362,1], index: 1, kind: input, shape index: {}]
  %s2 = inlined_call_operand.vmem [shape: bf16[4,8], index: 2, kind: input, shape index: {}]
  %s3 = inlined_call_operand.vmem [shape: f32[1,8], index: 3, kind: input, shape index: {}]
  %s4 = inlined_call_operand.vmem [shape: bf16[9,8,8], index: 4, kind: input, shape index: {}]
  %s5 = inlined_call_operand.vmem [shape: f32[1,1,8], index: 5, kind: input, shape index: {}]
  %s6 = inlined_call_operand.vmem [shape: f32[2,324,8], index: 6, kind: output, shape index: {}]
  %s7 = sld [smem:[#allocation0]]
  $region57: #{_lambda_.1} parent=0
    _
  %s9 = ssub.s32 1, %s7
  %s10 = scalar_select 0, %s9, %s7
  loop: start=0, step=1, limit=4
  $region2: #{_lambda_.1} parent=0 // loop_pre_header
    _
  $region3: #{_lambda_.1} parent=0 // loop_header
    %s12 = sphi 0, %s16
    %p13 = scmp.ge.s32.totalorder %s12, 4
    %s22 = sphi 0, %s24
    %s25 = sphi 0, %s22
    %s26 = sphi 0, %s25
    %s42 = sphi 0, %s26
    %s46 = sphi 0, %s46
    %s48 = sphi 0, %s46
    %s49 = sphi 0, %s48
    %s63 = sphi 0, %s49
    %s67 = sphi 0, %s67
    %s69 = sphi 0, %s67
    %s70 = sphi 0, %s69
    %s84 = sphi 0, %s70
    %s88 = sphi 0, %s88
    %s90 = sphi 0, %s88
    %s91 = sphi 0, %s90
    %s105 = sphi 0, %s91
    %s109 = sphi 0, %s109
    %s111 = sphi 0, %s109
    %s112 = sphi 0, %s111
    %s126 = sphi 0, %s112
    %s130 = sphi 0, %s130
    %s132 = sphi 0, %s130
    %s133 = sphi 0, %s132
    %s147 = sphi 0, %s133
    %s153 = sphi 0, %s155
    %s156 = sphi 0, %s153
    %s157 = sphi 0, %s156
    %s173 = sphi 0, %s157
  $region4: #{_lambda_.1} parent=0 // loop_header_branch
    %15 = sbr.rel (%p13) target = $region8
  $region5: #{_lambda_.1} parent=0 // loop_body
    %s17 = ssub.s32 %s12, 1
    %s18 = ssub.s32 %s12, 2
    %s19 = sadd.s32 %s12, 1
    %s20 = ssub.s32 %s12, %s19
    %p21 = scmp.eq.s32.totalorder %s20, 0
    %s23 = sadd.s32 %s22, 1
    %s24 = scalar_select %p21, %s22, %s23
    %p27 = pneg %p21
    %p28 = scmp.eq.s32.totalorder %s12, 1
    %p29 = por %p27, %p28
    %p30 = scmp.ne.s32.totalorder %s22, %s25
    %p31 = scmp.eq.s32.totalorder %s12, 0
    %p32 = por %p30, %p31
    %p33 = scmp.ne.s32.totalorder %s22, %s25
    %p34 = scmp.eq.s32.totalorder %s17, 1
    %p35 = por %p33, %p34
    %p36 = scmp.ne.s32.totalorder %s25, %s26
    %p37 = scmp.eq.s32.totalorder %s17, 0
    %p38 = por %p36, %p37
    %p39 = scmp.ne.s32.totalorder %s25, %s26
    %p40 = scmp.eq.s32.totalorder %s18, 1
    %p41 = por %p39, %p40
    %p43 = scmp.ne.s32.totalorder %s26, %s42
    %p44 = scmp.eq.s32.totalorder %s18, 0
    %p45 = por %p43, %p44
    %s47 = sadd.s32 %s46, 1
    %p50 = scmp.eq.s32.totalorder %s12, 1
    %p51 = scmp.ne.s32.totalorder %s46, %s48
    %p52 = scmp.eq.s32.totalorder %s12, 0
    %p53 = por %p51, %p52
    %p54 = scmp.ne.s32.totalorder %s46, %s48
    %p55 = scmp.eq.s32.totalorder %s17, 1
    %p56 = por %p54, %p55
    %p57 = scmp.ne.s32.totalorder %s48, %s49
    %p58 = scmp.eq.s32.totalorder %s17, 0
    %p59 = por %p57, %p58
    %p60 = scmp.ne.s32.totalorder %s48, %s49
    %p61 = scmp.eq.s32.totalorder %s18, 1
    %p62 = por %p60, %p61
    %p64 = scmp.ne.s32.totalorder %s49, %s63
    %p65 = scmp.eq.s32.totalorder %s18, 0
    %p66 = por %p64, %p65
    %s68 = sadd.s32 %s67, 1
    %p71 = scmp.eq.s32.totalorder %s12, 1
    %p72 = scmp.ne.s32.totalorder %s67, %s69
    %p73 = scmp.eq.s32.totalorder %s12, 0
    %p74 = por %p72, %p73
    %p75 = scmp.ne.s32.totalorder %s67, %s69
    %p76 = scmp.eq.s32.totalorder %s17, 1
    %p77 = por %p75, %p76
    %p78 = scmp.ne.s32.totalorder %s69, %s70
    %p79 = scmp.eq.s32.totalorder %s17, 0
    %p80 = por %p78, %p79
    %p81 = scmp.ne.s32.totalorder %s69, %s70
    %p82 = scmp.eq.s32.totalorder %s18, 1
    %p83 = por %p81, %p82
    %p85 = scmp.ne.s32.totalorder %s70, %s84
    %p86 = scmp.eq.s32.totalorder %s18, 0
    %p87 = por %p85, %p86
    %s89 = sadd.s32 %s88, 1
    %p92 = scmp.eq.s32.totalorder %s12, 1
    %p93 = scmp.ne.s32.totalorder %s88, %s90
    %p94 = scmp.eq.s32.totalorder %s12, 0
    %p95 = por %p93, %p94
    %p96 = scmp.ne.s32.totalorder %s88, %s90
    %p97 = scmp.eq.s32.totalorder %s17, 1
    %p98 = por %p96, %p97
    %p99 = scmp.ne.s32.totalorder %s90, %s91
    %p100 = scmp.eq.s32.totalorder %s17, 0
    %p101 = por %p99, %p100
    %p102 = scmp.ne.s32.totalorder %s90, %s91
    %p103 = scmp.eq.s32.totalorder %s18, 1
    %p104 = por %p102, %p103
    %p106 = scmp.ne.s32.totalorder %s91, %s105
    %p107 = scmp.eq.s32.totalorder %s18, 0
    %p108 = por %p106, %p107
    %s110 = sadd.s32 %s109, 1
    %p113 = scmp.eq.s32.totalorder %s12, 1
    %p114 = scmp.ne.s32.totalorder %s109, %s111
    %p115 = scmp.eq.s32.totalorder %s12, 0
    %p116 = por %p114, %p115
    %p117 = scmp.ne.s32.totalorder %s109, %s111
    %p118 = scmp.eq.s32.totalorder %s17, 1
    %p119 = por %p117, %p118
    %p120 = scmp.ne.s32.totalorder %s111, %s112
    %p121 = scmp.eq.s32.totalorder %s17, 0
    %p122 = por %p120, %p121
    %p123 = scmp.ne.s32.totalorder %s111, %s112
    %p124 = scmp.eq.s32.totalorder %s18, 1
    %p125 = por %p123, %p124
    %p127 = scmp.ne.s32.totalorder %s112, %s126
    %p128 = scmp.eq.s32.totalorder %s18, 0
    %p129 = por %p127, %p128
    %s131 = sadd.s32 %s130, 1
    %p134 = scmp.eq.s32.totalorder %s12, 1
    %p135 = scmp.ne.s32.totalorder %s130, %s132
    %p136 = scmp.eq.s32.totalorder %s12, 0
    %p137 = por %p135, %p136
    %p138 = scmp.ne.s32.totalorder %s130, %s132
    %p139 = scmp.eq.s32.totalorder %s17, 1
    %p140 = por %p138, %p139
    %p141 = scmp.ne.s32.totalorder %s132, %s133
    %p142 = scmp.eq.s32.totalorder %s17, 0
    %p143 = por %p141, %p142
    %p144 = scmp.ne.s32.totalorder %s132, %s133
    %p145 = scmp.eq.s32.totalorder %s18, 1
    %p146 = por %p144, %p145
    %p148 = scmp.ne.s32.totalorder %s133, %s147
    %p149 = scmp.eq.s32.totalorder %s18, 0
    %p150 = por %p148, %p149
    %s151 = ssub.s32 %s12, %s19
    %p152 = scmp.eq.s32.totalorder %s151, 0
    %s154 = sadd.s32 %s153, 1
    %s155 = scalar_select %p152, %s153, %s154
    %p158 = pneg %p152
    %p159 = scmp.eq.s32.totalorder %s12, 1
    %p160 = por %p158, %p159
    %p161 = scmp.ne.s32.totalorder %s153, %s156
    %p162 = scmp.eq.s32.totalorder %s12, 0
    %p163 = por %p161, %p162
    %p164 = scmp.ne.s32.totalorder %s153, %s156
    %p165 = scmp.eq.s32.totalorder %s17, 1
    %p166 = por %p164, %p165
    %p167 = scmp.ne.s32.totalorder %s156, %s157
    %p168 = scmp.eq.s32.totalorder %s17, 0
    %p169 = por %p167, %p168
    %p170 = scmp.ne.s32.totalorder %s156, %s157
    %p171 = scmp.eq.s32.totalorder %s18, 1
    %p172 = por %p170, %p171
    %p174 = scmp.ne.s32.totalorder %s157, %s173
    %p175 = scmp.eq.s32.totalorder %s18, 0
    %p176 = por %p174, %p175
    %p177 = scmp.le.s32.totalorder 1, %s12
    %p178 = scmp.lt.s32.totalorder %s12, 3
    %p179 = pnand %p177, %p178
    %p180 = pneg %p179
    // Predicated region
    $region9: #{_lambda_.1} parent=5 // pred_check
      _
    $region10: #{_lambda_.1} parent=5 // pred_check_branch
      %182 = sbr.rel (%p179) target = $region12
    $region11: #{_lambda_.1} parent=5 // pred_region
      %s183 = ssub.s32 %s12, 1
      // Predicated region
      $region13: #{_lambda_.1} parent=11 // pred_check
        %p184 = pneg %p59
      $region14: #{_lambda_.1} parent=11 // pred_check_branch
        %186 = sbr.rel (%p184) target = $region16
      $region15: #{_lambda_.1} parent=11 // pred_region
        _
      $region16: #{_lambda_.1} parent=11 // pred_fallthru
        _
      // Predicated region
      $region17: #{_lambda_.1} parent=11 // pred_check
        %p187 = pneg %p80
      $region18: #{_lambda_.1} parent=11 // pred_check_branch
        %189 = sbr.rel (%p187) target = $region20
      $region19: #{_lambda_.1} parent=11 // pred_region
        _
      $region20: #{_lambda_.1} parent=11 // pred_fallthru
        _
      // Predicated region
      $region21: #{_lambda_.1} parent=11 // pred_check
        %p190 = pneg %p101
      $region22: #{_lambda_.1} parent=11 // pred_check_branch
        %192 = sbr.rel (%p190) target = $region24
      $region23: #{_lambda_.1} parent=11 // pred_region
        _
      $region24: #{_lambda_.1} parent=11 // pred_fallthru
        _
      // Predicated region
      $region25: #{_lambda_.1} parent=11 // pred_check
        %p193 = pneg %p122
      $region26: #{_lambda_.1} parent=11 // pred_check_branch
        %195 = sbr.rel (%p193) target = $region28
      $region27: #{_lambda_.1} parent=11 // pred_region
        _
      $region28: #{_lambda_.1} parent=11 // pred_fallthru
        _
      // Predicated region
      $region29: #{_lambda_.1} parent=11 // pred_check
        %p196 = pneg %p143
      $region30: #{_lambda_.1} parent=11 // pred_check_branch
        %198 = sbr.rel (%p196) target = $region32
      $region31: #{_lambda_.1} parent=11 // pred_region
        _
      $region32: #{_lambda_.1} parent=11 // pred_fallthru
        _
    $region12: #{_lambda_.1} parent=5 // pred_fallthru
      _
    %p199 = scmp.lt.s32.totalorder %s12, 2
    // Predicated region
    $region33: #{_lambda_.1} parent=5 // pred_check
      %p200 = pneg %p199
    $region34: #{_lambda_.1} parent=5 // pred_check_branch
      %202 = sbr.rel (%p200) target = $region36
    $region35: #{_lambda_.1} parent=5 // pred_region
      // Predicated region
      $region37: #{_lambda_.1} parent=35 // pred_check
        %p203 = pneg %p32
      $region38: #{_lambda_.1} parent=35 // pred_check_branch
        %205 = sbr.rel (%p203) target = $region40
      $region39: #{_lambda_.1} parent=35 // pred_region
        %p206 = scmp.lt.s32.totalorder %s12, 1
        %s207 = scalar_select %p206, %s12, 1
        %s208 = smul.addr %s207, 46
        %s209 = smul.addr %s208, 4
        %s210 = scalar_lea.vmem %s0, %s209
      $region40: #{_lambda_.1} parent=35 // pred_fallthru
        _
    $region36: #{_lambda_.1} parent=5 // pred_fallthru
      _
    %p211 = scmp.le.s32.totalorder 1, %s12
    %p212 = scmp.lt.s32.totalorder %s12, 3
    %p213 = pnand %p211, %p212
    %p214 = pneg %p213
    // Predicated region
    $region41: #{_lambda_.1} parent=5 // pred_check
      _
    $region42: #{_lambda_.1} parent=5 // pred_check_branch
      %216 = sbr.rel (%p213) target = $region44
    $region43: #{_lambda_.1} parent=5 // pred_region
      %s217 = ssub.s32 %s12, 1
      %p218 = scmp.lt.s32.totalorder %s17, 1
      %s219 = scalar_select %p218, %s17, 1
      %s220 = smul.addr %s219, 46
      %s221 = smul.addr %s220, 4
      %s222 = scalar_lea.vmem %s0, %s221
      %p223 = pneg %p38
      %p224 = pneg %p35
      %p225 = pneg %p59
      %p226 = pneg %p56
      %p227 = pneg %p80
      %p228 = pneg %p77
      %p229 = pneg %p101
      %p230 = pneg %p98
      %p231 = pneg %p122
      %p232 = pneg %p119
      %p233 = pneg %p143
      %p234 = pneg %p140
      %p235 = pneg %p169
      %p236 = pneg %p166
      %p237 = scmp.lt.s32.totalorder %s17, 1
      %s238 = scalar_select %p237, %s17, 1
      %s239 = smul.addr %s238, 41
      %s240 = smul.addr %s239, 8
      %s241 = scalar_lea.vmem %s6, %s240
      %p242 = scmp.lt.s32.totalorder %s17, 1
      %s243 = scalar_select %p242, %s17, 1
      %s244 = smul.addr %s243, 46
      %s245 = smul.addr %s244, 4
      %s246 = scalar_lea.vmem %s0, %s245
      %p247 = scmp.lt.s32.totalorder %s17, 1
      %s248 = scalar_select %p247, %s17, 1
      %s249 = smul.addr %s248, 41
      %s250 = smul.addr %s249, 8
      %s251 = scalar_lea.vmem %s6, %s250
      %v253 = vld [vmem:[%s1] sm:$0xff]
      %v254 = vld [vmem:[%s1 + $0x8] sm:$0xff]
      %v255 = vld [vmem:[%s1 + $0x10] sm:$0xff]
      %v256 = vld [vmem:[%s1 + $0x18] sm:$0xff]
      %v257 = vld [vmem:[%s1 + $0x20] sm:$0xff]
      %v258 = vld [vmem:[%s1 + $0x28] sm:$0xff]
      %v259 = vld [vmem:[%s1 + $0x30] sm:$0xff]
      %v260 = vld [vmem:[%s1 + $0x38] sm:$0xff]
      %v261 = vld [vmem:[%s1 + $0x40] sm:$0xff]
      %v262 = vld [vmem:[%s1 + $0x48] sm:$0xff]
      %v263 = vld [vmem:[%s1 + $0x50] sm:$0xff]
      %v264 = vld [vmem:[%s1 + $0x58] sm:$0xff]
      %v265 = vld [vmem:[%s1 + $0x60] sm:$0xff]
      %v266 = vld [vmem:[%s1 + $0x68] sm:$0xff]
      %v267 = vld [vmem:[%s1 + $0x70] sm:$0xff]
      %v268 = vld [vmem:[%s1 + $0x78] sm:$0xff]
      %v269 = vld [vmem:[%s1 + $0x80] sm:$0xff]
      %v270 = vld [vmem:[%s1 + $0x88] sm:$0xff]
      %v271 = vld [vmem:[%s1 + $0x90] sm:$0xff]
      %v272 = vld [vmem:[%s1 + $0x98] sm:$0xff]
      %v273 = vld [vmem:[%s1 + $0xa0] sm:$0xff]
      %v274 = vld [vmem:[%s1 + $0xa8] sm:$0xff]
      %v275 = vld [vmem:[%s1 + $0xb0] sm:$0xff]
      %v276 = vld [vmem:[%s1 + $0xb8] sm:$0xff]
      %v277 = vld [vmem:[%s1 + $0xc0] sm:$0xff]
      %v278 = vld [vmem:[%s1 + $0xc8] sm:$0xff]
      %v279 = vld [vmem:[%s1 + $0xd0] sm:$0xff]
      %v280 = vld [vmem:[%s1 + $0xd8] sm:$0xff]
      %v281 = vld [vmem:[%s1 + $0xe0] sm:$0xff]
      %v282 = vld [vmem:[%s1 + $0xe8] sm:$0xff]
      %v283 = vld [vmem:[%s1 + $0xf0] sm:$0xff]
      %v284 = vld [vmem:[%s1 + $0xf8] sm:$0xff]
      %v285 = vld [vmem:[%s1 + $0x100] sm:$0xff]
      %v286 = vld [vmem:[%s1 + $0x108] sm:$0xff]
      %v287 = vld [vmem:[%s1 + $0x110] sm:$0xff]
      %v288 = vld [vmem:[%s1 + $0x118] sm:$0xff]
      %v289 = vld [vmem:[%s1 + $0x120] sm:$0xff]
      %v290 = vld [vmem:[%s1 + $0x128] sm:$0xff]
      %v291 = vld [vmem:[%s1 + $0x130] sm:$0xff]
      %v292 = vld [vmem:[%s1 + $0x138] sm:$0xff]
      %v293 = vld [vmem:[%s1 + $0x140] sm:$0xff]
      %v294 = vld [vmem:[%s1 + $0x148] sm:$0xff]
      %v295 = vld [vmem:[%s1 + $0x150] sm:$0xff]
      %v296 = vld [vmem:[%s1 + $0x158] sm:$0xff]
      %v297 = vld [vmem:[%s1 + $0x160] sm:$0xff]
      %v298 = vld [vmem:[%s1 + $0x168] sm:$0x3]
      %v299 = vld [vmem:[%s246] sm:$0xf]
      %v300 = vld [vmem:[%s246 + $0x4] sm:$0xf]
      %v301 = vld [vmem:[%s246 + $0x8] sm:$0xf]
      %v302 = vld [vmem:[%s246 + $0xc] sm:$0xf]
      %v303 = vld [vmem:[%s246 + $0x10] sm:$0xf]
      %v304 = vld [vmem:[%s246 + $0x14] sm:$0xf]
      %v305 = vld [vmem:[%s246 + $0x18] sm:$0xf]
      %v306 = vld [vmem:[%s246 + $0x1c] sm:$0xf]
      %v307 = vld [vmem:[%s246 + $0x20] sm:$0xf]
      %v308 = vld [vmem:[%s246 + $0x24] sm:$0xf]
      %v309 = vld [vmem:[%s246 + $0x28] sm:$0xf]
      %v310 = vld [vmem:[%s246 + $0x2c] sm:$0xf]
      %v311 = vld [vmem:[%s246 + $0x30] sm:$0xf]
      %v312 = vld [vmem:[%s246 + $0x34] sm:$0xf]
      %v313 = vld [vmem:[%s246 + $0x38] sm:$0xf]
      %v314 = vld [vmem:[%s246 + $0x3c] sm:$0xf]
      %v315 = vld [vmem:[%s246 + $0x40] sm:$0xf]
      %v316 = vld [vmem:[%s246 + $0x44] sm:$0xf]
      %v317 = vld [vmem:[%s246 + $0x48] sm:$0xf]
      %v318 = vld [vmem:[%s246 + $0x4c] sm:$0xf]
      %v319 = vld [vmem:[%s246 + $0x50] sm:$0xf]
      %v320 = vld [vmem:[%s246 + $0x54] sm:$0xf]
      %v321 = vld [vmem:[%s246 + $0x58] sm:$0xf]
      %v322 = vld [vmem:[%s246 + $0x5c] sm:$0xf]
      %v323 = vld [vmem:[%s246 + $0x60] sm:$0xf]
      %v324 = vld [vmem:[%s246 + $0x64] sm:$0xf]
      %v325 = vld [vmem:[%s246 + $0x68] sm:$0xf]
      %v326 = vld [vmem:[%s246 + $0x6c] sm:$0xf]
      %v327 = vld [vmem:[%s246 + $0x70] sm:$0xf]
      %v328 = vld [vmem:[%s246 + $0x74] sm:$0xf]
      %v329 = vld [vmem:[%s246 + $0x78] sm:$0xf]
      %v330 = vld [vmem:[%s246 + $0x7c] sm:$0xf]
      %v331 = vld [vmem:[%s246 + $0x80] sm:$0xf]
      %v332 = vld [vmem:[%s246 + $0x84] sm:$0xf]
      %v333 = vld [vmem:[%s246 + $0x88] sm:$0xf]
      %v334 = vld [vmem:[%s246 + $0x8c] sm:$0xf]
      %v335 = vld [vmem:[%s246 + $0x90] sm:$0xf]
      %v336 = vld [vmem:[%s246 + $0x94] sm:$0xf]
      %v337 = vld [vmem:[%s246 + $0x98] sm:$0xf]
      %v338 = vld [vmem:[%s246 + $0x9c] sm:$0xf]
      %v339 = vld [vmem:[%s246 + $0xa0] sm:$0xf]
      %v340 = vld [vmem:[%s246 + $0xa4] sm:$0xf]
      %v341 = vld [vmem:[%s246 + $0xa8] sm:$0xf]
      %v342 = vld [vmem:[%s246 + $0xac] sm:$0xf]
      %v343 = vld [vmem:[%s246 + $0xb0] sm:$0xf]
      %v344 = vld [vmem:[%s246 + $0xb4] sm:$0x1]
      %v345 = vld [vmem:[%s2] sm:$0x3]
      %v346 = vld [vmem:[%s3] sm:$0x1]
      %v348 = vlaneseq
      %v349 = vshrl.u32 %v348, 7
      %v350 = vsub.s32 0, %v349
      %v351 = vrot.slane %v346, %v350
      %v399 = vunpack.c.l.b16 %v299
      %v400 = vunpack.c.l.b16 %v300
      %v401 = vunpack.c.l.b16 %v301
      %v402 = vunpack.c.l.b16 %v302
      %v403 = vunpack.c.l.b16 %v303
      %v404 = vunpack.c.l.b16 %v304
      %v405 = vunpack.c.l.b16 %v305
      %v406 = vunpack.c.l.b16 %v306
      %v407 = vunpack.c.l.b16 %v307
      %v408 = vunpack.c.l.b16 %v308
      %v409 = vunpack.c.l.b16 %v309
      %v410 = vunpack.c.l.b16 %v310
      %v411 = vunpack.c.l.b16 %v311
      %v412 = vunpack.c.l.b16 %v312
      %v413 = vunpack.c.l.b16 %v313
      %v414 = vunpack.c.l.b16 %v314
      %v415 = vunpack.c.l.b16 %v315
      %v416 = vunpack.c.l.b16 %v316
      %v417 = vunpack.c.l.b16 %v317
      %v418 = vunpack.c.l.b16 %v318
      %v419 = vunpack.c.l.b16 %v319
      %v420 = vunpack.c.l.b16 %v320
      %v421 = vunpack.c.l.b16 %v321
      %v422 = vunpack.c.l.b16 %v322
      %v423 = vunpack.c.l.b16 %v323
      %v424 = vunpack.c.l.b16 %v324
      %v425 = vunpack.c.l.b16 %v325
      %v426 = vunpack.c.l.b16 %v326
      %v427 = vunpack.c.l.b16 %v327
      %v428 = vunpack.c.l.b16 %v328
      %v429 = vunpack.c.l.b16 %v329
      %v430 = vunpack.c.l.b16 %v330
      %v431 = vunpack.c.l.b16 %v331
      %v432 = vunpack.c.l.b16 %v332
      %v433 = vunpack.c.l.b16 %v333
      %v434 = vunpack.c.l.b16 %v334
      %v435 = vunpack.c.l.b16 %v335
      %v436 = vunpack.c.l.b16 %v336
      %v437 = vunpack.c.l.b16 %v337
      %v438 = vunpack.c.l.b16 %v338
      %v439 = vunpack.c.l.b16 %v339
      %v440 = vunpack.c.l.b16 %v340
      %v441 = vunpack.c.l.b16 %v341
      %v442 = vunpack.c.l.b16 %v342
      %v443 = vunpack.c.l.b16 %v343
      %v444 = vunpack.c.l.b16 %v344
      %v445 = vpack.c.b16 %v400, %v399
      %v446 = vpack.c.b16 %v402, %v401
      %v447 = vpack.c.b16 %v404, %v403
      %v448 = vpack.c.b16 %v406, %v405
      %v449 = vpack.c.b16 %v408, %v407
      %v450 = vpack.c.b16 %v410, %v409
      %v451 = vpack.c.b16 %v412, %v411
      %v452 = vpack.c.b16 %v414, %v413
      %v453 = vpack.c.b16 %v416, %v415
      %v454 = vpack.c.b16 %v418, %v417
      %v455 = vpack.c.b16 %v420, %v419
      %v456 = vpack.c.b16 %v422, %v421
      %v457 = vpack.c.b16 %v424, %v423
      %v458 = vpack.c.b16 %v426, %v425
      %v459 = vpack.c.b16 %v428, %v427
      %v460 = vpack.c.b16 %v430, %v429
      %v461 = vpack.c.b16 %v432, %v431
      %v462 = vpack.c.b16 %v434, %v433
      %v463 = vpack.c.b16 %v436, %v435
      %v464 = vpack.c.b16 %v438, %v437
      %v465 = vpack.c.b16 %v440, %v439
      %v466 = vpack.c.b16 %v442, %v441
      %v467 = vpack.c.b16 %v444, %v443
      %vm468 = vcmask 31744
      %v470 = vsel %vm468, %v445, 0
      %v473 = vsel %vm468, %v446, 0
      %v476 = vsel %vm468, %v447, 0
      %v479 = vsel %vm468, %v448, 0
      %v482 = vsel %vm468, %v449, 0
      %v485 = vsel %vm468, %v450, 0
      %v488 = vsel %vm468, %v451, 0
      %v491 = vsel %vm468, %v452, 0
      %v494 = vsel %vm468, %v453, 0
      %v497 = vsel %vm468, %v454, 0
      %v500 = vsel %vm468, %v455, 0
      %v503 = vsel %vm468, %v456, 0
      %v506 = vsel %vm468, %v457, 0
      %v509 = vsel %vm468, %v458, 0
      %v512 = vsel %vm468, %v459, 0
      %v515 = vsel %vm468, %v460, 0
      %v518 = vsel %vm468, %v461, 0
      %v521 = vsel %vm468, %v462, 0
      %v524 = vsel %vm468, %v463, 0
      %v527 = vsel %vm468, %v464, 0
      %v530 = vsel %vm468, %v465, 0
      %v533 = vsel %vm468, %v466, 0
      %v536 = vsel %vm468, %v467, 0
      %vm538 = vcmask 1041408
      %v540 = vsel %vm538, %v345, 0
      %542 = vmatprep.subr.bf16.mxu0 0
      %543 = vmatpush1.bf16.msra.mxu0 %v540
      %544 = vmatprep.subr.bf16.mxu0 0
      %545 = vmatpush1.bf16.msra.mxu0 0
      %546 = vmatprep.subr.bf16.mxu0 0
      %547 = vmatpush1.bf16.msra.mxu0 0
      %548 = vmatprep.subr.bf16.mxu0 0
      %549 = vmatpush1.bf16.msra.mxu0 0
      %550 = vmatprep.subr.bf16.mxu0 0
      %551 = vmatpush1.bf16.msra.mxu0 0
      %552 = vmatprep.subr.bf16.mxu0 0
      %553 = vmatpush1.bf16.msra.mxu0 0
      %554 = vmatprep.subr.bf16.mxu0 0
      %555 = vmatpush1.bf16.msra.mxu0 0
      %556 = vmatprep.subr.bf16.mxu0 0
      %557 = vmatpush1.bf16.msra.mxu0 0
      %558 = vmatprep.subr.bf16.mxu0 0
      %559 = vmatpush1.bf16.msra.mxu0 0
      %560 = vmatprep.subr.bf16.mxu0 0
      %561 = vmatpush1.bf16.msra.mxu0 0
      %562 = vmatprep.subr.bf16.mxu0 0
      %563 = vmatpush1.bf16.msra.mxu0 0
      %564 = vmatprep.subr.bf16.mxu0 0
      %565 = vmatpush1.bf16.msra.mxu0 0
      %566 = vmatprep.subr.bf16.mxu0 0
      %567 = vmatpush1.bf16.msra.mxu0 0
      %568 = vmatprep.subr.bf16.mxu0 0
      %569 = vmatpush1.bf16.msra.mxu0 0
      %570 = vmatprep.subr.bf16.mxu0 0
      %571 = vmatpush1.bf16.msra.mxu0 0
      %572 = vmatprep.subr.bf16.mxu0 0
      %573 = vmatpush1.bf16.msra.mxu0 0
      %574 = vmatprep.mubr.bf16.mxu0 0
      %575 = vmatmul.mubr.bf16.gmra.mrb[0].mxu0 %v470
      %v576 = vpop.f32.mrb[0].mxu0
      %v577 = vadd.f32 %v351, %v576
      %v578 = vpop.f32.mrb[0].mxu0
      %v579 = vpop.f32.mrb[0].mxu0
      %v580 = vadd.f32 %v351, %v579
      %v581 = vpop.f32.mrb[0].mxu0
      %582 = vmatprep.mubr.bf16.mxu0 0
      %583 = vmatmul.mubr.bf16.gmra.mrb[0].mxu0 %v473
      %v584 = vpop.f32.mrb[0].mxu0
      %v585 = vadd.f32 %v351, %v584
      %v586 = vpop.f32.mrb[0].mxu0
      %v587 = vpop.f32.mrb[0].mxu0
      %v588 = vadd.f32 %v351, %v587
      %v589 = vpop.f32.mrb[0].mxu0
      %590 = vmatprep.mubr.bf16.mxu0 0
      %591 = vmatmul.mubr.bf16.gmra.mrb[0].mxu0 %v476
      %v592 = vpop.f32.mrb[0].mxu0
      %v593 = vadd.f32 %v351, %v592
      %v594 = vpop.f32.mrb[0].mxu0
      %v595 = vpop.f32.mrb[0].mxu0
      %v596 = vadd.f32 %v351, %v595
      %v597 = vpop.f32.mrb[0].mxu0
      %598 = vmatprep.mubr.bf16.mxu0 0
      %599 = vmatmul.mubr.bf16.gmra.mrb[0].mxu0 %v479
      %v600 = vpop.f32.mrb[0].mxu0
      %v601 = vadd.f32 %v351, %v600
      %v602 = vpop.f32.mrb[0].mxu0
      %v603 = vpop.f32.mrb[0].mxu0
      %v604 = vadd.f32 %v351, %v603
      %v605 = vpop.f32.mrb[0].mxu0
      %606 = vmatprep.mubr.bf16.mxu0 0
      %607 = vmatmul.mubr.bf16.gmra.mrb[0].mxu0 %v482
      %v608 = vpop.f32.mrb[0].mxu0
      %v609 = vadd.f32 %v351, %v608
      %v610 = vpop.f32.mrb[0].mxu0
      %v611 = vpop.f32.mrb[0].mxu0
      %v612 = vadd.f32 %v351, %v611
      %v613 = vpop.f32.mrb[0].mxu0
      %614 = vmatprep.mubr.bf16.mxu0 0
      %615 = vmatmul.mubr.bf16.gmra.mrb[0].mxu0 %v485
      %v616 = vpop.f32.mrb[0].mxu0
      %v617 = vadd.f32 %v351, %v616
      %v618 = vpop.f32.mrb[0].mxu0
      %v619 = vpop.f32.mrb[0].mxu0
      %v620 = vadd.f32 %v351, %v619
      %v621 = vpop.f32.mrb[0].mxu0
      %622 = vmatprep.mubr.bf16.mxu0 0
      %623 = vmatmul.mubr.bf16.gmra.mrb[0].mxu0 %v488
      %v624 = vpop.f32.mrb[0].mxu0
      %v625 = vadd.f32 %v351, %v624
      %v626 = vpop.f32.mrb[0].mxu0
      %v627 = vpop.f32.mrb[0].mxu0
      %v628 = vadd.f32 %v351, %v627
      %v629 = vpop.f32.mrb[0].mxu0
      %630 = vmatprep.mubr.bf16.mxu0 0
      %631 = vmatmul.mubr.bf16.gmra.mrb[0].mxu0 %v491
      %v632 = vpop.f32.mrb[0].mxu0
      %v633 = vadd.f32 %v351, %v632
      %v634 = vpop.f32.mrb[0].mxu0
      %v635 = vpop.f32.mrb[0].mxu0
      %v636 = vadd.f32 %v351, %v635
      %v637 = vpop.f32.mrb[0].mxu0
      %638 = vmatprep.mubr.bf16.mxu0 0
      %639 = vmatmul.mubr.bf16.gmra.mrb[0].mxu0 %v494
      %v640 = vpop.f32.mrb[0].mxu0
      %v641 = vadd.f32 %v351, %v640
      %v642 = vpop.f32.mrb[0].mxu0
      %v643 = vpop.f32.mrb[0].mxu0
      %v644 = vadd.f32 %v351, %v643
      %v645 = vpop.f32.mrb[0].mxu0
      %646 = vmatprep.mubr.bf16.mxu0 0
      %647 = vmatmul.mubr.bf16.gmra.mrb[0].mxu0 %v497
      %v648 = vpop.f32.mrb[0].mxu0
      %v649 = vadd.f32 %v351, %v648
      %v650 = vpop.f32.mrb[0].mxu0
      %v651 = vpop.f32.mrb[0].mxu0
      %v652 = vadd.f32 %v351, %v651
      %v653 = vpop.f32.mrb[0].mxu0
      %654 = vmatprep.mubr.bf16.mxu0 0
      %655 = vmatmul.mubr.bf16.gmra.mrb[0].mxu0 %v500
      %v656 = vpop.f32.mrb[0].mxu0
      %v657 = vadd.f32 %v351, %v656
      %v658 = vpop.f32.mrb[0].mxu0
      %v659 = vpop.f32.mrb[0].mxu0
      %v660 = vadd.f32 %v351, %v659
      %v661 = vpop.f32.mrb[0].mxu0
      %662 = vmatprep.mubr.bf16.mxu0 0
      %663 = vmatmul.mubr.bf16.gmra.mrb[0].mxu0 %v503
      %v664 = vpop.f32.mrb[0].mxu0
      %v665 = vadd.f32 %v351, %v664
      %v666 = vpop.f32.mrb[0].mxu0
      %v667 = vpop.f32.mrb[0].mxu0
      %v668 = vadd.f32 %v351, %v667
      %v669 = vpop.f32.mrb[0].mxu0
      %670 = vmatprep.mubr.bf16.mxu0 0
      %671 = vmatmul.mubr.bf16.gmra.mrb[0].mxu0 %v506
      %v672 = vpop.f32.mrb[0].mxu0
      %v673 = vadd.f32 %v351, %v672
      %v674 = vpop.f32.mrb[0].mxu0
      %v675 = vpop.f32.mrb[0].mxu0
      %v676 = vadd.f32 %v351, %v675
      %v677 = vpop.f32.mrb[0].mxu0
      %678 = vmatprep.mubr.bf16.mxu0 0
      %679 = vmatmul.mubr.bf16.gmra.mrb[0].mxu0 %v509
      %v680 = vpop.f32.mrb[0].mxu0
      %v681 = vadd.f32 %v351, %v680
      %v682 = vpop.f32.mrb[0].mxu0
      %v683 = vpop.f32.mrb[0].mxu0
      %v684 = vadd.f32 %v351, %v683
      %v685 = vpop.f32.mrb[0].mxu0
      %686 = vmatprep.mubr.bf16.mxu0 0
      %687 = vmatmul.mubr.bf16.gmra.mrb[0].mxu0 %v512
      %v688 = vpop.f32.mrb[0].mxu0
      %v689 = vadd.f32 %v351, %v688
      %v690 = vpop.f32.mrb[0].mxu0
      %v691 = vpop.f32.mrb[0].mxu0
      %v692 = vadd.f32 %v351, %v691
      %v693 = vpop.f32.mrb[0].mxu0
      %694 = vmatprep.mubr.bf16.mxu0 0
      %695 = vmatmul.mubr.bf16.gmra.mrb[0].mxu0 %v515
      %v696 = vpop.f32.mrb[0].mxu0
      %v697 = vadd.f32 %v351, %v696
      %v698 = vpop.f32.mrb[0].mxu0
      %v699 = vpop.f32.mrb[0].mxu0
      %v700 = vadd.f32 %v351, %v699
      %v701 = vpop.f32.mrb[0].mxu0
      %702 = vmatprep.mubr.bf16.mxu0 0
      %703 = vmatmul.mubr.bf16.gmra.mrb[0].mxu0 %v518
      %v704 = vpop.f32.mrb[0].mxu0
      %v705 = vadd.f32 %v351, %v704
      %v706 = vpop.f32.mrb[0].mxu0
      %v707 = vpop.f32.mrb[0].mxu0
      %v708 = vadd.f32 %v351, %v707
      %v709 = vpop.f32.mrb[0].mxu0
      %710 = vmatprep.mubr.bf16.mxu0 0
      %711 = vmatmul.mubr.bf16.gmra.mrb[0].mxu0 %v521
      %v712 = vpop.f32.mrb[0].mxu0
      %v713 = vadd.f32 %v351, %v712
      %v714 = vpop.f32.mrb[0].mxu0
      %v715 = vpop.f32.mrb[0].mxu0
      %v716 = vadd.f32 %v351, %v715
      %v717 = vpop.f32.mrb[0].mxu0
      %718 = vmatprep.mubr.bf16.mxu0 0
      %719 = vmatmul.mubr.bf16.gmra.mrb[0].mxu0 %v524
      %v720 = vpop.f32.mrb[0].mxu0
      %v721 = vadd.f32 %v351, %v720
      %v722 = vpop.f32.mrb[0].mxu0
      %v723 = vpop.f32.mrb[0].mxu0
      %v724 = vadd.f32 %v351, %v723
      %v725 = vpop.f32.mrb[0].mxu0
      %726 = vmatprep.mubr.bf16.mxu0 0
      %727 = vmatmul.mubr.bf16.gmra.mrb[0].mxu0 %v527
      %v728 = vpop.f32.mrb[0].mxu0
      %v729 = vadd.f32 %v351, %v728
      %v730 = vpop.f32.mrb[0].mxu0
      %v731 = vpop.f32.mrb[0].mxu0
      %v732 = vadd.f32 %v351, %v731
      %v733 = vpop.f32.mrb[0].mxu0
      %734 = vmatprep.mubr.bf16.mxu0 0
      %735 = vmatmul.mubr.bf16.gmra.mrb[0].mxu0 %v530
      %v736 = vpop.f32.mrb[0].mxu0
      %v737 = vadd.f32 %v351, %v736
      %v738 = vpop.f32.mrb[0].mxu0
      %v739 = vpop.f32.mrb[0].mxu0
      %v740 = vadd.f32 %v351, %v739
      %v741 = vpop.f32.mrb[0].mxu0
      %742 = vmatprep.mubr.bf16.mxu0 0
      %743 = vmatmul.mubr.bf16.gmra.mrb[0].mxu0 %v533
      %v744 = vpop.f32.mrb[0].mxu0
      %v745 = vadd.f32 %v351, %v744
      %v746 = vpop.f32.mrb[0].mxu0
      %v747 = vpop.f32.mrb[0].mxu0
      %v748 = vadd.f32 %v351, %v747
      %v749 = vpop.f32.mrb[0].mxu0
      %750 = vmatprep.mubr.bf16.mxu0 0
      %751 = vmatmul.mubr.bf16.gmra.mrb[0].mxu0 %v536
      %v752 = vpop.f32.mrb[0].mxu0
      %v753 = vadd.f32 %v351, %v752
      %v754 = vpop.f32.mrb[0].mxu0
      %v755 = vpop.f32.mrb[0].mxu0
      %v756 = vadd.f32 %v351, %v755
      %v757 = vpop.f32.mrb[0].mxu0
      %758 = vdwg.mxu0
      %v759 = vsub.f32 0.0, %v577
      %v760 = vsub.f32 0.0, %v580
      %v761 = vsub.f32 0.0, %v585
      %v762 = vsub.f32 0.0, %v588
      %v763 = vsub.f32 0.0, %v593
      %v764 = vsub.f32 0.0, %v596
      %v765 = vsub.f32 0.0, %v601
      %v766 = vsub.f32 0.0, %v604
      %v767 = vsub.f32 0.0, %v609
      %v768 = vsub.f32 0.0, %v612
      %v769 = vsub.f32 0.0, %v617
      %v770 = vsub.f32 0.0, %v620
      %v771 = vsub.f32 0.0, %v625
      %v772 = vsub.f32 0.0, %v628
      %v773 = vsub.f32 0.0, %v633
      %v774 = vsub.f32 0.0, %v636
      %v775 = vsub.f32 0.0, %v641
      %v776 = vsub.f32 0.0, %v644
      %v777 = vsub.f32 0.0, %v649
      %v778 = vsub.f32 0.0, %v652
      %v779 = vsub.f32 0.0, %v657
      %v780 = vsub.f32 0.0, %v660
      %v781 = vsub.f32 0.0, %v665
      %v782 = vsub.f32 0.0, %v668
      %v783 = vsub.f32 0.0, %v673
      %v784 = vsub.f32 0.0, %v676
      %v785 = vsub.f32 0.0, %v681
      %v786 = vsub.f32 0.0, %v684
      %v787 = vsub.f32 0.0, %v689
      %v788 = vsub.f32 0.0, %v692
      %v789 = vsub.f32 0.0, %v697
      %v790 = vsub.f32 0.0, %v700
      %v791 = vsub.f32 0.0, %v705
      %v792 = vsub.f32 0.0, %v708
      %v793 = vsub.f32 0.0, %v713
      %v794 = vsub.f32 0.0, %v716
      %v795 = vsub.f32 0.0, %v721
      %v796 = vsub.f32 0.0, %v724
      %v797 = vsub.f32 0.0, %v729
      %v798 = vsub.f32 0.0, %v732
      %v799 = vsub.f32 0.0, %v737
      %v800 = vsub.f32 0.0, %v740
      %v801 = vsub.f32 0.0, %v745
      %v802 = vsub.f32 0.0, %v748
      %v803 = vsub.f32 0.0, %v753
      %v804 = vsub.f32 0.0, %v756
      %v805 = vmul.f32 %v759, 1.442695
      %v806 = vpow.pop %v805
      %v807 = vmul.f32 %v760, 1.442695
      %v808 = vpow.pop %v807
      %v809 = vmul.f32 %v761, 1.442695
      %v810 = vpow.pop %v809
      %v811 = vmul.f32 %v762, 1.442695
      %v812 = vpow.pop %v811
      %v813 = vmul.f32 %v763, 1.442695
      %v814 = vpow.pop %v813
      %v815 = vmul.f32 %v764, 1.442695
      %v816 = vpow.pop %v815
      %v817 = vmul.f32 %v765, 1.442695
      %v818 = vpow.pop %v817
      %v819 = vmul.f32 %v766, 1.442695
      %v820 = vpow.pop %v819
      %v821 = vmul.f32 %v767, 1.442695
      %v822 = vpow.pop %v821
      %v823 = vmul.f32 %v768, 1.442695
      %v824 = vpow.pop %v823
      %v825 = vmul.f32 %v769, 1.442695
      %v826 = vpow.pop %v825
      %v827 = vmul.f32 %v770, 1.442695
      %v828 = vpow.pop %v827
      %v829 = vmul.f32 %v771, 1.442695
      %v830 = vpow.pop %v829
      %v831 = vmul.f32 %v772, 1.442695
      %v832 = vpow.pop %v831
      %v833 = vmul.f32 %v773, 1.442695
      %v834 = vpow.pop %v833
      %v835 = vmul.f32 %v774, 1.442695
      %v836 = vpow.pop %v835
      %v837 = vmul.f32 %v775, 1.442695
      %v838 = vpow.pop %v837
      %v839 = vmul.f32 %v776, 1.442695
      %v840 = vpow.pop %v839
      %v841 = vmul.f32 %v777, 1.442695
      %v842 = vpow.pop %v841
      %v843 = vmul.f32 %v778, 1.442695
      %v844 = vpow.pop %v843
      %v845 = vmul.f32 %v779, 1.442695
      %v846 = vpow.pop %v845
      %v847 = vmul.f32 %v780, 1.442695
      %v848 = vpow.pop %v847
      %v849 = vmul.f32 %v781, 1.442695
      %v850 = vpow.pop %v849
      %v851 = vmul.f32 %v782, 1.442695
      %v852 = vpow.pop %v851
      %v853 = vmul.f32 %v783, 1.442695
      %v854 = vpow.pop %v853
      %v855 = vmul.f32 %v784, 1.442695
      %v856 = vpow.pop %v855
      %v857 = vmul.f32 %v785, 1.442695
      %v858 = vpow.pop %v857
      %v859 = vmul.f32 %v786, 1.442695
      %v860 = vpow.pop %v859
      %v861 = vmul.f32 %v787, 1.442695
      %v862 = vpow.pop %v861
      %v863 = vmul.f32 %v788, 1.442695
      %v864 = vpow.pop %v863
      %v865 = vmul.f32 %v789, 1.442695
      %v866 = vpow.pop %v865
      %v867 = vmul.f32 %v790, 1.442695
      %v868 = vpow.pop %v867
      %v869 = vmul.f32 %v791, 1.442695
      %v870 = vpow.pop %v869
      %v871 = vmul.f32 %v792, 1.442695
      %v872 = vpow.pop %v871
      %v873 = vmul.f32 %v793, 1.442695
      %v874 = vpow.pop %v873
      %v875 = vmul.f32 %v794, 1.442695
      %v876 = vpow.pop %v875
      %v877 = vmul.f32 %v795, 1.442695
      %v878 = vpow.pop %v877
      %v879 = vmul.f32 %v796, 1.442695
      %v880 = vpow.pop %v879
      %v881 = vmul.f32 %v797, 1.442695
      %v882 = vpow.pop %v881
      %v883 = vmul.f32 %v798, 1.442695
      %v884 = vpow.pop %v883
      %v885 = vmul.f32 %v799, 1.442695
      %v886 = vpow.pop %v885
      %v887 = vmul.f32 %v800, 1.442695
      %v888 = vpow.pop %v887
      %v889 = vmul.f32 %v801, 1.442695
      %v890 = vpow.pop %v889
      %v891 = vmul.f32 %v802, 1.442695
      %v892 = vpow.pop %v891
      %v893 = vmul.f32 %v803, 1.442695
      %v894 = vpow.pop %v893
      %v895 = vmul.f32 %v804, 1.442695
      %v896 = vpow.pop %v895
      %v897 = vadd.f32 %v806, 1.0
      %v898 = vadd.f32 %v808, 1.0
      %v899 = vadd.f32 %v810, 1.0
      %v900 = vadd.f32 %v812, 1.0
      %v901 = vadd.f32 %v814, 1.0
      %v902 = vadd.f32 %v816, 1.0
      %v903 = vadd.f32 %v818, 1.0
      %v904 = vadd.f32 %v820, 1.0
      %v905 = vadd.f32 %v822, 1.0
      %v906 = vadd.f32 %v824, 1.0
      %v907 = vadd.f32 %v826, 1.0
      %v908 = vadd.f32 %v828, 1.0
      %v909 = vadd.f32 %v830, 1.0
      %v910 = vadd.f32 %v832, 1.0
      %v911 = vadd.f32 %v834, 1.0
      %v912 = vadd.f32 %v836, 1.0
      %v913 = vadd.f32 %v838, 1.0
      %v914 = vadd.f32 %v840, 1.0
      %v915 = vadd.f32 %v842, 1.0
      %v916 = vadd.f32 %v844, 1.0
      %v917 = vadd.f32 %v846, 1.0
      %v918 = vadd.f32 %v848, 1.0
      %v919 = vadd.f32 %v850, 1.0
      %v920 = vadd.f32 %v852, 1.0
      %v921 = vadd.f32 %v854, 1.0
      %v922 = vadd.f32 %v856, 1.0
      %v923 = vadd.f32 %v858, 1.0
      %v924 = vadd.f32 %v860, 1.0
      %v925 = vadd.f32 %v862, 1.0
      %v926 = vadd.f32 %v864, 1.0
      %v927 = vadd.f32 %v866, 1.0
      %v928 = vadd.f32 %v868, 1.0
      %v929 = vadd.f32 %v870, 1.0
      %v930 = vadd.f32 %v872, 1.0
      %v931 = vadd.f32 %v874, 1.0
      %v932 = vadd.f32 %v876, 1.0
      %v933 = vadd.f32 %v878, 1.0
      %v934 = vadd.f32 %v880, 1.0
      %v935 = vadd.f32 %v882, 1.0
      %v936 = vadd.f32 %v884, 1.0
      %v937 = vadd.f32 %v886, 1.0
      %v938 = vadd.f32 %v888, 1.0
      %v939 = vadd.f32 %v890, 1.0
      %v940 = vadd.f32 %v892, 1.0
      %v941 = vadd.f32 %v894, 1.0
      %v942 = vadd.f32 %v896, 1.0
      %v943 = vrcp.pop %v897
      %v944 = vrcp.pop %v898
      %v945 = vrcp.pop %v899
      %v946 = vrcp.pop %v900
      %v947 = vrcp.pop %v901
      %v948 = vrcp.pop %v902
      %v949 = vrcp.pop %v903
      %v950 = vrcp.pop %v904
      %v951 = vrcp.pop %v905
      %v952 = vrcp.pop %v906
      %v953 = vrcp.pop %v907
      %v954 = vrcp.pop %v908
      %v955 = vrcp.pop %v909
      %v956 = vrcp.pop %v910
      %v957 = vrcp.pop %v911
      %v958 = vrcp.pop %v912
      %v959 = vrcp.pop %v913
      %v960 = vrcp.pop %v914
      %v961 = vrcp.pop %v915
      %v962 = vrcp.pop %v916
      %v963 = vrcp.pop %v917
      %v964 = vrcp.pop %v918
      %v965 = vrcp.pop %v919
      %v966 = vrcp.pop %v920
      %v967 = vrcp.pop %v921
      %v968 = vrcp.pop %v922
      %v969 = vrcp.pop %v923
      %v970 = vrcp.pop %v924
      %v971 = vrcp.pop %v925
      %v972 = vrcp.pop %v926
      %v973 = vrcp.pop %v927
      %v974 = vrcp.pop %v928
      %v975 = vrcp.pop %v929
      %v976 = vrcp.pop %v930
      %v977 = vrcp.pop %v931
      %v978 = vrcp.pop %v932
      %v979 = vrcp.pop %v933
      %v980 = vrcp.pop %v934
      %v981 = vrcp.pop %v935
      %v982 = vrcp.pop %v936
      %v983 = vrcp.pop %v937
      %v984 = vrcp.pop %v938
      %v985 = vrcp.pop %v939
      %v986 = vrcp.pop %v940
      %v987 = vrcp.pop %v941
      %v988 = vrcp.pop %v942
      %v989 = vmul.f32 %v577, %v943
      %v990 = vmul.f32 %v580, %v944
      %v991 = vmul.f32 %v585, %v945
      %v992 = vmul.f32 %v588, %v946
      %v993 = vmul.f32 %v593, %v947
      %v994 = vmul.f32 %v596, %v948
      %v995 = vmul.f32 %v601, %v949
      %v996 = vmul.f32 %v604, %v950
      %v997 = vmul.f32 %v609, %v951
      %v998 = vmul.f32 %v612, %v952
      %v999 = vmul.f32 %v617, %v953
      %v1000 = vmul.f32 %v620, %v954
      %v1001 = vmul.f32 %v625, %v955
      %v1002 = vmul.f32 %v628, %v956
      %v1003 = vmul.f32 %v633, %v957
      %v1004 = vmul.f32 %v636, %v958
      %v1005 = vmul.f32 %v641, %v959
      %v1006 = vmul.f32 %v644, %v960
      %v1007 = vmul.f32 %v649, %v961
      %v1008 = vmul.f32 %v652, %v962
      %v1009 = vmul.f32 %v657, %v963
      %v1010 = vmul.f32 %v660, %v964
      %v1011 = vmul.f32 %v665, %v965
      %v1012 = vmul.f32 %v668, %v966
      %v1013 = vmul.f32 %v673, %v967
      %v1014 = vmul.f32 %v676, %v968
      %v1015 = vmul.f32 %v681, %v969
      %v1016 = vmul.f32 %v684, %v970
      %v1017 = vmul.f32 %v689, %v971
      %v1018 = vmul.f32 %v692, %v972
      %v1019 = vmul.f32 %v697, %v973
      %v1020 = vmul.f32 %v700, %v974
      %v1021 = vmul.f32 %v705, %v975
      %v1022 = vmul.f32 %v708, %v976
      %v1023 = vmul.f32 %v713, %v977
      %v1024 = vmul.f32 %v716, %v978
      %v1025 = vmul.f32 %v721, %v979
      %v1026 = vmul.f32 %v724, %v980
      %v1027 = vmul.f32 %v729, %v981
      %v1028 = vmul.f32 %v732, %v982
      %v1029 = vmul.f32 %v737, %v983
      %v1030 = vmul.f32 %v740, %v984
      %v1031 = vmul.f32 %v745, %v985
      %v1032 = vmul.f32 %v748, %v986
      %v1033 = vmul.f32 %v753, %v987
      %v1034 = vmul.f32 %v756, %v988
      %1036 = vset.pattern.permute.xlu0 0
      %1037 = vperm.xlu0 %1036, %v253
      %v1038 = vpop.permute.xlu0 %1037
      %1041 = vset.pattern.permute.xlu0 0
      %1042 = vperm.xlu0 %1041, %v254
      %v1043 = vpop.permute.xlu0 %1042
      %1046 = vset.pattern.permute.xlu0 0
      %1047 = vperm.xlu0 %1046, %v255
      %v1048 = vpop.permute.xlu0 %1047
      %1051 = vset.pattern.permute.xlu0 0
      %1052 = vperm.xlu0 %1051, %v256
      %v1053 = vpop.permute.xlu0 %1052
      %1056 = vset.pattern.permute.xlu0 0
      %1057 = vperm.xlu0 %1056, %v257
      %v1058 = vpop.permute.xlu0 %1057
      %1061 = vset.pattern.permute.xlu0 0
      %1062 = vperm.xlu0 %1061, %v258
      %v1063 = vpop.permute.xlu0 %1062
      %1066 = vset.pattern.permute.xlu0 0
      %1067 = vperm.xlu0 %1066, %v259
      %v1068 = vpop.permute.xlu0 %1067
      %1071 = vset.pattern.permute.xlu0 0
      %1072 = vperm.xlu0 %1071, %v260
      %v1073 = vpop.permute.xlu0 %1072
      %1076 = vset.pattern.permute.xlu0 0
      %1077 = vperm.xlu0 %1076, %v261
      %v1078 = vpop.permute.xlu0 %1077
      %1081 = vset.pattern.permute.xlu0 0
      %1082 = vperm.xlu0 %1081, %v262
      %v1083 = vpop.permute.xlu0 %1082
      %1086 = vset.pattern.permute.xlu0 0
      %1087 = vperm.xlu0 %1086, %v263
      %v1088 = vpop.permute.xlu0 %1087
      %1091 = vset.pattern.permute.xlu0 0
      %1092 = vperm.xlu0 %1091, %v264
      %v1093 = vpop.permute.xlu0 %1092
      %1096 = vset.pattern.permute.xlu0 0
      %1097 = vperm.xlu0 %1096, %v265
      %v1098 = vpop.permute.xlu0 %1097
      %1101 = vset.pattern.permute.xlu0 0
      %1102 = vperm.xlu0 %1101, %v266
      %v1103 = vpop.permute.xlu0 %1102
      %1106 = vset.pattern.permute.xlu0 0
      %1107 = vperm.xlu0 %1106, %v267
      %v1108 = vpop.permute.xlu0 %1107
      %1111 = vset.pattern.permute.xlu0 0
      %1112 = vperm.xlu0 %1111, %v268
      %v1113 = vpop.permute.xlu0 %1112
      %1116 = vset.pattern.permute.xlu0 0
      %1117 = vperm.xlu0 %1116, %v269
      %v1118 = vpop.permute.xlu0 %1117
      %1121 = vset.pattern.permute.xlu0 0
      %1122 = vperm.xlu0 %1121, %v270
      %v1123 = vpop.permute.xlu0 %1122
      %1126 = vset.pattern.permute.xlu0 0
      %1127 = vperm.xlu0 %1126, %v271
      %v1128 = vpop.permute.xlu0 %1127
      %1131 = vset.pattern.permute.xlu0 0
      %1132 = vperm.xlu0 %1131, %v272
      %v1133 = vpop.permute.xlu0 %1132
      %1136 = vset.pattern.permute.xlu0 0
      %1137 = vperm.xlu0 %1136, %v273
      %v1138 = vpop.permute.xlu0 %1137
      %1141 = vset.pattern.permute.xlu0 0
      %1142 = vperm.xlu0 %1141, %v274
      %v1143 = vpop.permute.xlu0 %1142
      %1146 = vset.pattern.permute.xlu0 0
      %1147 = vperm.xlu0 %1146, %v275
      %v1148 = vpop.permute.xlu0 %1147
      %1151 = vset.pattern.permute.xlu0 0
      %1152 = vperm.xlu0 %1151, %v276
      %v1153 = vpop.permute.xlu0 %1152
      %1156 = vset.pattern.permute.xlu0 0
      %1157 = vperm.xlu0 %1156, %v277
      %v1158 = vpop.permute.xlu0 %1157
      %1161 = vset.pattern.permute.xlu0 0
      %1162 = vperm.xlu0 %1161, %v278
      %v1163 = vpop.permute.xlu0 %1162
      %1166 = vset.pattern.permute.xlu0 0
      %1167 = vperm.xlu0 %1166, %v279
      %v1168 = vpop.permute.xlu0 %1167
      %1171 = vset.pattern.permute.xlu0 0
      %1172 = vperm.xlu0 %1171, %v280
      %v1173 = vpop.permute.xlu0 %1172
      %1176 = vset.pattern.permute.xlu0 0
      %1177 = vperm.xlu0 %1176, %v281
      %v1178 = vpop.permute.xlu0 %1177
      %1181 = vset.pattern.permute.xlu0 0
      %1182 = vperm.xlu0 %1181, %v282
      %v1183 = vpop.permute.xlu0 %1182
      %1186 = vset.pattern.permute.xlu0 0
      %1187 = vperm.xlu0 %1186, %v283
      %v1188 = vpop.permute.xlu0 %1187
      %1191 = vset.pattern.permute.xlu0 0
      %1192 = vperm.xlu0 %1191, %v284
      %v1193 = vpop.permute.xlu0 %1192
      %1196 = vset.pattern.permute.xlu0 0
      %1197 = vperm.xlu0 %1196, %v285
      %v1198 = vpop.permute.xlu0 %1197
      %1201 = vset.pattern.permute.xlu0 0
      %1202 = vperm.xlu0 %1201, %v286
      %v1203 = vpop.permute.xlu0 %1202
      %1206 = vset.pattern.permute.xlu0 0
      %1207 = vperm.xlu0 %1206, %v287
      %v1208 = vpop.permute.xlu0 %1207
      %1211 = vset.pattern.permute.xlu0 0
      %1212 = vperm.xlu0 %1211, %v288
      %v1213 = vpop.permute.xlu0 %1212
      %1216 = vset.pattern.permute.xlu0 0
      %1217 = vperm.xlu0 %1216, %v289
      %v1218 = vpop.permute.xlu0 %1217
      %1221 = vset.pattern.permute.xlu0 0
      %1222 = vperm.xlu0 %1221, %v290
      %v1223 = vpop.permute.xlu0 %1222
      %1226 = vset.pattern.permute.xlu0 0
      %1227 = vperm.xlu0 %1226, %v291
      %v1228 = vpop.permute.xlu0 %1227
      %1231 = vset.pattern.permute.xlu0 0
      %1232 = vperm.xlu0 %1231, %v292
      %v1233 = vpop.permute.xlu0 %1232
      %1236 = vset.pattern.permute.xlu0 0
      %1237 = vperm.xlu0 %1236, %v293
      %v1238 = vpop.permute.xlu0 %1237
      %1241 = vset.pattern.permute.xlu0 0
      %1242 = vperm.xlu0 %1241, %v294
      %v1243 = vpop.permute.xlu0 %1242
      %1246 = vset.pattern.permute.xlu0 0
      %1247 = vperm.xlu0 %1246, %v295
      %v1248 = vpop.permute.xlu0 %1247
      %1251 = vset.pattern.permute.xlu0 0
      %1252 = vperm.xlu0 %1251, %v296
      %v1253 = vpop.permute.xlu0 %1252
      %1256 = vset.pattern.permute.xlu0 0
      %1257 = vperm.xlu0 %1256, %v297
      %v1258 = vpop.permute.xlu0 %1257
      %1261 = vset.pattern.permute.xlu0 0
      %1262 = vperm.xlu0 %1261, %v298
      %v1263 = vpop.permute.xlu0 %1262
      %v1265 = vmul.f32 %v989, %v1038
      %v1266 = vmul.f32 %v990, %v1043
      %v1267 = vmul.f32 %v991, %v1048
      %v1268 = vmul.f32 %v992, %v1053
      %v1269 = vmul.f32 %v993, %v1058
      %v1270 = vmul.f32 %v994, %v1063
      %v1271 = vmul.f32 %v995, %v1068
      %v1272 = vmul.f32 %v996, %v1073
      %v1273 = vmul.f32 %v997, %v1078
      %v1274 = vmul.f32 %v998, %v1083
      %v1275 = vmul.f32 %v999, %v1088
      %v1276 = vmul.f32 %v1000, %v1093
      %v1277 = vmul.f32 %v1001, %v1098
      %v1278 = vmul.f32 %v1002, %v1103
      %v1279 = vmul.f32 %v1003, %v1108
      %v1280 = vmul.f32 %v1004, %v1113
      %v1281 = vmul.f32 %v1005, %v1118
      %v1282 = vmul.f32 %v1006, %v1123
      %v1283 = vmul.f32 %v1007, %v1128
      %v1284 = vmul.f32 %v1008, %v1133
      %v1285 = vmul.f32 %v1009, %v1138
      %v1286 = vmul.f32 %v1010, %v1143
      %v1287 = vmul.f32 %v1011, %v1148
      %v1288 = vmul.f32 %v1012, %v1153
      %v1289 = vmul.f32 %v1013, %v1158
      %v1290 = vmul.f32 %v1014, %v1163
      %v1291 = vmul.f32 %v1015, %v1168
      %v1292 = vmul.f32 %v1016, %v1173
      %v1293 = vmul.f32 %v1017, %v1178
      %v1294 = vmul.f32 %v1018, %v1183
      %v1295 = vmul.f32 %v1019, %v1188
      %v1296 = vmul.f32 %v1020, %v1193
      %v1297 = vmul.f32 %v1021, %v1198
      %v1298 = vmul.f32 %v1022, %v1203
      %v1299 = vmul.f32 %v1023, %v1208
      %v1300 = vmul.f32 %v1024, %v1213
      %v1301 = vmul.f32 %v1025, %v1218
      %v1302 = vmul.f32 %v1026, %v1223
      %v1303 = vmul.f32 %v1027, %v1228
      %v1304 = vmul.f32 %v1028, %v1233
      %v1305 = vmul.f32 %v1029, %v1238
      %v1306 = vmul.f32 %v1030, %v1243
      %v1307 = vmul.f32 %v1031, %v1248
      %v1308 = vmul.f32 %v1032, %v1253
      %v1309 = vmul.f32 %v1033, %v1258
      %v1310 = vmul.f32 %v1034, %v1263
      %v1311 = vpack.c.bf16 %v1266, %v1265
      %v1312 = vpack.c.bf16 %v1268, %v1267
      %v1313 = vpack.c.bf16 %v1270, %v1269
      %v1314 = vpack.c.bf16 %v1272, %v1271
      %v1315 = vpack.c.bf16 %v1274, %v1273
      %v1316 = vpack.c.bf16 %v1276, %v1275
      %v1317 = vpack.c.bf16 %v1278, %v1277
      %v1318 = vpack.c.bf16 %v1280, %v1279
      %v1319 = vpack.c.bf16 %v1282, %v1281
      %v1320 = vpack.c.bf16 %v1284, %v1283
      %v1321 = vpack.c.bf16 %v1286, %v1285
      %v1322 = vpack.c.bf16 %v1288, %v1287
      %v1323 = vpack.c.bf16 %v1290, %v1289
      %v1324 = vpack.c.bf16 %v1292, %v1291
      %v1325 = vpack.c.bf16 %v1294, %v1293
      %v1326 = vpack.c.bf16 %v1296, %v1295
      %v1327 = vpack.c.bf16 %v1298, %v1297
      %v1328 = vpack.c.bf16 %v1300, %v1299
      %v1329 = vpack.c.bf16 %v1302, %v1301
      %v1330 = vpack.c.bf16 %v1304, %v1303
      %v1331 = vpack.c.bf16 %v1306, %v1305
      %v1332 = vpack.c.bf16 %v1308, %v1307
      %v1333 = vpack.c.bf16 %v1310, %v1309
      %v1334 = vld [vmem:[%s4] sm:$0xf]
      %s1335 = scalar_lea.vmem %s4, 4
      %v1336 = vld [vmem:[%s1335] sm:$0xf]
      %vm1337 = vsmask.f32 7424
      %v1339 = vshrl.u32 %v1311, 16
      %v1341 = vshll.u32 %v1311, 16
      %v1343 = vrot.slane %v1341, 1
      %v1344 = vor.u32 %v1339, %v1343
      %v1346 = vshll.u32 %v1312, 16
      %v1348 = vrot.slane %v1346, 1
      %v1349 = vsel %vm1337, %v1344, %v1348
      %v1350 = vshrl.u32 %v1312, 16
      %v1352 = vor.u32 %v1350, %v1348
      %v1354 = vshll.u32 %v1313, 16
      %v1356 = vrot.slane %v1354, 1
      %v1357 = vsel %vm1337, %v1352, %v1356
      %v1358 = vshrl.u32 %v1313, 16
      %v1360 = vor.u32 %v1358, %v1356
      %v1362 = vshll.u32 %v1314, 16
      %v1364 = vrot.slane %v1362, 1
      %v1365 = vsel %vm1337, %v1360, %v1364
      %v1366 = vshrl.u32 %v1314, 16
      %v1368 = vor.u32 %v1366, %v1364
      %v1370 = vshll.u32 %v1315, 16
      %v1372 = vrot.slane %v1370, 1
      %v1373 = vsel %vm1337, %v1368, %v1372
      %v1374 = vshrl.u32 %v1315, 16
      %v1376 = vor.u32 %v1374, %v1372
      %v1378 = vshll.u32 %v1316, 16
      %v1380 = vrot.slane %v1378, 1
      %v1381 = vsel %vm1337, %v1376, %v1380
      %v1382 = vshrl.u32 %v1316, 16
      %v1384 = vor.u32 %v1382, %v1380
      %v1386 = vshll.u32 %v1317, 16
      %v1388 = vrot.slane %v1386, 1
      %v1389 = vsel %vm1337, %v1384, %v1388
      %v1390 = vshrl.u32 %v1317, 16
      %v1392 = vor.u32 %v1390, %v1388
      %v1394 = vshll.u32 %v1318, 16
      %v1396 = vrot.slane %v1394, 1
      %v1397 = vsel %vm1337, %v1392, %v1396
      %v1398 = vshrl.u32 %v1318, 16
      %v1400 = vor.u32 %v1398, %v1396
      %v1402 = vshll.u32 %v1319, 16
      %v1404 = vrot.slane %v1402, 1
      %v1405 = vsel %vm1337, %v1400, %v1404
      %v1406 = vshrl.u32 %v1319, 16
      %v1408 = vor.u32 %v1406, %v1404
      %v1410 = vshll.u32 %v1320, 16
      %v1412 = vrot.slane %v1410, 1
      %v1413 = vsel %vm1337, %v1408, %v1412
      %v1414 = vshrl.u32 %v1320, 16
      %v1416 = vor.u32 %v1414, %v1412
      %v1418 = vshll.u32 %v1321, 16
      %v1420 = vrot.slane %v1418, 1
      %v1421 = vsel %vm1337, %v1416, %v1420
      %v1422 = vshrl.u32 %v1321, 16
      %v1424 = vor.u32 %v1422, %v1420
      %v1426 = vshll.u32 %v1322, 16
      %v1428 = vrot.slane %v1426, 1
      %v1429 = vsel %vm1337, %v1424, %v1428
      %v1430 = vshrl.u32 %v1322, 16
      %v1432 = vor.u32 %v1430, %v1428
      %v1434 = vshll.u32 %v1323, 16
      %v1436 = vrot.slane %v1434, 1
      %v1437 = vsel %vm1337, %v1432, %v1436
      %v1438 = vshrl.u32 %v1323, 16
      %v1440 = vor.u32 %v1438, %v1436
      %v1442 = vshll.u32 %v1324, 16
      %v1444 = vrot.slane %v1442, 1
      %v1445 = vsel %vm1337, %v1440, %v1444
      %v1446 = vshrl.u32 %v1324, 16
      %v1448 = vor.u32 %v1446, %v1444
      %v1450 = vshll.u32 %v1325, 16
      %v1452 = vrot.slane %v1450, 1
      %v1453 = vsel %vm1337, %v1448, %v1452
      %v1454 = vshrl.u32 %v1325, 16
      %v1456 = vor.u32 %v1454, %v1452
      %v1458 = vshll.u32 %v1326, 16
      %v1460 = vrot.slane %v1458, 1
      %v1461 = vsel %vm1337, %v1456, %v1460
      %v1462 = vshrl.u32 %v1326, 16
      %v1464 = vor.u32 %v1462, %v1460
      %v1466 = vshll.u32 %v1327, 16
      %v1468 = vrot.slane %v1466, 1
      %v1469 = vsel %vm1337, %v1464, %v1468
      %v1470 = vshrl.u32 %v1327, 16
      %v1472 = vor.u32 %v1470, %v1468
      %v1474 = vshll.u32 %v1328, 16
      %v1476 = vrot.slane %v1474, 1
      %v1477 = vsel %vm1337, %v1472, %v1476
      %v1478 = vshrl.u32 %v1328, 16
      %v1480 = vor.u32 %v1478, %v1476
      %v1482 = vshll.u32 %v1329, 16
      %v1484 = vrot.slane %v1482, 1
      %v1485 = vsel %vm1337, %v1480, %v1484
      %v1486 = vshrl.u32 %v1329, 16
      %v1488 = vor.u32 %v1486, %v1484
      %v1490 = vshll.u32 %v1330, 16
      %v1492 = vrot.slane %v1490, 1
      %v1493 = vsel %vm1337, %v1488, %v1492
      %v1494 = vshrl.u32 %v1330, 16
      %v1496 = vor.u32 %v1494, %v1492
      %v1498 = vshll.u32 %v1331, 16
      %v1500 = vrot.slane %v1498, 1
      %v1501 = vsel %vm1337, %v1496, %v1500
      %v1502 = vshrl.u32 %v1331, 16
      %v1504 = vor.u32 %v1502, %v1500
      %vm1505 = vcmask 64512
      %v1507 = vsel %vm1505, %v1349, 0
      %v1510 = vsel %vm1505, %v1357, 0
      %v1513 = vsel %vm1505, %v1365, 0
      %v1516 = vsel %vm1505, %v1373, 0
      %v1519 = vsel %vm1505, %v1381, 0
      %v1522 = vsel %vm1505, %v1389, 0
      %v1525 = vsel %vm1505, %v1397, 0
      %v1528 = vsel %vm1505, %v1405, 0
      %v1531 = vsel %vm1505, %v1413, 0
      %v1534 = vsel %vm1505, %v1421, 0
      %v1537 = vsel %vm1505, %v1429, 0
      %v1540 = vsel %vm1505, %v1437, 0
      %v1543 = vsel %vm1505, %v1445, 0
      %v1546 = vsel %vm1505, %v1453, 0
      %v1549 = vsel %vm1505, %v1461, 0
      %v1552 = vsel %vm1505, %v1469, 0
      %v1555 = vsel %vm1505, %v1477, 0
      %v1558 = vsel %vm1505, %v1485, 0
      %v1561 = vsel %vm1505, %v1493, 0
      %v1564 = vsel %vm1505, %v1501, 0
      %v1567 = vsel %vm1505, %v1504, 0
      %vm1569 = vcmask 1043456
      %v1571 = vsel %vm1569, %v1336, 0
      %1573 = vmatprep.subr.bf16.mxu0 0
      %1574 = vmatpush1.bf16.msra.mxu0 %v1571
      %1575 = vmatprep.subr.bf16.mxu0 0
      %1576 = vmatpush1.bf16.msra.mxu0 0
      %1577 = vmatprep.subr.bf16.mxu0 0
      %1578 = vmatpush1.bf16.msra.mxu0 0
      %1579 = vmatprep.subr.bf16.mxu0 0
      %1580 = vmatpush1.bf16.msra.mxu0 0
      %1581 = vmatprep.subr.bf16.mxu0 0
      %1582 = vmatpush1.bf16.msra.mxu0 0
      %1583 = vmatprep.subr.bf16.mxu0 0
      %1584 = vmatpush1.bf16.msra.mxu0 0
      %1585 = vmatprep.subr.bf16.mxu0 0
      %1586 = vmatpush1.bf16.msra.mxu0 0
      %1587 = vmatprep.subr.bf16.mxu0 0
      %1588 = vmatpush1.bf16.msra.mxu0 0
      %1589 = vmatprep.subr.bf16.mxu0 0
      %1590 = vmatpush1.bf16.msra.mxu0 0
      %1591 = vmatprep.subr.bf16.mxu0 0
      %1592 = vmatpush1.bf16.msra.mxu0 0
      %1593 = vmatprep.subr.bf16.mxu0 0
      %1594 = vmatpush1.bf16.msra.mxu0 0
      %1595 = vmatprep.subr.bf16.mxu0 0
      %1596 = vmatpush1.bf16.msra.mxu0 0
      %1597 = vmatprep.subr.bf16.mxu0 0
      %1598 = vmatpush1.bf16.msra.mxu0 0
      %1599 = vmatprep.subr.bf16.mxu0 0
      %1600 = vmatpush1.bf16.msra.mxu0 0
      %1601 = vmatprep.subr.bf16.mxu0 0
      %1602 = vmatpush1.bf16.msra.mxu0 0
      %1603 = vmatprep.subr.bf16.mxu0 0
      %1604 = vmatpush1.bf16.msra.mxu0 0
      %1605 = vmatprep.mubr.bf16.mxu0 0
      %1606 = vmatmul.mubr.bf16.gmra.mrb[0].mxu0 %v1507
      %v1607 = vpop.f32.mrb[0].mxu0
      %v1608 = vadd.f32 0.0, %v1607
      %v1609 = vpop.f32.mrb[0].mxu0
      %v1610 = vpop.f32.mrb[0].mxu0
      %v1611 = vadd.f32 0.0, %v1610
      %v1612 = vpop.f32.mrb[0].mxu0
      %1613 = vmatprep.mubr.bf16.mxu0 0
      %1614 = vmatmul.mubr.bf16.gmra.mrb[0].mxu0 %v1510
      %v1615 = vpop.f32.mrb[0].mxu0
      %v1616 = vadd.f32 0.0, %v1615
      %v1617 = vpop.f32.mrb[0].mxu0
      %v1618 = vpop.f32.mrb[0].mxu0
      %v1619 = vadd.f32 0.0, %v1618
      %v1620 = vpop.f32.mrb[0].mxu0
      %1621 = vmatprep.mubr.bf16.mxu0 0
      %1622 = vmatmul.mubr.bf16.gmra.mrb[0].mxu0 %v1513
      %v1623 = vpop.f32.mrb[0].mxu0
      %v1624 = vadd.f32 0.0, %v1623
      %v1625 = vpop.f32.mrb[0].mxu0
      %v1626 = vpop.f32.mrb[0].mxu0
      %v1627 = vadd.f32 0.0, %v1626
      %v1628 = vpop.f32.mrb[0].mxu0
      %1629 = vmatprep.mubr.bf16.mxu0 0
      %1630 = vmatmul.mubr.bf16.gmra.mrb[0].mxu0 %v1516
      %v1631 = vpop.f32.mrb[0].mxu0
      %v1632 = vadd.f32 0.0, %v1631
      %v1633 = vpop.f32.mrb[0].mxu0
      %v1634 = vpop.f32.mrb[0].mxu0
      %v1635 = vadd.f32 0.0, %v1634
      %v1636 = vpop.f32.mrb[0].mxu0
      %1637 = vmatprep.mubr.bf16.mxu0 0
      %1638 = vmatmul.mubr.bf16.gmra.mrb[0].mxu0 %v1519
      %v1639 = vpop.f32.mrb[0].mxu0
      %v1640 = vadd.f32 0.0, %v1639
      %v1641 = vpop.f32.mrb[0].mxu0
      %v1642 = vpop.f32.mrb[0].mxu0
      %v1643 = vadd.f32 0.0, %v1642
      %v1644 = vpop.f32.mrb[0].mxu0
      %1645 = vmatprep.mubr.bf16.mxu0 0
      %1646 = vmatmul.mubr.bf16.gmra.mrb[0].mxu0 %v1522
      %v1647 = vpop.f32.mrb[0].mxu0
      %v1648 = vadd.f32 0.0, %v1647
      %v1649 = vpop.f32.mrb[0].mxu0
      %v1650 = vpop.f32.mrb[0].mxu0
      %v1651 = vadd.f32 0.0, %v1650
      %v1652 = vpop.f32.mrb[0].mxu0
      %1653 = vmatprep.mubr.bf16.mxu0 0
      %1654 = vmatmul.mubr.bf16.gmra.mrb[0].mxu0 %v1525
      %v1655 = vpop.f32.mrb[0].mxu0
      %v1656 = vadd.f32 0.0, %v1655
      %v1657 = vpop.f32.mrb[0].mxu0
      %v1658 = vpop.f32.mrb[0].mxu0
      %v1659 = vadd.f32 0.0, %v1658
      %v1660 = vpop.f32.mrb[0].mxu0
      %1661 = vmatprep.mubr.bf16.mxu0 0
      %1662 = vmatmul.mubr.bf16.gmra.mrb[0].mxu0 %v1528
      %v1663 = vpop.f32.mrb[0].mxu0
      %v1664 = vadd.f32 0.0, %v1663
      %v1665 = vpop.f32.mrb[0].mxu0
      %v1666 = vpop.f32.mrb[0].mxu0
      %v1667 = vadd.f32 0.0, %v1666
      %v1668 = vpop.f32.mrb[0].mxu0
      %1669 = vmatprep.mubr.bf16.mxu0 0
      %1670 = vmatmul.mubr.bf16.gmra.mrb[0].mxu0 %v1531
      %v1671 = vpop.f32.mrb[0].mxu0
      %v1672 = vadd.f32 0.0, %v1671
      %v1673 = vpop.f32.mrb[0].mxu0
      %v1674 = vpop.f32.mrb[0].mxu0
      %v1675 = vadd.f32 0.0, %v1674
      %v1676 = vpop.f32.mrb[0].mxu0
      %1677 = vmatprep.mubr.bf16.mxu0 0
      %1678 = vmatmul.mubr.bf16.gmra.mrb[0].mxu0 %v1534
      %v1679 = vpop.f32.mrb[0].mxu0
      %v1680 = vadd.f32 0.0, %v1679
      %v1681 = vpop.f32.mrb[0].mxu0
      %v1682 = vpop.f32.mrb[0].mxu0
      %v1683 = vadd.f32 0.0, %v1682
      %v1684 = vpop.f32.mrb[0].mxu0
      %1685 = vmatprep.mubr.bf16.mxu0 0
      %1686 = vmatmul.mubr.bf16.gmra.mrb[0].mxu0 %v1537
      %v1687 = vpop.f32.mrb[0].mxu0
      %v1688 = vadd.f32 0.0, %v1687
      %v1689 = vpop.f32.mrb[0].mxu0
      %v1690 = vpop.f32.mrb[0].mxu0
      %v1691 = vadd.f32 0.0, %v1690
      %v1692 = vpop.f32.mrb[0].mxu0
      %1693 = vmatprep.mubr.bf16.mxu0 0
      %1694 = vmatmul.mubr.bf16.gmra.mrb[0].mxu0 %v1540
      %v1695 = vpop.f32.mrb[0].mxu0
      %v1696 = vadd.f32 0.0, %v1695
      %v1697 = vpop.f32.mrb[0].mxu0
      %v1698 = vpop.f32.mrb[0].mxu0
      %v1699 = vadd.f32 0.0, %v1698
      %v1700 = vpop.f32.mrb[0].mxu0
      %1701 = vmatprep.mubr.bf16.mxu0 0
      %1702 = vmatmul.mubr.bf16.gmra.mrb[0].mxu0 %v1543
      %v1703 = vpop.f32.mrb[0].mxu0
      %v1704 = vadd.f32 0.0, %v1703
      %v1705 = vpop.f32.mrb[0].mxu0
      %v1706 = vpop.f32.mrb[0].mxu0
      %v1707 = vadd.f32 0.0, %v1706
      %v1708 = vpop.f32.mrb[0].mxu0
      %1709 = vmatprep.mubr.bf16.mxu0 0
      %1710 = vmatmul.mubr.bf16.gmra.mrb[0].mxu0 %v1546
      %v1711 = vpop.f32.mrb[0].mxu0
      %v1712 = vadd.f32 0.0, %v1711
      %v1713 = vpop.f32.mrb[0].mxu0
      %v1714 = vpop.f32.mrb[0].mxu0
      %v1715 = vadd.f32 0.0, %v1714
      %v1716 = vpop.f32.mrb[0].mxu0
      %1717 = vmatprep.mubr.bf16.mxu0 0
      %1718 = vmatmul.mubr.bf16.gmra.mrb[0].mxu0 %v1549
      %v1719 = vpop.f32.mrb[0].mxu0
      %v1720 = vadd.f32 0.0, %v1719
      %v1721 = vpop.f32.mrb[0].mxu0
      %v1722 = vpop.f32.mrb[0].mxu0
      %v1723 = vadd.f32 0.0, %v1722
      %v1724 = vpop.f32.mrb[0].mxu0
      %1725 = vmatprep.mubr.bf16.mxu0 0
      %1726 = vmatmul.mubr.bf16.gmra.mrb[0].mxu0 %v1552
      %v1727 = vpop.f32.mrb[0].mxu0
      %v1728 = vadd.f32 0.0, %v1727
      %v1729 = vpop.f32.mrb[0].mxu0
      %v1730 = vpop.f32.mrb[0].mxu0
      %v1731 = vadd.f32 0.0, %v1730
      %v1732 = vpop.f32.mrb[0].mxu0
      %1733 = vmatprep.mubr.bf16.mxu0 0
      %1734 = vmatmul.mubr.bf16.gmra.mrb[0].mxu0 %v1555
      %v1735 = vpop.f32.mrb[0].mxu0
      %v1736 = vadd.f32 0.0, %v1735
      %v1737 = vpop.f32.mrb[0].mxu0
      %v1738 = vpop.f32.mrb[0].mxu0
      %v1739 = vadd.f32 0.0, %v1738
      %v1740 = vpop.f32.mrb[0].mxu0
      %1741 = vmatprep.mubr.bf16.mxu0 0
      %1742 = vmatmul.mubr.bf16.gmra.mrb[0].mxu0 %v1558
      %v1743 = vpop.f32.mrb[0].mxu0
      %v1744 = vadd.f32 0.0, %v1743
      %v1745 = vpop.f32.mrb[0].mxu0
      %v1746 = vpop.f32.mrb[0].mxu0
      %v1747 = vadd.f32 0.0, %v1746
      %v1748 = vpop.f32.mrb[0].mxu0
      %1749 = vmatprep.mubr.bf16.mxu0 0
      %1750 = vmatmul.mubr.bf16.gmra.mrb[0].mxu0 %v1561
      %v1751 = vpop.f32.mrb[0].mxu0
      %v1752 = vadd.f32 0.0, %v1751
      %v1753 = vpop.f32.mrb[0].mxu0
      %v1754 = vpop.f32.mrb[0].mxu0
      %v1755 = vadd.f32 0.0, %v1754
      %v1756 = vpop.f32.mrb[0].mxu0
      %1757 = vmatprep.mubr.bf16.mxu0 0
      %1758 = vmatmul.mubr.bf16.gmra.mrb[0].mxu0 %v1564
      %v1759 = vpop.f32.mrb[0].mxu0
      %v1760 = vadd.f32 0.0, %v1759
      %v1761 = vpop.f32.mrb[0].mxu0
      %v1762 = vpop.f32.mrb[0].mxu0
      %v1763 = vadd.f32 0.0, %v1762
      %v1764 = vpop.f32.mrb[0].mxu0
      %1765 = vmatprep.mubr.bf16.mxu0 0
      %1766 = vmatmul.mubr.bf16.gmra.mrb[0].mxu0 %v1567
      %v1767 = vpop.f32.mrb[0].mxu0
      %v1768 = vadd.f32 0.0, %v1767
      %v1769 = vpop.f32.mrb[0].mxu0
      %v1770 = vpop.f32.mrb[0].mxu0
      %v1771 = vpop.f32.mrb[0].mxu0
      %1772 = vdwg.mxu0
      %v1773 = vsel %vm1505, %v1311, 0
      %v1775 = vsel %vm1505, %v1312, 0
      %v1777 = vsel %vm1505, %v1313, 0
      %v1779 = vsel %vm1505, %v1314, 0
      %v1781 = vsel %vm1505, %v1315, 0
      %v1783 = vsel %vm1505, %v1316, 0
      %v1785 = vsel %vm1505, %v1317, 0
      %v1787 = vsel %vm1505, %v1318, 0
      %v1789 = vsel %vm1505, %v1319, 0
      %v1791 = vsel %vm1505, %v1320, 0
      %v1793 = vsel %vm1505, %v1321, 0
      %v1795 = vsel %vm1505, %v1322, 0
      %v1797 = vsel %vm1505, %v1323, 0
      %v1799 = vsel %vm1505, %v1324, 0
      %v1801 = vsel %vm1505, %v1325, 0
      %v1803 = vsel %vm1505, %v1326, 0
      %v1805 = vsel %vm1505, %v1327, 0
      %v1807 = vsel %vm1505, %v1328, 0
      %v1809 = vsel %vm1505, %v1329, 0
      %v1811 = vsel %vm1505, %v1330, 0
      %v1813 = vsel %vm1505, %v1331, 0
      %v1816 = vsel %vm1569, %v1334, 0
      %1818 = vmatprep.subr.bf16.mxu0 0
      %1819 = vmatpush1.bf16.msra.mxu0 %v1816
      %1820 = vmatprep.subr.bf16.mxu0 0
      %1821 = vmatpush1.bf16.msra.mxu0 0
      %1822 = vmatprep.subr.bf16.mxu0 0
      %1823 = vmatpush1.bf16.msra.mxu0 0
      %1824 = vmatprep.subr.bf16.mxu0 0
      %1825 = vmatpush1.bf16.msra.mxu0 0
      %1826 = vmatprep.subr.bf16.mxu0 0
      %1827 = vmatpush1.bf16.msra.mxu0 0
      %1828 = vmatprep.subr.bf16.mxu0 0
      %1829 = vmatpush1.bf16.msra.mxu0 0
      %1830 = vmatprep.subr.bf16.mxu0 0
      %1831 = vmatpush1.bf16.msra.mxu0 0
      %1832 = vmatprep.subr.bf16.mxu0 0
      %1833 = vmatpush1.bf16.msra.mxu0 0
      %1834 = vmatprep.subr.bf16.mxu0 0
      %1835 = vmatpush1.bf16.msra.mxu0 0
      %1836 = vmatprep.subr.bf16.mxu0 0
      %1837 = vmatpush1.bf16.msra.mxu0 0
      %1838 = vmatprep.subr.bf16.mxu0 0
      %1839 = vmatpush1.bf16.msra.mxu0 0
      %1840 = vmatprep.subr.bf16.mxu0 0
      %1841 = vmatpush1.bf16.msra.mxu0 0
      %1842 = vmatprep.subr.bf16.mxu0 0
      %1843 = vmatpush1.bf16.msra.mxu0 0
      %1844 = vmatprep.subr.bf16.mxu0 0
      %1845 = vmatpush1.bf16.msra.mxu0 0
      %1846 = vmatprep.subr.bf16.mxu0 0
      %1847 = vmatpush1.bf16.msra.mxu0 0
      %1848 = vmatprep.subr.bf16.mxu0 0
      %1849 = vmatpush1.bf16.msra.mxu0 0
      %1850 = vmatprep.mubr.bf16.mxu0 0
      %1851 = vmatmul.mubr.bf16.gmra.mrb[0].mxu0 %v1773
      %v1852 = vpop.f32.mrb[0].mxu0
      %v1853 = vadd.f32 %v1608, %v1852
      %v1854 = vpop.f32.mrb[0].mxu0
      %v1855 = vpop.f32.mrb[0].mxu0
      %v1856 = vadd.f32 %v1611, %v1855
      %v1857 = vpop.f32.mrb[0].mxu0
      %1858 = vmatprep.mubr.bf16.mxu0 0
      %1859 = vmatmul.mubr.bf16.gmra.mrb[0].mxu0 %v1775
      %v1860 = vpop.f32.mrb[0].mxu0
      %v1861 = vadd.f32 %v1616, %v1860
      %v1862 = vpop.f32.mrb[0].mxu0
      %v1863 = vpop.f32.mrb[0].mxu0
      %v1864 = vadd.f32 %v1619, %v1863
      %v1865 = vpop.f32.mrb[0].mxu0
      %1866 = vmatprep.mubr.bf16.mxu0 0
      %1867 = vmatmul.mubr.bf16.gmra.mrb[0].mxu0 %v1777
      %v1868 = vpop.f32.mrb[0].mxu0
      %v1869 = vadd.f32 %v1624, %v1868
      %v1870 = vpop.f32.mrb[0].mxu0
      %v1871 = vpop.f32.mrb[0].mxu0
      %v1872 = vadd.f32 %v1627, %v1871
      %v1873 = vpop.f32.mrb[0].mxu0
      %1874 = vmatprep.mubr.bf16.mxu0 0
      %1875 = vmatmul.mubr.bf16.gmra.mrb[0].mxu0 %v1779
      %v1876 = vpop.f32.mrb[0].mxu0
      %v1877 = vadd.f32 %v1632, %v1876
      %v1878 = vpop.f32.mrb[0].mxu0
      %v1879 = vpop.f32.mrb[0].mxu0
      %v1880 = vadd.f32 %v1635, %v1879
      %v1881 = vpop.f32.mrb[0].mxu0
      %1882 = vmatprep.mubr.bf16.mxu0 0
      %1883 = vmatmul.mubr.bf16.gmra.mrb[0].mxu0 %v1781
      %v1884 = vpop.f32.mrb[0].mxu0
      %v1885 = vadd.f32 %v1640, %v1884
      %v1886 = vpop.f32.mrb[0].mxu0
      %v1887 = vpop.f32.mrb[0].mxu0
      %v1888 = vadd.f32 %v1643, %v1887
      %v1889 = vpop.f32.mrb[0].mxu0
      %1890 = vmatprep.mubr.bf16.mxu0 0
      %1891 = vmatmul.mubr.bf16.gmra.mrb[0].mxu0 %v1783
      %v1892 = vpop.f32.mrb[0].mxu0
      %v1893 = vadd.f32 %v1648, %v1892
      %v1894 = vpop.f32.mrb[0].mxu0
      %v1895 = vpop.f32.mrb[0].mxu0
      %v1896 = vadd.f32 %v1651, %v1895
      %v1897 = vpop.f32.mrb[0].mxu0
      %1898 = vmatprep.mubr.bf16.mxu0 0
      %1899 = vmatmul.mubr.bf16.gmra.mrb[0].mxu0 %v1785
      %v1900 = vpop.f32.mrb[0].mxu0
      %v1901 = vadd.f32 %v1656, %v1900
      %v1902 = vpop.f32.mrb[0].mxu0
      %v1903 = vpop.f32.mrb[0].mxu0
      %v1904 = vadd.f32 %v1659, %v1903
      %v1905 = vpop.f32.mrb[0].mxu0
      %1906 = vmatprep.mubr.bf16.mxu0 0
      %1907 = vmatmul.mubr.bf16.gmra.mrb[0].mxu0 %v1787
      %v1908 = vpop.f32.mrb[0].mxu0
      %v1909 = vadd.f32 %v1664, %v1908
      %v1910 = vpop.f32.mrb[0].mxu0
      %v1911 = vpop.f32.mrb[0].mxu0
      %v1912 = vadd.f32 %v1667, %v1911
      %v1913 = vpop.f32.mrb[0].mxu0
      %1914 = vmatprep.mubr.bf16.mxu0 0
      %1915 = vmatmul.mubr.bf16.gmra.mrb[0].mxu0 %v1789
      %v1916 = vpop.f32.mrb[0].mxu0
      %v1917 = vadd.f32 %v1672, %v1916
      %v1918 = vpop.f32.mrb[0].mxu0
      %v1919 = vpop.f32.mrb[0].mxu0
      %v1920 = vadd.f32 %v1675, %v1919
      %v1921 = vpop.f32.mrb[0].mxu0
      %1922 = vmatprep.mubr.bf16.mxu0 0
      %1923 = vmatmul.mubr.bf16.gmra.mrb[0].mxu0 %v1791
      %v1924 = vpop.f32.mrb[0].mxu0
      %v1925 = vadd.f32 %v1680, %v1924
      %v1926 = vpop.f32.mrb[0].mxu0
      %v1927 = vpop.f32.mrb[0].mxu0
      %v1928 = vadd.f32 %v1683, %v1927
      %v1929 = vpop.f32.mrb[0].mxu0
      %1930 = vmatprep.mubr.bf16.mxu0 0
      %1931 = vmatmul.mubr.bf16.gmra.mrb[0].mxu0 %v1793
      %v1932 = vpop.f32.mrb[0].mxu0
      %v1933 = vadd.f32 %v1688, %v1932
      %v1934 = vpop.f32.mrb[0].mxu0
      %v1935 = vpop.f32.mrb[0].mxu0
      %v1936 = vadd.f32 %v1691, %v1935
      %v1937 = vpop.f32.mrb[0].mxu0
      %1938 = vmatprep.mubr.bf16.mxu0 0
      %1939 = vmatmul.mubr.bf16.gmra.mrb[0].mxu0 %v1795
      %v1940 = vpop.f32.mrb[0].mxu0
      %v1941 = vadd.f32 %v1696, %v1940
      %v1942 = vpop.f32.mrb[0].mxu0
      %v1943 = vpop.f32.mrb[0].mxu0
      %v1944 = vadd.f32 %v1699, %v1943
      %v1945 = vpop.f32.mrb[0].mxu0
      %1946 = vmatprep.mubr.bf16.mxu0 0
      %1947 = vmatmul.mubr.bf16.gmra.mrb[0].mxu0 %v1797
      %v1948 = vpop.f32.mrb[0].mxu0
      %v1949 = vadd.f32 %v1704, %v1948
      %v1950 = vpop.f32.mrb[0].mxu0
      %v1951 = vpop.f32.mrb[0].mxu0
      %v1952 = vadd.f32 %v1707, %v1951
      %v1953 = vpop.f32.mrb[0].mxu0
      %1954 = vmatprep.mubr.bf16.mxu0 0
      %1955 = vmatmul.mubr.bf16.gmra.mrb[0].mxu0 %v1799
      %v1956 = vpop.f32.mrb[0].mxu0
      %v1957 = vadd.f32 %v1712, %v1956
      %v1958 = vpop.f32.mrb[0].mxu0
      %v1959 = vpop.f32.mrb[0].mxu0
      %v1960 = vadd.f32 %v1715, %v1959
      %v1961 = vpop.f32.mrb[0].mxu0
      %1962 = vmatprep.mubr.bf16.mxu0 0
      %1963 = vmatmul.mubr.bf16.gmra.mrb[0].mxu0 %v1801
      %v1964 = vpop.f32.mrb[0].mxu0
      %v1965 = vadd.f32 %v1720, %v1964
      %v1966 = vpop.f32.mrb[0].mxu0
      %v1967 = vpop.f32.mrb[0].mxu0
      %v1968 = vadd.f32 %v1723, %v1967
      %v1969 = vpop.f32.mrb[0].mxu0
      %1970 = vmatprep.mubr.bf16.mxu0 0
      %1971 = vmatmul.mubr.bf16.gmra.mrb[0].mxu0 %v1803
      %v1972 = vpop.f32.mrb[0].mxu0
      %v1973 = vadd.f32 %v1728, %v1972
      %v1974 = vpop.f32.mrb[0].mxu0
      %v1975 = vpop.f32.mrb[0].mxu0
      %v1976 = vadd.f32 %v1731, %v1975
      %v1977 = vpop.f32.mrb[0].mxu0
      %1978 = vmatprep.mubr.bf16.mxu0 0
      %1979 = vmatmul.mubr.bf16.gmra.mrb[0].mxu0 %v1805
      %v1980 = vpop.f32.mrb[0].mxu0
      %v1981 = vadd.f32 %v1736, %v1980
      %v1982 = vpop.f32.mrb[0].mxu0
      %v1983 = vpop.f32.mrb[0].mxu0
      %v1984 = vadd.f32 %v1739, %v1983
      %v1985 = vpop.f32.mrb[0].mxu0
      %1986 = vmatprep.mubr.bf16.mxu0 0
      %1987 = vmatmul.mubr.bf16.gmra.mrb[0].mxu0 %v1807
      %v1988 = vpop.f32.mrb[0].mxu0
      %v1989 = vadd.f32 %v1744, %v1988
      %v1990 = vpop.f32.mrb[0].mxu0
      %v1991 = vpop.f32.mrb[0].mxu0
      %v1992 = vadd.f32 %v1747, %v1991
      %v1993 = vpop.f32.mrb[0].mxu0
      %1994 = vmatprep.mubr.bf16.mxu0 0
      %1995 = vmatmul.mubr.bf16.gmra.mrb[0].mxu0 %v1809
      %v1996 = vpop.f32.mrb[0].mxu0
      %v1997 = vadd.f32 %v1752, %v1996
      %v1998 = vpop.f32.mrb[0].mxu0
      %v1999 = vpop.f32.mrb[0].mxu0
      %v2000 = vadd.f32 %v1755, %v1999
      %v2001 = vpop.f32.mrb[0].mxu0
      %2002 = vmatprep.mubr.bf16.mxu0 0
      %2003 = vmatmul.mubr.bf16.gmra.mrb[0].mxu0 %v1811
      %v2004 = vpop.f32.mrb[0].mxu0
      %v2005 = vadd.f32 %v1760, %v2004
      %v2006 = vpop.f32.mrb[0].mxu0
      %v2007 = vpop.f32.mrb[0].mxu0
      %v2008 = vadd.f32 %v1763, %v2007
      %v2009 = vpop.f32.mrb[0].mxu0
      %2010 = vmatprep.mubr.bf16.mxu0 0
      %2011 = vmatmul.mubr.bf16.gmra.mrb[0].mxu0 %v1813
      %v2012 = vpop.f32.mrb[0].mxu0
      %v2013 = vadd.f32 %v1768, %v2012
      %v2014 = vpop.f32.mrb[0].mxu0
      %v2015 = vpop.f32.mrb[0].mxu0
      %v2016 = vpop.f32.mrb[0].mxu0
      %2017 = vdwg.mxu0
      %s2018 = scalar_lea.vmem %s4, 8
      %v2019 = vld [vmem:[%s2018] sm:$0xf]
      %vm2041 = vcmask 1046528
      %v2042 = vrot.slane %v1311, 1
      %v2043 = vrot.slane %v1312, 1
      %v2044 = vsel %vm2041, %v2042, %v2043
      %v2045 = vrot.slane %v1313, 1
      %v2046 = vsel %vm2041, %v2043, %v2045
      %v2047 = vrot.slane %v1314, 1
      %v2048 = vsel %vm2041, %v2045, %v2047
      %v2049 = vrot.slane %v1315, 1
      %v2050 = vsel %vm2041, %v2047, %v2049
      %v2051 = vrot.slane %v1316, 1
      %v2052 = vsel %vm2041, %v2049, %v2051
      %v2053 = vrot.slane %v1317, 1
      %v2054 = vsel %vm2041, %v2051, %v2053
      %v2055 = vrot.slane %v1318, 1
      %v2056 = vsel %vm2041, %v2053, %v2055
      %v2057 = vrot.slane %v1319, 1
      %v2058 = vsel %vm2041, %v2055, %v2057
      %v2059 = vrot.slane %v1320, 1
      %v2060 = vsel %vm2041, %v2057, %v2059
      %v2061 = vrot.slane %v1321, 1
      %v2062 = vsel %vm2041, %v2059, %v2061
      %v2063 = vrot.slane %v1322, 1
      %v2064 = vsel %vm2041, %v2061, %v2063
      %v2065 = vrot.slane %v1323, 1
      %v2066 = vsel %vm2041, %v2063, %v2065
      %v2067 = vrot.slane %v1324, 1
      %v2068 = vsel %vm2041, %v2065, %v2067
      %v2069 = vrot.slane %v1325, 1
      %v2070 = vsel %vm2041, %v2067, %v2069
      %v2071 = vrot.slane %v1326, 1
      %v2072 = vsel %vm2041, %v2069, %v2071
      %v2073 = vrot.slane %v1327, 1
      %v2074 = vsel %vm2041, %v2071, %v2073
      %v2075 = vrot.slane %v1328, 1
      %v2076 = vsel %vm2041, %v2073, %v2075
      %v2077 = vrot.slane %v1329, 1
      %v2078 = vsel %vm2041, %v2075, %v2077
      %v2079 = vrot.slane %v1330, 1
      %v2080 = vsel %vm2041, %v2077, %v2079
      %v2081 = vrot.slane %v1331, 1
      %v2082 = vsel %vm2041, %v2079, %v2081
      %v2084 = vsel %vm1505, %v2044, 0
      %v2087 = vsel %vm1505, %v2046, 0
      %v2090 = vsel %vm1505, %v2048, 0
      %v2093 = vsel %vm1505, %v2050, 0
      %v2096 = vsel %vm1505, %v2052, 0
      %v2099 = vsel %vm1505, %v2054, 0
      %v2102 = vsel %vm1505, %v2056, 0
      %v2105 = vsel %vm1505, %v2058, 0
      %v2108 = vsel %vm1505, %v2060, 0
      %v2111 = vsel %vm1505, %v2062, 0
      %v2114 = vsel %vm1505, %v2064, 0
      %v2117 = vsel %vm1505, %v2066, 0
      %v2120 = vsel %vm1505, %v2068, 0
      %v2123 = vsel %vm1505, %v2070, 0
      %v2126 = vsel %vm1505, %v2072, 0
      %v2129 = vsel %vm1505, %v2074, 0
      %v2132 = vsel %vm1505, %v2076, 0
      %v2135 = vsel %vm1505, %v2078, 0
      %v2138 = vsel %vm1505, %v2080, 0
      %v2141 = vsel %vm1505, %v2082, 0
      %v2144 = vsel %vm1505, %v2081, 0
      %v2147 = vsel %vm1569, %v2019, 0
      %2149 = vmatprep.subr.bf16.mxu0 0
      %2150 = vmatpush1.bf16.msra.mxu0 %v2147
      %2151 = vmatprep.subr.bf16.mxu0 0
      %2152 = vmatpush1.bf16.msra.mxu0 0
      %2153 = vmatprep.subr.bf16.mxu0 0
      %2154 = vmatpush1.bf16.msra.mxu0 0
      %2155 = vmatprep.subr.bf16.mxu0 0
      %2156 = vmatpush1.bf16.msra.mxu0 0
      %2157 = vmatprep.subr.bf16.mxu0 0
      %2158 = vmatpush1.bf16.msra.mxu0 0
      %2159 = vmatprep.subr.bf16.mxu0 0
      %2160 = vmatpush1.bf16.msra.mxu0 0
      %2161 = vmatprep.subr.bf16.mxu0 0
      %2162 = vmatpush1.bf16.msra.mxu0 0
      %2163 = vmatprep.subr.bf16.mxu0 0
      %2164 = vmatpush1.bf16.msra.mxu0 0
      %2165 = vmatprep.subr.bf16.mxu0 0
      %2166 = vmatpush1.bf16.msra.mxu0 0
      %2167 = vmatprep.subr.bf16.mxu0 0
      %2168 = vmatpush1.bf16.msra.mxu0 0
      %2169 = vmatprep.subr.bf16.mxu0 0
      %2170 = vmatpush1.bf16.msra.mxu0 0
      %2171 = vmatprep.subr.bf16.mxu0 0
      %2172 = vmatpush1.bf16.msra.mxu0 0
      %2173 = vmatprep.subr.bf16.mxu0 0
      %2174 = vmatpush1.bf16.msra.mxu0 0
      %2175 = vmatprep.subr.bf16.mxu0 0
      %2176 = vmatpush1.bf16.msra.mxu0 0
      %2177 = vmatprep.subr.bf16.mxu0 0
      %2178 = vmatpush1.bf16.msra.mxu0 0
      %2179 = vmatprep.subr.bf16.mxu0 0
      %2180 = vmatpush1.bf16.msra.mxu0 0
      %2181 = vmatprep.mubr.bf16.mxu0 0
      %2182 = vmatmul.mubr.bf16.gmra.mrb[0].mxu0 %v2084
      %v2183 = vpop.f32.mrb[0].mxu0
      %v2184 = vadd.f32 0.0, %v2183
      %v2185 = vpop.f32.mrb[0].mxu0
      %v2186 = vpop.f32.mrb[0].mxu0
      %v2187 = vadd.f32 0.0, %v2186
      %v2188 = vpop.f32.mrb[0].mxu0
      %2189 = vmatprep.mubr.bf16.mxu0 0
      %2190 = vmatmul.mubr.bf16.gmra.mrb[0].mxu0 %v2087
      %v2191 = vpop.f32.mrb[0].mxu0
      %v2192 = vadd.f32 0.0, %v2191
      %v2193 = vpop.f32.mrb[0].mxu0
      %v2194 = vpop.f32.mrb[0].mxu0
      %v2195 = vadd.f32 0.0, %v2194
      %v2196 = vpop.f32.mrb[0].mxu0
      %2197 = vmatprep.mubr.bf16.mxu0 0
      %2198 = vmatmul.mubr.bf16.gmra.mrb[0].mxu0 %v2090
      %v2199 = vpop.f32.mrb[0].mxu0
      %v2200 = vadd.f32 0.0, %v2199
      %v2201 = vpop.f32.mrb[0].mxu0
      %v2202 = vpop.f32.mrb[0].mxu0
      %v2203 = vadd.f32 0.0, %v2202
      %v2204 = vpop.f32.mrb[0].mxu0
      %2205 = vmatprep.mubr.bf16.mxu0 0
      %2206 = vmatmul.mubr.bf16.gmra.mrb[0].mxu0 %v2093
      %v2207 = vpop.f32.mrb[0].mxu0
      %v2208 = vadd.f32 0.0, %v2207
      %v2209 = vpop.f32.mrb[0].mxu0
      %v2210 = vpop.f32.mrb[0].mxu0
      %v2211 = vadd.f32 0.0, %v2210
      %v2212 = vpop.f32.mrb[0].mxu0
      %2213 = vmatprep.mubr.bf16.mxu0 0
      %2214 = vmatmul.mubr.bf16.gmra.mrb[0].mxu0 %v2096
      %v2215 = vpop.f32.mrb[0].mxu0
      %v2216 = vadd.f32 0.0, %v2215
      %v2217 = vpop.f32.mrb[0].mxu0
      %v2218 = vpop.f32.mrb[0].mxu0
      %v2219 = vadd.f32 0.0, %v2218
      %v2220 = vpop.f32.mrb[0].mxu0
      %2221 = vmatprep.mubr.bf16.mxu0 0
      %2222 = vmatmul.mubr.bf16.gmra.mrb[0].mxu0 %v2099
      %v2223 = vpop.f32.mrb[0].mxu0
      %v2224 = vadd.f32 0.0, %v2223
      %v2225 = vpop.f32.mrb[0].mxu0
      %v2226 = vpop.f32.mrb[0].mxu0
      %v2227 = vadd.f32 0.0, %v2226
      %v2228 = vpop.f32.mrb[0].mxu0
      %2229 = vmatprep.mubr.bf16.mxu0 0
      %2230 = vmatmul.mubr.bf16.gmra.mrb[0].mxu0 %v2102
      %v2231 = vpop.f32.mrb[0].mxu0
      %v2232 = vadd.f32 0.0, %v2231
      %v2233 = vpop.f32.mrb[0].mxu0
      %v2234 = vpop.f32.mrb[0].mxu0
      %v2235 = vadd.f32 0.0, %v2234
      %v2236 = vpop.f32.mrb[0].mxu0
      %2237 = vmatprep.mubr.bf16.mxu0 0
      %2238 = vmatmul.mubr.bf16.gmra.mrb[0].mxu0 %v2105
      %v2239 = vpop.f32.mrb[0].mxu0
      %v2240 = vadd.f32 0.0, %v2239
      %v2241 = vpop.f32.mrb[0].mxu0
      %v2242 = vpop.f32.mrb[0].mxu0
      %v2243 = vadd.f32 0.0, %v2242
      %v2244 = vpop.f32.mrb[0].mxu0
      %2245 = vmatprep.mubr.bf16.mxu0 0
      %2246 = vmatmul.mubr.bf16.gmra.mrb[0].mxu0 %v2108
      %v2247 = vpop.f32.mrb[0].mxu0
      %v2248 = vadd.f32 0.0, %v2247
      %v2249 = vpop.f32.mrb[0].mxu0
      %v2250 = vpop.f32.mrb[0].mxu0
      %v2251 = vadd.f32 0.0, %v2250
      %v2252 = vpop.f32.mrb[0].mxu0
      %2253 = vmatprep.mubr.bf16.mxu0 0
      %2254 = vmatmul.mubr.bf16.gmra.mrb[0].mxu0 %v2111
      %v2255 = vpop.f32.mrb[0].mxu0
      %v2256 = vadd.f32 0.0, %v2255
      %v2257 = vpop.f32.mrb[0].mxu0
      %v2258 = vpop.f32.mrb[0].mxu0
      %v2259 = vadd.f32 0.0, %v2258
      %v2260 = vpop.f32.mrb[0].mxu0
      %2261 = vmatprep.mubr.bf16.mxu0 0
      %2262 = vmatmul.mubr.bf16.gmra.mrb[0].mxu0 %v2114
      %v2263 = vpop.f32.mrb[0].mxu0
      %v2264 = vadd.f32 0.0, %v2263
      %v2265 = vpop.f32.mrb[0].mxu0
      %v2266 = vpop.f32.mrb[0].mxu0
      %v2267 = vadd.f32 0.0, %v2266
      %v2268 = vpop.f32.mrb[0].mxu0
      %2269 = vmatprep.mubr.bf16.mxu0 0
      %2270 = vmatmul.mubr.bf16.gmra.mrb[0].mxu0 %v2117
      %v2271 = vpop.f32.mrb[0].mxu0
      %v2272 = vadd.f32 0.0, %v2271
      %v2273 = vpop.f32.mrb[0].mxu0
      %v2274 = vpop.f32.mrb[0].mxu0
      %v2275 = vadd.f32 0.0, %v2274
      %v2276 = vpop.f32.mrb[0].mxu0
      %2277 = vmatprep.mubr.bf16.mxu0 0
      %2278 = vmatmul.mubr.bf16.gmra.mrb[0].mxu0 %v2120
      %v2279 = vpop.f32.mrb[0].mxu0
      %v2280 = vadd.f32 0.0, %v2279
      %v2281 = vpop.f32.mrb[0].mxu0
      %v2282 = vpop.f32.mrb[0].mxu0
      %v2283 = vadd.f32 0.0, %v2282
      %v2284 = vpop.f32.mrb[0].mxu0
      %2285 = vmatprep.mubr.bf16.mxu0 0
      %2286 = vmatmul.mubr.bf16.gmra.mrb[0].mxu0 %v2123
      %v2287 = vpop.f32.mrb[0].mxu0
      %v2288 = vadd.f32 0.0, %v2287
      %v2289 = vpop.f32.mrb[0].mxu0
      %v2290 = vpop.f32.mrb[0].mxu0
      %v2291 = vadd.f32 0.0, %v2290
      %v2292 = vpop.f32.mrb[0].mxu0
      %2293 = vmatprep.mubr.bf16.mxu0 0
      %2294 = vmatmul.mubr.bf16.gmra.mrb[0].mxu0 %v2126
      %v2295 = vpop.f32.mrb[0].mxu0
      %v2296 = vadd.f32 0.0, %v2295
      %v2297 = vpop.f32.mrb[0].mxu0
      %v2298 = vpop.f32.mrb[0].mxu0
      %v2299 = vadd.f32 0.0, %v2298
      %v2300 = vpop.f32.mrb[0].mxu0
      %2301 = vmatprep.mubr.bf16.mxu0 0
      %2302 = vmatmul.mubr.bf16.gmra.mrb[0].mxu0 %v2129
      %v2303 = vpop.f32.mrb[0].mxu0
      %v2304 = vadd.f32 0.0, %v2303
      %v2305 = vpop.f32.mrb[0].mxu0
      %v2306 = vpop.f32.mrb[0].mxu0
      %v2307 = vadd.f32 0.0, %v2306
      %v2308 = vpop.f32.mrb[0].mxu0
      %2309 = vmatprep.mubr.bf16.mxu0 0
      %2310 = vmatmul.mubr.bf16.gmra.mrb[0].mxu0 %v2132
      %v2311 = vpop.f32.mrb[0].mxu0
      %v2312 = vadd.f32 0.0, %v2311
      %v2313 = vpop.f32.mrb[0].mxu0
      %v2314 = vpop.f32.mrb[0].mxu0
      %v2315 = vadd.f32 0.0, %v2314
      %v2316 = vpop.f32.mrb[0].mxu0
      %2317 = vmatprep.mubr.bf16.mxu0 0
      %2318 = vmatmul.mubr.bf16.gmra.mrb[0].mxu0 %v2135
      %v2319 = vpop.f32.mrb[0].mxu0
      %v2320 = vadd.f32 0.0, %v2319
      %v2321 = vpop.f32.mrb[0].mxu0
      %v2322 = vpop.f32.mrb[0].mxu0
      %v2323 = vadd.f32 0.0, %v2322
      %v2324 = vpop.f32.mrb[0].mxu0
      %2325 = vmatprep.mubr.bf16.mxu0 0
      %2326 = vmatmul.mubr.bf16.gmra.mrb[0].mxu0 %v2138
      %v2327 = vpop.f32.mrb[0].mxu0
      %v2328 = vadd.f32 0.0, %v2327
      %v2329 = vpop.f32.mrb[0].mxu0
      %v2330 = vpop.f32.mrb[0].mxu0
      %v2331 = vadd.f32 0.0, %v2330
      %v2332 = vpop.f32.mrb[0].mxu0
      %2333 = vmatprep.mubr.bf16.mxu0 0
      %2334 = vmatmul.mubr.bf16.gmra.mrb[0].mxu0 %v2141
      %v2335 = vpop.f32.mrb[0].mxu0
      %v2336 = vadd.f32 0.0, %v2335
      %v2337 = vpop.f32.mrb[0].mxu0
      %v2338 = vpop.f32.mrb[0].mxu0
      %v2339 = vadd.f32 0.0, %v2338
      %v2340 = vpop.f32.mrb[0].mxu0
      %2341 = vmatprep.mubr.bf16.mxu0 0
      %2342 = vmatmul.mubr.bf16.gmra.mrb[0].mxu0 %v2144
      %v2343 = vpop.f32.mrb[0].mxu0
      %v2344 = vadd.f32 0.0, %v2343
      %v2345 = vpop.f32.mrb[0].mxu0
      %v2346 = vpop.f32.mrb[0].mxu0
      %v2347 = vpop.f32.mrb[0].mxu0
      %2348 = vdwg.mxu0
      %v2349 = vadd.f32 %v1853, %v2184
      %v2350 = vadd.f32 %v1856, %v2187
      %v2351 = vadd.f32 %v1861, %v2192
      %v2352 = vadd.f32 %v1864, %v2195
      %v2353 = vadd.f32 %v1869, %v2200
      %v2354 = vadd.f32 %v1872, %v2203
      %v2355 = vadd.f32 %v1877, %v2208
      %v2356 = vadd.f32 %v1880, %v2211
      %v2357 = vadd.f32 %v1885, %v2216
      %v2358 = vadd.f32 %v1888, %v2219
      %v2359 = vadd.f32 %v1893, %v2224
      %v2360 = vadd.f32 %v1896, %v2227
      %v2361 = vadd.f32 %v1901, %v2232
      %v2362 = vadd.f32 %v1904, %v2235
      %v2363 = vadd.f32 %v1909, %v2240
      %v2364 = vadd.f32 %v1912, %v2243
      %v2365 = vadd.f32 %v1917, %v2248
      %v2366 = vadd.f32 %v1920, %v2251
      %v2367 = vadd.f32 %v1925, %v2256
      %v2368 = vadd.f32 %v1928, %v2259
      %v2369 = vadd.f32 %v1933, %v2264
      %v2370 = vadd.f32 %v1936, %v2267
      %v2371 = vadd.f32 %v1941, %v2272
      %v2372 = vadd.f32 %v1944, %v2275
      %v2373 = vadd.f32 %v1949, %v2280
      %v2374 = vadd.f32 %v1952, %v2283
      %v2375 = vadd.f32 %v1957, %v2288
      %v2376 = vadd.f32 %v1960, %v2291
      %v2377 = vadd.f32 %v1965, %v2296
      %v2378 = vadd.f32 %v1968, %v2299
      %v2379 = vadd.f32 %v1973, %v2304
      %v2380 = vadd.f32 %v1976, %v2307
      %v2381 = vadd.f32 %v1981, %v2312
      %v2382 = vadd.f32 %v1984, %v2315
      %v2383 = vadd.f32 %v1989, %v2320
      %v2384 = vadd.f32 %v1992, %v2323
      %v2385 = vadd.f32 %v1997, %v2328
      %v2386 = vadd.f32 %v2000, %v2331
      %v2387 = vadd.f32 %v2005, %v2336
      %v2388 = vadd.f32 %v2008, %v2339
      %v2389 = vadd.f32 %v2013, %v2344
      %s2390 = scalar_lea.vmem %s4, 12
      %v2391 = vld [vmem:[%s2390] sm:$0xf]
      %v2393 = vrot.slane %v1332, 1
      %v2394 = vsel %vm2041, %v2081, %v2393
      %v2396 = vsel %vm1505, %v2394, 0
      %v2399 = vsel %vm1505, %v2393, 0
      %v2402 = vsel %vm1569, %v2391, 0
      %2404 = vmatprep.subr.bf16.mxu0 0
      %2405 = vmatpush1.bf16.msra.mxu0 %v2402
      %2406 = vmatprep.subr.bf16.mxu0 0
      %2407 = vmatpush1.bf16.msra.mxu0 0
      %2408 = vmatprep.subr.bf16.mxu0 0
      %2409 = vmatpush1.bf16.msra.mxu0 0
      %2410 = vmatprep.subr.bf16.mxu0 0
      %2411 = vmatpush1.bf16.msra.mxu0 0
      %2412 = vmatprep.subr.bf16.mxu0 0
      %2413 = vmatpush1.bf16.msra.mxu0 0
      %2414 = vmatprep.subr.bf16.mxu0 0
      %2415 = vmatpush1.bf16.msra.mxu0 0
      %2416 = vmatprep.subr.bf16.mxu0 0
      %2417 = vmatpush1.bf16.msra.mxu0 0
      %2418 = vmatprep.subr.bf16.mxu0 0
      %2419 = vmatpush1.bf16.msra.mxu0 0
      %2420 = vmatprep.subr.bf16.mxu0 0
      %2421 = vmatpush1.bf16.msra.mxu0 0
      %2422 = vmatprep.subr.bf16.mxu0 0
      %2423 = vmatpush1.bf16.msra.mxu0 0
      %2424 = vmatprep.subr.bf16.mxu0 0
      %2425 = vmatpush1.bf16.msra.mxu0 0
      %2426 = vmatprep.subr.bf16.mxu0 0
      %2427 = vmatpush1.bf16.msra.mxu0 0
      %2428 = vmatprep.subr.bf16.mxu0 0
      %2429 = vmatpush1.bf16.msra.mxu0 0
      %2430 = vmatprep.subr.bf16.mxu0 0
      %2431 = vmatpush1.bf16.msra.mxu0 0
      %2432 = vmatprep.subr.bf16.mxu0 0
      %2433 = vmatpush1.bf16.msra.mxu0 0
      %2434 = vmatprep.subr.bf16.mxu0 0
      %2435 = vmatpush1.bf16.msra.mxu0 0
      %2436 = vmatprep.mubr.bf16.mxu0 0
      %2437 = vmatmul.mubr.bf16.gmra.mrb[0].mxu0 %v2087
      %v2438 = vpop.f32.mrb[0].mxu0
      %v2439 = vadd.f32 0.0, %v2438
      %v2440 = vpop.f32.mrb[0].mxu0
      %v2441 = vpop.f32.mrb[0].mxu0
      %v2442 = vadd.f32 0.0, %v2441
      %v2443 = vpop.f32.mrb[0].mxu0
      %2444 = vmatprep.mubr.bf16.mxu0 0
      %2445 = vmatmul.mubr.bf16.gmra.mrb[0].mxu0 %v2090
      %v2446 = vpop.f32.mrb[0].mxu0
      %v2447 = vadd.f32 0.0, %v2446
      %v2448 = vpop.f32.mrb[0].mxu0
      %v2449 = vpop.f32.mrb[0].mxu0
      %v2450 = vadd.f32 0.0, %v2449
      %v2451 = vpop.f32.mrb[0].mxu0
      %2452 = vmatprep.mubr.bf16.mxu0 0
      %2453 = vmatmul.mubr.bf16.gmra.mrb[0].mxu0 %v2093
      %v2454 = vpop.f32.mrb[0].mxu0
      %v2455 = vadd.f32 0.0, %v2454
      %v2456 = vpop.f32.mrb[0].mxu0
      %v2457 = vpop.f32.mrb[0].mxu0
      %v2458 = vadd.f32 0.0, %v2457
      %v2459 = vpop.f32.mrb[0].mxu0
      %2460 = vmatprep.mubr.bf16.mxu0 0
      %2461 = vmatmul.mubr.bf16.gmra.mrb[0].mxu0 %v2096
      %v2462 = vpop.f32.mrb[0].mxu0
      %v2463 = vadd.f32 0.0, %v2462
      %v2464 = vpop.f32.mrb[0].mxu0
      %v2465 = vpop.f32.mrb[0].mxu0
      %v2466 = vadd.f32 0.0, %v2465
      %v2467 = vpop.f32.mrb[0].mxu0
      %2468 = vmatprep.mubr.bf16.mxu0 0
      %2469 = vmatmul.mubr.bf16.gmra.mrb[0].mxu0 %v2099
      %v2470 = vpop.f32.mrb[0].mxu0
      %v2471 = vadd.f32 0.0, %v2470
      %v2472 = vpop.f32.mrb[0].mxu0
      %v2473 = vpop.f32.mrb[0].mxu0
      %v2474 = vadd.f32 0.0, %v2473
      %v2475 = vpop.f32.mrb[0].mxu0
      %2476 = vmatprep.mubr.bf16.mxu0 0
      %2477 = vmatmul.mubr.bf16.gmra.mrb[0].mxu0 %v2102
      %v2478 = vpop.f32.mrb[0].mxu0
      %v2479 = vadd.f32 0.0, %v2478
      %v2480 = vpop.f32.mrb[0].mxu0
      %v2481 = vpop.f32.mrb[0].mxu0
      %v2482 = vadd.f32 0.0, %v2481
      %v2483 = vpop.f32.mrb[0].mxu0
      %2484 = vmatprep.mubr.bf16.mxu0 0
      %2485 = vmatmul.mubr.bf16.gmra.mrb[0].mxu0 %v2105
      %v2486 = vpop.f32.mrb[0].mxu0
      %v2487 = vadd.f32 0.0, %v2486
      %v2488 = vpop.f32.mrb[0].mxu0
      %v2489 = vpop.f32.mrb[0].mxu0
      %v2490 = vadd.f32 0.0, %v2489
      %v2491 = vpop.f32.mrb[0].mxu0
      %2492 = vmatprep.mubr.bf16.mxu0 0
      %2493 = vmatmul.mubr.bf16.gmra.mrb[0].mxu0 %v2108
      %v2494 = vpop.f32.mrb[0].mxu0
      %v2495 = vadd.f32 0.0, %v2494
      %v2496 = vpop.f32.mrb[0].mxu0
      %v2497 = vpop.f32.mrb[0].mxu0
      %v2498 = vadd.f32 0.0, %v2497
      %v2499 = vpop.f32.mrb[0].mxu0
      %2500 = vmatprep.mubr.bf16.mxu0 0
      %2501 = vmatmul.mubr.bf16.gmra.mrb[0].mxu0 %v2111
      %v2502 = vpop.f32.mrb[0].mxu0
      %v2503 = vadd.f32 0.0, %v2502
      %v2504 = vpop.f32.mrb[0].mxu0
      %v2505 = vpop.f32.mrb[0].mxu0
      %v2506 = vadd.f32 0.0, %v2505
      %v2507 = vpop.f32.mrb[0].mxu0
      %2508 = vmatprep.mubr.bf16.mxu0 0
      %2509 = vmatmul.mubr.bf16.gmra.mrb[0].mxu0 %v2114
      %v2510 = vpop.f32.mrb[0].mxu0
      %v2511 = vadd.f32 0.0, %v2510
      %v2512 = vpop.f32.mrb[0].mxu0
      %v2513 = vpop.f32.mrb[0].mxu0
      %v2514 = vadd.f32 0.0, %v2513
      %v2515 = vpop.f32.mrb[0].mxu0
      %2516 = vmatprep.mubr.bf16.mxu0 0
      %2517 = vmatmul.mubr.bf16.gmra.mrb[0].mxu0 %v2117
      %v2518 = vpop.f32.mrb[0].mxu0
      %v2519 = vadd.f32 0.0, %v2518
      %v2520 = vpop.f32.mrb[0].mxu0
      %v2521 = vpop.f32.mrb[0].mxu0
      %v2522 = vadd.f32 0.0, %v2521
      %v2523 = vpop.f32.mrb[0].mxu0
      %2524 = vmatprep.mubr.bf16.mxu0 0
      %2525 = vmatmul.mubr.bf16.gmra.mrb[0].mxu0 %v2120
      %v2526 = vpop.f32.mrb[0].mxu0
      %v2527 = vadd.f32 0.0, %v2526
      %v2528 = vpop.f32.mrb[0].mxu0
      %v2529 = vpop.f32.mrb[0].mxu0
      %v2530 = vadd.f32 0.0, %v2529
      %v2531 = vpop.f32.mrb[0].mxu0
      %2532 = vmatprep.mubr.bf16.mxu0 0
      %2533 = vmatmul.mubr.bf16.gmra.mrb[0].mxu0 %v2123
      %v2534 = vpop.f32.mrb[0].mxu0
      %v2535 = vadd.f32 0.0, %v2534
      %v2536 = vpop.f32.mrb[0].mxu0
      %v2537 = vpop.f32.mrb[0].mxu0
      %v2538 = vadd.f32 0.0, %v2537
      %v2539 = vpop.f32.mrb[0].mxu0
      %2540 = vmatprep.mubr.bf16.mxu0 0
      %2541 = vmatmul.mubr.bf16.gmra.mrb[0].mxu0 %v2126
      %v2542 = vpop.f32.mrb[0].mxu0
      %v2543 = vadd.f32 0.0, %v2542
      %v2544 = vpop.f32.mrb[0].mxu0
      %v2545 = vpop.f32.mrb[0].mxu0
      %v2546 = vadd.f32 0.0, %v2545
      %v2547 = vpop.f32.mrb[0].mxu0
      %2548 = vmatprep.mubr.bf16.mxu0 0
      %2549 = vmatmul.mubr.bf16.gmra.mrb[0].mxu0 %v2129
      %v2550 = vpop.f32.mrb[0].mxu0
      %v2551 = vadd.f32 0.0, %v2550
      %v2552 = vpop.f32.mrb[0].mxu0
      %v2553 = vpop.f32.mrb[0].mxu0
      %v2554 = vadd.f32 0.0, %v2553
      %v2555 = vpop.f32.mrb[0].mxu0
      %2556 = vmatprep.mubr.bf16.mxu0 0
      %2557 = vmatmul.mubr.bf16.gmra.mrb[0].mxu0 %v2132
      %v2558 = vpop.f32.mrb[0].mxu0
      %v2559 = vadd.f32 0.0, %v2558
      %v2560 = vpop.f32.mrb[0].mxu0
      %v2561 = vpop.f32.mrb[0].mxu0
      %v2562 = vadd.f32 0.0, %v2561
      %v2563 = vpop.f32.mrb[0].mxu0
      %2564 = vmatprep.mubr.bf16.mxu0 0
      %2565 = vmatmul.mubr.bf16.gmra.mrb[0].mxu0 %v2135
      %v2566 = vpop.f32.mrb[0].mxu0
      %v2567 = vadd.f32 0.0, %v2566
      %v2568 = vpop.f32.mrb[0].mxu0
      %v2569 = vpop.f32.mrb[0].mxu0
      %v2570 = vadd.f32 0.0, %v2569
      %v2571 = vpop.f32.mrb[0].mxu0
      %2572 = vmatprep.mubr.bf16.mxu0 0
      %2573 = vmatmul.mubr.bf16.gmra.mrb[0].mxu0 %v2138
      %v2574 = vpop.f32.mrb[0].mxu0
      %v2575 = vadd.f32 0.0, %v2574
      %v2576 = vpop.f32.mrb[0].mxu0
      %v2577 = vpop.f32.mrb[0].mxu0
      %v2578 = vadd.f32 0.0, %v2577
      %v2579 = vpop.f32.mrb[0].mxu0
      %2580 = vmatprep.mubr.bf16.mxu0 0
      %2581 = vmatmul.mubr.bf16.gmra.mrb[0].mxu0 %v2141
      %v2582 = vpop.f32.mrb[0].mxu0
      %v2583 = vadd.f32 0.0, %v2582
      %v2584 = vpop.f32.mrb[0].mxu0
      %v2585 = vpop.f32.mrb[0].mxu0
      %v2586 = vadd.f32 0.0, %v2585
      %v2587 = vpop.f32.mrb[0].mxu0
      %2588 = vmatprep.mubr.bf16.mxu0 0
      %2589 = vmatmul.mubr.bf16.gmra.mrb[0].mxu0 %v2396
      %v2590 = vpop.f32.mrb[0].mxu0
      %v2591 = vadd.f32 0.0, %v2590
      %v2592 = vpop.f32.mrb[0].mxu0
      %v2593 = vpop.f32.mrb[0].mxu0
      %v2594 = vadd.f32 0.0, %v2593
      %v2595 = vpop.f32.mrb[0].mxu0
      %2596 = vmatprep.mubr.bf16.mxu0 0
      %2597 = vmatmul.mubr.bf16.gmra.mrb[0].mxu0 %v2399
      %v2598 = vpop.f32.mrb[0].mxu0
      %v2599 = vadd.f32 0.0, %v2598
      %v2600 = vpop.f32.mrb[0].mxu0
      %v2601 = vpop.f32.mrb[0].mxu0
      %v2602 = vpop.f32.mrb[0].mxu0
      %2603 = vdwg.mxu0
      %v2604 = vadd.f32 %v2349, %v2439
      %v2605 = vadd.f32 %v2350, %v2442
      %v2606 = vadd.f32 %v2351, %v2447
      %v2607 = vadd.f32 %v2352, %v2450
      %v2608 = vadd.f32 %v2353, %v2455
      %v2609 = vadd.f32 %v2354, %v2458
      %v2610 = vadd.f32 %v2355, %v2463
      %v2611 = vadd.f32 %v2356, %v2466
      %v2612 = vadd.f32 %v2357, %v2471
      %v2613 = vadd.f32 %v2358, %v2474
      %v2614 = vadd.f32 %v2359, %v2479
      %v2615 = vadd.f32 %v2360, %v2482
      %v2616 = vadd.f32 %v2361, %v2487
      %v2617 = vadd.f32 %v2362, %v2490
      %v2618 = vadd.f32 %v2363, %v2495
      %v2619 = vadd.f32 %v2364, %v2498
      %v2620 = vadd.f32 %v2365, %v2503
      %v2621 = vadd.f32 %v2366, %v2506
      %v2622 = vadd.f32 %v2367, %v2511
      %v2623 = vadd.f32 %v2368, %v2514
      %v2624 = vadd.f32 %v2369, %v2519
      %v2625 = vadd.f32 %v2370, %v2522
      %v2626 = vadd.f32 %v2371, %v2527
      %v2627 = vadd.f32 %v2372, %v2530
      %v2628 = vadd.f32 %v2373, %v2535
      %v2629 = vadd.f32 %v2374, %v2538
      %v2630 = vadd.f32 %v2375, %v2543
      %v2631 = vadd.f32 %v2376, %v2546
      %v2632 = vadd.f32 %v2377, %v2551
      %v2633 = vadd.f32 %v2378, %v2554
      %v2634 = vadd.f32 %v2379, %v2559
      %v2635 = vadd.f32 %v2380, %v2562
      %v2636 = vadd.f32 %v2381, %v2567
      %v2637 = vadd.f32 %v2382, %v2570
      %v2638 = vadd.f32 %v2383, %v2575
      %v2639 = vadd.f32 %v2384, %v2578
      %v2640 = vadd.f32 %v2385, %v2583
      %v2641 = vadd.f32 %v2386, %v2586
      %v2642 = vadd.f32 %v2387, %v2591
      %v2643 = vadd.f32 %v2388, %v2594
      %v2644 = vadd.f32 %v2389, %v2599
      %s2645 = scalar_lea.vmem %s4, 16
      %v2646 = vld [vmem:[%s2645] sm:$0xf]
      %vm2647 = vsmask.f32 6400
      %v2648 = vrot.slane %v1350, 1
      %v2649 = vrot.slane %v1346, 2
      %v2650 = vor.u32 %v2648, %v2649
      %v2651 = vrot.slane %v1358, 1
      %v2652 = vrot.slane %v1354, 2
      %v2653 = vor.u32 %v2651, %v2652
      %v2654 = vsel %vm2647, %v2650, %v2653
      %v2655 = vrot.slane %v1366, 1
      %v2656 = vrot.slane %v1362, 2
      %v2657 = vor.u32 %v2655, %v2656
      %v2658 = vsel %vm2647, %v2653, %v2657
      %v2659 = vrot.slane %v1374, 1
      %v2660 = vrot.slane %v1370, 2
      %v2661 = vor.u32 %v2659, %v2660
      %v2662 = vsel %vm2647, %v2657, %v2661
      %v2663 = vrot.slane %v1382, 1
      %v2664 = vrot.slane %v1378, 2
      %v2665 = vor.u32 %v2663, %v2664
      %v2666 = vsel %vm2647, %v2661, %v2665
      %v2667 = vrot.slane %v1390, 1
      %v2668 = vrot.slane %v1386, 2
      %v2669 = vor.u32 %v2667, %v2668
      %v2670 = vsel %vm2647, %v2665, %v2669
      %v2671 = vrot.slane %v1398, 1
      %v2672 = vrot.slane %v1394, 2
      %v2673 = vor.u32 %v2671, %v2672
      %v2674 = vsel %vm2647, %v2669, %v2673
      %v2675 = vrot.slane %v1406, 1
      %v2676 = vrot.slane %v1402, 2
      %v2677 = vor.u32 %v2675, %v2676
      %v2678 = vsel %vm2647, %v2673, %v2677
      %v2679 = vrot.slane %v1414, 1
      %v2680 = vrot.slane %v1410, 2
      %v2681 = vor.u32 %v2679, %v2680
      %v2682 = vsel %vm2647, %v2677, %v2681
      %v2683 = vrot.slane %v1422, 1
      %v2684 = vrot.slane %v1418, 2
      %v2685 = vor.u32 %v2683, %v2684
      %v2686 = vsel %vm2647, %v2681, %v2685
      %v2687 = vrot.slane %v1430, 1
      %v2688 = vrot.slane %v1426, 2
      %v2689 = vor.u32 %v2687, %v2688
      %v2690 = vsel %vm2647, %v2685, %v2689
      %v2691 = vrot.slane %v1438, 1
      %v2692 = vrot.slane %v1434, 2
      %v2693 = vor.u32 %v2691, %v2692
      %v2694 = vsel %vm2647, %v2689, %v2693
      %v2695 = vrot.slane %v1446, 1
      %v2696 = vrot.slane %v1442, 2
      %v2697 = vor.u32 %v2695, %v2696
      %v2698 = vsel %vm2647, %v2693, %v2697
      %v2699 = vrot.slane %v1454, 1
      %v2700 = vrot.slane %v1450, 2
      %v2701 = vor.u32 %v2699, %v2700
      %v2702 = vsel %vm2647, %v2697, %v2701
      %v2703 = vrot.slane %v1462, 1
      %v2704 = vrot.slane %v1458, 2
      %v2705 = vor.u32 %v2703, %v2704
      %v2706 = vsel %vm2647, %v2701, %v2705
      %v2707 = vrot.slane %v1470, 1
      %v2708 = vrot.slane %v1466, 2
      %v2709 = vor.u32 %v2707, %v2708
      %v2710 = vsel %vm2647, %v2705, %v2709
      %v2711 = vrot.slane %v1478, 1
      %v2712 = vrot.slane %v1474, 2
      %v2713 = vor.u32 %v2711, %v2712
      %v2714 = vsel %vm2647, %v2709, %v2713
      %v2715 = vrot.slane %v1486, 1
      %v2716 = vrot.slane %v1482, 2
      %v2717 = vor.u32 %v2715, %v2716
      %v2718 = vsel %vm2647, %v2713, %v2717
      %v2719 = vrot.slane %v1494, 1
      %v2720 = vrot.slane %v1490, 2
      %v2721 = vor.u32 %v2719, %v2720
      %v2722 = vsel %vm2647, %v2717, %v2721
      %v2723 = vrot.slane %v1502, 1
      %v2724 = vrot.slane %v1498, 2
      %v2725 = vor.u32 %v2723, %v2724
      %v2726 = vsel %vm2647, %v2721, %v2725
      %v2728 = vshrl.u32 %v1332, 16
      %v2730 = vrot.slane %v2728, 1
      %v2731 = vshll.u32 %v1332, 16
      %v2733 = vrot.slane %v2731, 2
      %v2734 = vor.u32 %v2730, %v2733
      %v2735 = vsel %vm2647, %v2725, %v2734
      %v2737 = vsel %vm1505, %v2654, 0
      %v2740 = vsel %vm1505, %v2658, 0
      %v2743 = vsel %vm1505, %v2662, 0
      %v2746 = vsel %vm1505, %v2666, 0
      %v2749 = vsel %vm1505, %v2670, 0
      %v2752 = vsel %vm1505, %v2674, 0
      %v2755 = vsel %vm1505, %v2678, 0
      %v2758 = vsel %vm1505, %v2682, 0
      %v2761 = vsel %vm1505, %v2686, 0
      %v2764 = vsel %vm1505, %v2690, 0
      %v2767 = vsel %vm1505, %v2694, 0
      %v2770 = vsel %vm1505, %v2698, 0
      %v2773 = vsel %vm1505, %v2702, 0
      %v2776 = vsel %vm1505, %v2706, 0
      %v2779 = vsel %vm1505, %v2710, 0
      %v2782 = vsel %vm1505, %v2714, 0
      %v2785 = vsel %vm1505, %v2718, 0
      %v2788 = vsel %vm1505, %v2722, 0
      %v2791 = vsel %vm1505, %v2726, 0
      %v2794 = vsel %vm1505, %v2735, 0
      %v2797 = vsel %vm1505, %v2734, 0
      %v2800 = vsel %vm1569, %v2646, 0
      %2802 = vmatprep.subr.bf16.mxu0 0
      %2803 = vmatpush1.bf16.msra.mxu0 %v2800
      %2804 = vmatprep.subr.bf16.mxu0 0
      %2805 = vmatpush1.bf16.msra.mxu0 0
      %2806 = vmatprep.subr.bf16.mxu0 0
      %2807 = vmatpush1.bf16.msra.mxu0 0
      %2808 = vmatprep.subr.bf16.mxu0 0
      %2809 = vmatpush1.bf16.msra.mxu0 0
      %2810 = vmatprep.subr.bf16.mxu0 0
      %2811 = vmatpush1.bf16.msra.mxu0 0
      %2812 = vmatprep.subr.bf16.mxu0 0
      %2813 = vmatpush1.bf16.msra.mxu0 0
      %2814 = vmatprep.subr.bf16.mxu0 0
      %2815 = vmatpush1.bf16.msra.mxu0 0
      %2816 = vmatprep.subr.bf16.mxu0 0
      %2817 = vmatpush1.bf16.msra.mxu0 0
      %2818 = vmatprep.subr.bf16.mxu0 0
      %2819 = vmatpush1.bf16.msra.mxu0 0
      %2820 = vmatprep.subr.bf16.mxu0 0
      %2821 = vmatpush1.bf16.msra.mxu0 0
      %2822 = vmatprep.subr.bf16.mxu0 0
      %2823 = vmatpush1.bf16.msra.mxu0 0
      %2824 = vmatprep.subr.bf16.mxu0 0
      %2825 = vmatpush1.bf16.msra.mxu0 0
      %2826 = vmatprep.subr.bf16.mxu0 0
      %2827 = vmatpush1.bf16.msra.mxu0 0
      %2828 = vmatprep.subr.bf16.mxu0 0
      %2829 = vmatpush1.bf16.msra.mxu0 0
      %2830 = vmatprep.subr.bf16.mxu0 0
      %2831 = vmatpush1.bf16.msra.mxu0 0
      %2832 = vmatprep.subr.bf16.mxu0 0
      %2833 = vmatpush1.bf16.msra.mxu0 0
      %2834 = vmatprep.mubr.bf16.mxu0 0
      %2835 = vmatmul.mubr.bf16.gmra.mrb[0].mxu0 %v2737
      %v2836 = vpop.f32.mrb[0].mxu0
      %v2837 = vadd.f32 0.0, %v2836
      %v2838 = vpop.f32.mrb[0].mxu0
      %v2839 = vpop.f32.mrb[0].mxu0
      %v2840 = vadd.f32 0.0, %v2839
      %v2841 = vpop.f32.mrb[0].mxu0
      %2842 = vmatprep.mubr.bf16.mxu0 0
      %2843 = vmatmul.mubr.bf16.gmra.mrb[0].mxu0 %v2740
      %v2844 = vpop.f32.mrb[0].mxu0
      %v2845 = vadd.f32 0.0, %v2844
      %v2846 = vpop.f32.mrb[0].mxu0
      %v2847 = vpop.f32.mrb[0].mxu0
      %v2848 = vadd.f32 0.0, %v2847
      %v2849 = vpop.f32.mrb[0].mxu0
      %2850 = vmatprep.mubr.bf16.mxu0 0
      %2851 = vmatmul.mubr.bf16.gmra.mrb[0].mxu0 %v2743
      %v2852 = vpop.f32.mrb[0].mxu0
      %v2853 = vadd.f32 0.0, %v2852
      %v2854 = vpop.f32.mrb[0].mxu0
      %v2855 = vpop.f32.mrb[0].mxu0
      %v2856 = vadd.f32 0.0, %v2855
      %v2857 = vpop.f32.mrb[0].mxu0
      %2858 = vmatprep.mubr.bf16.mxu0 0
      %2859 = vmatmul.mubr.bf16.gmra.mrb[0].mxu0 %v2746
      %v2860 = vpop.f32.mrb[0].mxu0
      %v2861 = vadd.f32 0.0, %v2860
      %v2862 = vpop.f32.mrb[0].mxu0
      %v2863 = vpop.f32.mrb[0].mxu0
      %v2864 = vadd.f32 0.0, %v2863
      %v2865 = vpop.f32.mrb[0].mxu0
      %2866 = vmatprep.mubr.bf16.mxu0 0
      %2867 = vmatmul.mubr.bf16.gmra.mrb[0].mxu0 %v2749
      %v2868 = vpop.f32.mrb[0].mxu0
      %v2869 = vadd.f32 0.0, %v2868
      %v2870 = vpop.f32.mrb[0].mxu0
      %v2871 = vpop.f32.mrb[0].mxu0
      %v2872 = vadd.f32 0.0, %v2871
      %v2873 = vpop.f32.mrb[0].mxu0
      %2874 = vmatprep.mubr.bf16.mxu0 0
      %2875 = vmatmul.mubr.bf16.gmra.mrb[0].mxu0 %v2752
      %v2876 = vpop.f32.mrb[0].mxu0
      %v2877 = vadd.f32 0.0, %v2876
      %v2878 = vpop.f32.mrb[0].mxu0
      %v2879 = vpop.f32.mrb[0].mxu0
      %v2880 = vadd.f32 0.0, %v2879
      %v2881 = vpop.f32.mrb[0].mxu0
      %2882 = vmatprep.mubr.bf16.mxu0 0
      %2883 = vmatmul.mubr.bf16.gmra.mrb[0].mxu0 %v2755
      %v2884 = vpop.f32.mrb[0].mxu0
      %v2885 = vadd.f32 0.0, %v2884
      %v2886 = vpop.f32.mrb[0].mxu0
      %v2887 = vpop.f32.mrb[0].mxu0
      %v2888 = vadd.f32 0.0, %v2887
      %v2889 = vpop.f32.mrb[0].mxu0
      %2890 = vmatprep.mubr.bf16.mxu0 0
      %2891 = vmatmul.mubr.bf16.gmra.mrb[0].mxu0 %v2758
      %v2892 = vpop.f32.mrb[0].mxu0
      %v2893 = vadd.f32 0.0, %v2892
      %v2894 = vpop.f32.mrb[0].mxu0
      %v2895 = vpop.f32.mrb[0].mxu0
      %v2896 = vadd.f32 0.0, %v2895
      %v2897 = vpop.f32.mrb[0].mxu0
      %2898 = vmatprep.mubr.bf16.mxu0 0
      %2899 = vmatmul.mubr.bf16.gmra.mrb[0].mxu0 %v2761
      %v2900 = vpop.f32.mrb[0].mxu0
      %v2901 = vadd.f32 0.0, %v2900
      %v2902 = vpop.f32.mrb[0].mxu0
      %v2903 = vpop.f32.mrb[0].mxu0
      %v2904 = vadd.f32 0.0, %v2903
      %v2905 = vpop.f32.mrb[0].mxu0
      %2906 = vmatprep.mubr.bf16.mxu0 0
      %2907 = vmatmul.mubr.bf16.gmra.mrb[0].mxu0 %v2764
      %v2908 = vpop.f32.mrb[0].mxu0
      %v2909 = vadd.f32 0.0, %v2908
      %v2910 = vpop.f32.mrb[0].mxu0
      %v2911 = vpop.f32.mrb[0].mxu0
      %v2912 = vadd.f32 0.0, %v2911
      %v2913 = vpop.f32.mrb[0].mxu0
      %2914 = vmatprep.mubr.bf16.mxu0 0
      %2915 = vmatmul.mubr.bf16.gmra.mrb[0].mxu0 %v2767
      %v2916 = vpop.f32.mrb[0].mxu0
      %v2917 = vadd.f32 0.0, %v2916
      %v2918 = vpop.f32.mrb[0].mxu0
      %v2919 = vpop.f32.mrb[0].mxu0
      %v2920 = vadd.f32 0.0, %v2919
      %v2921 = vpop.f32.mrb[0].mxu0
      %2922 = vmatprep.mubr.bf16.mxu0 0
      %2923 = vmatmul.mubr.bf16.gmra.mrb[0].mxu0 %v2770
      %v2924 = vpop.f32.mrb[0].mxu0
      %v2925 = vadd.f32 0.0, %v2924
      %v2926 = vpop.f32.mrb[0].mxu0
      %v2927 = vpop.f32.mrb[0].mxu0
      %v2928 = vadd.f32 0.0, %v2927
      %v2929 = vpop.f32.mrb[0].mxu0
      %2930 = vmatprep.mubr.bf16.mxu0 0
      %2931 = vmatmul.mubr.bf16.gmra.mrb[0].mxu0 %v2773
      %v2932 = vpop.f32.mrb[0].mxu0
      %v2933 = vadd.f32 0.0, %v2932
      %v2934 = vpop.f32.mrb[0].mxu0
      %v2935 = vpop.f32.mrb[0].mxu0
      %v2936 = vadd.f32 0.0, %v2935
      %v2937 = vpop.f32.mrb[0].mxu0
      %2938 = vmatprep.mubr.bf16.mxu0 0
      %2939 = vmatmul.mubr.bf16.gmra.mrb[0].mxu0 %v2776
      %v2940 = vpop.f32.mrb[0].mxu0
      %v2941 = vadd.f32 0.0, %v2940
      %v2942 = vpop.f32.mrb[0].mxu0
      %v2943 = vpop.f32.mrb[0].mxu0
      %v2944 = vadd.f32 0.0, %v2943
      %v2945 = vpop.f32.mrb[0].mxu0
      %2946 = vmatprep.mubr.bf16.mxu0 0
      %2947 = vmatmul.mubr.bf16.gmra.mrb[0].mxu0 %v2779
      %v2948 = vpop.f32.mrb[0].mxu0
      %v2949 = vadd.f32 0.0, %v2948
      %v2950 = vpop.f32.mrb[0].mxu0
      %v2951 = vpop.f32.mrb[0].mxu0
      %v2952 = vadd.f32 0.0, %v2951
      %v2953 = vpop.f32.mrb[0].mxu0
      %2954 = vmatprep.mubr.bf16.mxu0 0
      %2955 = vmatmul.mubr.bf16.gmra.mrb[0].mxu0 %v2782
      %v2956 = vpop.f32.mrb[0].mxu0
      %v2957 = vadd.f32 0.0, %v2956
      %v2958 = vpop.f32.mrb[0].mxu0
      %v2959 = vpop.f32.mrb[0].mxu0
      %v2960 = vadd.f32 0.0, %v2959
      %v2961 = vpop.f32.mrb[0].mxu0
      %2962 = vmatprep.mubr.bf16.mxu0 0
      %2963 = vmatmul.mubr.bf16.gmra.mrb[0].mxu0 %v2785
      %v2964 = vpop.f32.mrb[0].mxu0
      %v2965 = vadd.f32 0.0, %v2964
      %v2966 = vpop.f32.mrb[0].mxu0
      %v2967 = vpop.f32.mrb[0].mxu0
      %v2968 = vadd.f32 0.0, %v2967
      %v2969 = vpop.f32.mrb[0].mxu0
      %2970 = vmatprep.mubr.bf16.mxu0 0
      %2971 = vmatmul.mubr.bf16.gmra.mrb[0].mxu0 %v2788
      %v2972 = vpop.f32.mrb[0].mxu0
      %v2973 = vadd.f32 0.0, %v2972
      %v2974 = vpop.f32.mrb[0].mxu0
      %v2975 = vpop.f32.mrb[0].mxu0
      %v2976 = vadd.f32 0.0, %v2975
      %v2977 = vpop.f32.mrb[0].mxu0
      %2978 = vmatprep.mubr.bf16.mxu0 0
      %2979 = vmatmul.mubr.bf16.gmra.mrb[0].mxu0 %v2791
      %v2980 = vpop.f32.mrb[0].mxu0
      %v2981 = vadd.f32 0.0, %v2980
      %v2982 = vpop.f32.mrb[0].mxu0
      %v2983 = vpop.f32.mrb[0].mxu0
      %v2984 = vadd.f32 0.0, %v2983
      %v2985 = vpop.f32.mrb[0].mxu0
      %2986 = vmatprep.mubr.bf16.mxu0 0
      %2987 = vmatmul.mubr.bf16.gmra.mrb[0].mxu0 %v2794
      %v2988 = vpop.f32.mrb[0].mxu0
      %v2989 = vadd.f32 0.0, %v2988
      %v2990 = vpop.f32.mrb[0].mxu0
      %v2991 = vpop.f32.mrb[0].mxu0
      %v2992 = vadd.f32 0.0, %v2991
      %v2993 = vpop.f32.mrb[0].mxu0
      %2994 = vmatprep.mubr.bf16.mxu0 0
      %2995 = vmatmul.mubr.bf16.gmra.mrb[0].mxu0 %v2797
      %v2996 = vpop.f32.mrb[0].mxu0
      %v2997 = vadd.f32 0.0, %v2996
      %v2998 = vpop.f32.mrb[0].mxu0
      %v2999 = vpop.f32.mrb[0].mxu0
      %v3000 = vpop.f32.mrb[0].mxu0
      %3001 = vdwg.mxu0
      %v3002 = vadd.f32 %v2604, %v2837
      %v3003 = vadd.f32 %v2605, %v2840
      %v3004 = vadd.f32 %v2606, %v2845
      %v3005 = vadd.f32 %v2607, %v2848
      %v3006 = vadd.f32 %v2608, %v2853
      %v3007 = vadd.f32 %v2609, %v2856
      %v3008 = vadd.f32 %v2610, %v2861
      %v3009 = vadd.f32 %v2611, %v2864
      %v3010 = vadd.f32 %v2612, %v2869
      %v3011 = vadd.f32 %v2613, %v2872
      %v3012 = vadd.f32 %v2614, %v2877
      %v3013 = vadd.f32 %v2615, %v2880
      %v3014 = vadd.f32 %v2616, %v2885
      %v3015 = vadd.f32 %v2617, %v2888
      %v3016 = vadd.f32 %v2618, %v2893
      %v3017 = vadd.f32 %v2619, %v2896
      %v3018 = vadd.f32 %v2620, %v2901
      %v3019 = vadd.f32 %v2621, %v2904
      %v3020 = vadd.f32 %v2622, %v2909
      %v3021 = vadd.f32 %v2623, %v2912
      %v3022 = vadd.f32 %v2624, %v2917
      %v3023 = vadd.f32 %v2625, %v2920
      %v3024 = vadd.f32 %v2626, %v2925
      %v3025 = vadd.f32 %v2627, %v2928
      %v3026 = vadd.f32 %v2628, %v2933
      %v3027 = vadd.f32 %v2629, %v2936
      %v3028 = vadd.f32 %v2630, %v2941
      %v3029 = vadd.f32 %v2631, %v2944
      %v3030 = vadd.f32 %v2632, %v2949
      %v3031 = vadd.f32 %v2633, %v2952
      %v3032 = vadd.f32 %v2634, %v2957
      %v3033 = vadd.f32 %v2635, %v2960
      %v3034 = vadd.f32 %v2636, %v2965
      %v3035 = vadd.f32 %v2637, %v2968
      %v3036 = vadd.f32 %v2638, %v2973
      %v3037 = vadd.f32 %v2639, %v2976
      %v3038 = vadd.f32 %v2640, %v2981
      %v3039 = vadd.f32 %v2641, %v2984
      %v3040 = vadd.f32 %v2642, %v2989
      %v3041 = vadd.f32 %v2643, %v2992
      %v3042 = vadd.f32 %v2644, %v2997
      %s3043 = scalar_lea.vmem %s4, 20
      %v3044 = vld [vmem:[%s3043] sm:$0xf]
      %vm3045 = vcmask 1045504
      %v3046 = vrot.slane %v1312, 2
      %v3047 = vrot.slane %v1313, 2
      %v3048 = vsel %vm3045, %v3046, %v3047
      %v3049 = vrot.slane %v1314, 2
      %v3050 = vsel %vm3045, %v3047, %v3049
      %v3051 = vrot.slane %v1315, 2
      %v3052 = vsel %vm3045, %v3049, %v3051
      %v3053 = vrot.slane %v1316, 2
      %v3054 = vsel %vm3045, %v3051, %v3053
      %v3055 = vrot.slane %v1317, 2
      %v3056 = vsel %vm3045, %v3053, %v3055
      %v3057 = vrot.slane %v1318, 2
      %v3058 = vsel %vm3045, %v3055, %v3057
      %v3059 = vrot.slane %v1319, 2
      %v3060 = vsel %vm3045, %v3057, %v3059
      %v3061 = vrot.slane %v1320, 2
      %v3062 = vsel %vm3045, %v3059, %v3061
      %v3063 = vrot.slane %v1321, 2
      %v3064 = vsel %vm3045, %v3061, %v3063
      %v3065 = vrot.slane %v1322, 2
      %v3066 = vsel %vm3045, %v3063, %v3065
      %v3067 = vrot.slane %v1323, 2
      %v3068 = vsel %vm3045, %v3065, %v3067
      %v3069 = vrot.slane %v1324, 2
      %v3070 = vsel %vm3045, %v3067, %v3069
      %v3071 = vrot.slane %v1325, 2
      %v3072 = vsel %vm3045, %v3069, %v3071
      %v3073 = vrot.slane %v1326, 2
      %v3074 = vsel %vm3045, %v3071, %v3073
      %v3075 = vrot.slane %v1327, 2
      %v3076 = vsel %vm3045, %v3073, %v3075
      %v3077 = vrot.slane %v1328, 2
      %v3078 = vsel %vm3045, %v3075, %v3077
      %v3079 = vrot.slane %v1329, 2
      %v3080 = vsel %vm3045, %v3077, %v3079
      %v3081 = vrot.slane %v1330, 2
      %v3082 = vsel %vm3045, %v3079, %v3081
      %v3083 = vrot.slane %v1331, 2
      %v3084 = vsel %vm3045, %v3081, %v3083
      %v3085 = vrot.slane %v1332, 2
      %v3086 = vsel %vm3045, %v3083, %v3085
      %v3088 = vsel %vm1505, %v3048, 0
      %v3091 = vsel %vm1505, %v3050, 0
      %v3094 = vsel %vm1505, %v3052, 0
      %v3097 = vsel %vm1505, %v3054, 0
      %v3100 = vsel %vm1505, %v3056, 0
      %v3103 = vsel %vm1505, %v3058, 0
      %v3106 = vsel %vm1505, %v3060, 0
      %v3109 = vsel %vm1505, %v3062, 0
      %v3112 = vsel %vm1505, %v3064, 0
      %v3115 = vsel %vm1505, %v3066, 0
      %v3118 = vsel %vm1505, %v3068, 0
      %v3121 = vsel %vm1505, %v3070, 0
      %v3124 = vsel %vm1505, %v3072, 0
      %v3127 = vsel %vm1505, %v3074, 0
      %v3130 = vsel %vm1505, %v3076, 0
      %v3133 = vsel %vm1505, %v3078, 0
      %v3136 = vsel %vm1505, %v3080, 0
      %v3139 = vsel %vm1505, %v3082, 0
      %v3142 = vsel %vm1505, %v3084, 0
      %v3145 = vsel %vm1505, %v3086, 0
      %v3148 = vsel %vm1505, %v3085, 0
      %v3151 = vsel %vm1569, %v3044, 0
      %3153 = vmatprep.subr.bf16.mxu0 0
      %3154 = vmatpush1.bf16.msra.mxu0 %v3151
      %3155 = vmatprep.subr.bf16.mxu0 0
      %3156 = vmatpush1.bf16.msra.mxu0 0
      %3157 = vmatprep.subr.bf16.mxu0 0
      %3158 = vmatpush1.bf16.msra.mxu0 0
      %3159 = vmatprep.subr.bf16.mxu0 0
      %3160 = vmatpush1.bf16.msra.mxu0 0
      %3161 = vmatprep.subr.bf16.mxu0 0
      %3162 = vmatpush1.bf16.msra.mxu0 0
      %3163 = vmatprep.subr.bf16.mxu0 0
      %3164 = vmatpush1.bf16.msra.mxu0 0
      %3165 = vmatprep.subr.bf16.mxu0 0
      %3166 = vmatpush1.bf16.msra.mxu0 0
      %3167 = vmatprep.subr.bf16.mxu0 0
      %3168 = vmatpush1.bf16.msra.mxu0 0
      %3169 = vmatprep.subr.bf16.mxu0 0
      %3170 = vmatpush1.bf16.msra.mxu0 0
      %3171 = vmatprep.subr.bf16.mxu0 0
      %3172 = vmatpush1.bf16.msra.mxu0 0
      %3173 = vmatprep.subr.bf16.mxu0 0
      %3174 = vmatpush1.bf16.msra.mxu0 0
      %3175 = vmatprep.subr.bf16.mxu0 0
      %3176 = vmatpush1.bf16.msra.mxu0 0
      %3177 = vmatprep.subr.bf16.mxu0 0
      %3178 = vmatpush1.bf16.msra.mxu0 0
      %3179 = vmatprep.subr.bf16.mxu0 0
      %3180 = vmatpush1.bf16.msra.mxu0 0
      %3181 = vmatprep.subr.bf16.mxu0 0
      %3182 = vmatpush1.bf16.msra.mxu0 0
      %3183 = vmatprep.subr.bf16.mxu0 0
      %3184 = vmatpush1.bf16.msra.mxu0 0
      %3185 = vmatprep.mubr.bf16.mxu0 0
      %3186 = vmatmul.mubr.bf16.gmra.mrb[0].mxu0 %v3088
      %v3187 = vpop.f32.mrb[0].mxu0
      %v3188 = vadd.f32 0.0, %v3187
      %v3189 = vpop.f32.mrb[0].mxu0
      %v3190 = vpop.f32.mrb[0].mxu0
      %v3191 = vadd.f32 0.0, %v3190
      %v3192 = vpop.f32.mrb[0].mxu0
      %3193 = vmatprep.mubr.bf16.mxu0 0
      %3194 = vmatmul.mubr.bf16.gmra.mrb[0].mxu0 %v3091
      %v3195 = vpop.f32.mrb[0].mxu0
      %v3196 = vadd.f32 0.0, %v3195
      %v3197 = vpop.f32.mrb[0].mxu0
      %v3198 = vpop.f32.mrb[0].mxu0
      %v3199 = vadd.f32 0.0, %v3198
      %v3200 = vpop.f32.mrb[0].mxu0
      %3201 = vmatprep.mubr.bf16.mxu0 0
      %3202 = vmatmul.mubr.bf16.gmra.mrb[0].mxu0 %v3094
      %v3203 = vpop.f32.mrb[0].mxu0
      %v3204 = vadd.f32 0.0, %v3203
      %v3205 = vpop.f32.mrb[0].mxu0
      %v3206 = vpop.f32.mrb[0].mxu0
      %v3207 = vadd.f32 0.0, %v3206
      %v3208 = vpop.f32.mrb[0].mxu0
      %3209 = vmatprep.mubr.bf16.mxu0 0
      %3210 = vmatmul.mubr.bf16.gmra.mrb[0].mxu0 %v3097
      %v3211 = vpop.f32.mrb[0].mxu0
      %v3212 = vadd.f32 0.0, %v3211
      %v3213 = vpop.f32.mrb[0].mxu0
      %v3214 = vpop.f32.mrb[0].mxu0
      %v3215 = vadd.f32 0.0, %v3214
      %v3216 = vpop.f32.mrb[0].mxu0
      %3217 = vmatprep.mubr.bf16.mxu0 0
      %3218 = vmatmul.mubr.bf16.gmra.mrb[0].mxu0 %v3100
      %v3219 = vpop.f32.mrb[0].mxu0
      %v3220 = vadd.f32 0.0, %v3219
      %v3221 = vpop.f32.mrb[0].mxu0
      %v3222 = vpop.f32.mrb[0].mxu0
      %v3223 = vadd.f32 0.0, %v3222
      %v3224 = vpop.f32.mrb[0].mxu0
      %3225 = vmatprep.mubr.bf16.mxu0 0
      %3226 = vmatmul.mubr.bf16.gmra.mrb[0].mxu0 %v3103
      %v3227 = vpop.f32.mrb[0].mxu0
      %v3228 = vadd.f32 0.0, %v3227
      %v3229 = vpop.f32.mrb[0].mxu0
      %v3230 = vpop.f32.mrb[0].mxu0
      %v3231 = vadd.f32 0.0, %v3230
      %v3232 = vpop.f32.mrb[0].mxu0
      %3233 = vmatprep.mubr.bf16.mxu0 0
      %3234 = vmatmul.mubr.bf16.gmra.mrb[0].mxu0 %v3106
      %v3235 = vpop.f32.mrb[0].mxu0
      %v3236 = vadd.f32 0.0, %v3235
      %v3237 = vpop.f32.mrb[0].mxu0
      %v3238 = vpop.f32.mrb[0].mxu0
      %v3239 = vadd.f32 0.0, %v3238
      %v3240 = vpop.f32.mrb[0].mxu0
      %3241 = vmatprep.mubr.bf16.mxu0 0
      %3242 = vmatmul.mubr.bf16.gmra.mrb[0].mxu0 %v3109
      %v3243 = vpop.f32.mrb[0].mxu0
      %v3244 = vadd.f32 0.0, %v3243
      %v3245 = vpop.f32.mrb[0].mxu0
      %v3246 = vpop.f32.mrb[0].mxu0
      %v3247 = vadd.f32 0.0, %v3246
      %v3248 = vpop.f32.mrb[0].mxu0
      %3249 = vmatprep.mubr.bf16.mxu0 0
      %3250 = vmatmul.mubr.bf16.gmra.mrb[0].mxu0 %v3112
      %v3251 = vpop.f32.mrb[0].mxu0
      %v3252 = vadd.f32 0.0, %v3251
      %v3253 = vpop.f32.mrb[0].mxu0
      %v3254 = vpop.f32.mrb[0].mxu0
      %v3255 = vadd.f32 0.0, %v3254
      %v3256 = vpop.f32.mrb[0].mxu0
      %3257 = vmatprep.mubr.bf16.mxu0 0
      %3258 = vmatmul.mubr.bf16.gmra.mrb[0].mxu0 %v3115
      %v3259 = vpop.f32.mrb[0].mxu0
      %v3260 = vadd.f32 0.0, %v3259
      %v3261 = vpop.f32.mrb[0].mxu0
      %v3262 = vpop.f32.mrb[0].mxu0
      %v3263 = vadd.f32 0.0, %v3262
      %v3264 = vpop.f32.mrb[0].mxu0
      %3265 = vmatprep.mubr.bf16.mxu0 0
      %3266 = vmatmul.mubr.bf16.gmra.mrb[0].mxu0 %v3118
      %v3267 = vpop.f32.mrb[0].mxu0
      %v3268 = vadd.f32 0.0, %v3267
      %v3269 = vpop.f32.mrb[0].mxu0
      %v3270 = vpop.f32.mrb[0].mxu0
      %v3271 = vadd.f32 0.0, %v3270
      %v3272 = vpop.f32.mrb[0].mxu0
      %3273 = vmatprep.mubr.bf16.mxu0 0
      %3274 = vmatmul.mubr.bf16.gmra.mrb[0].mxu0 %v3121
      %v3275 = vpop.f32.mrb[0].mxu0
      %v3276 = vadd.f32 0.0, %v3275
      %v3277 = vpop.f32.mrb[0].mxu0
      %v3278 = vpop.f32.mrb[0].mxu0
      %v3279 = vadd.f32 0.0, %v3278
      %v3280 = vpop.f32.mrb[0].mxu0
      %3281 = vmatprep.mubr.bf16.mxu0 0
      %3282 = vmatmul.mubr.bf16.gmra.mrb[0].mxu0 %v3124
      %v3283 = vpop.f32.mrb[0].mxu0
      %v3284 = vadd.f32 0.0, %v3283
      %v3285 = vpop.f32.mrb[0].mxu0
      %v3286 = vpop.f32.mrb[0].mxu0
      %v3287 = vadd.f32 0.0, %v3286
      %v3288 = vpop.f32.mrb[0].mxu0
      %3289 = vmatprep.mubr.bf16.mxu0 0
      %3290 = vmatmul.mubr.bf16.gmra.mrb[0].mxu0 %v3127
      %v3291 = vpop.f32.mrb[0].mxu0
      %v3292 = vadd.f32 0.0, %v3291
      %v3293 = vpop.f32.mrb[0].mxu0
      %v3294 = vpop.f32.mrb[0].mxu0
      %v3295 = vadd.f32 0.0, %v3294
      %v3296 = vpop.f32.mrb[0].mxu0
      %3297 = vmatprep.mubr.bf16.mxu0 0
      %3298 = vmatmul.mubr.bf16.gmra.mrb[0].mxu0 %v3130
      %v3299 = vpop.f32.mrb[0].mxu0
      %v3300 = vadd.f32 0.0, %v3299
      %v3301 = vpop.f32.mrb[0].mxu0
      %v3302 = vpop.f32.mrb[0].mxu0
      %v3303 = vadd.f32 0.0, %v3302
      %v3304 = vpop.f32.mrb[0].mxu0
      %3305 = vmatprep.mubr.bf16.mxu0 0
      %3306 = vmatmul.mubr.bf16.gmra.mrb[0].mxu0 %v3133
      %v3307 = vpop.f32.mrb[0].mxu0
      %v3308 = vadd.f32 0.0, %v3307
      %v3309 = vpop.f32.mrb[0].mxu0
      %v3310 = vpop.f32.mrb[0].mxu0
      %v3311 = vadd.f32 0.0, %v3310
      %v3312 = vpop.f32.mrb[0].mxu0
      %3313 = vmatprep.mubr.bf16.mxu0 0
      %3314 = vmatmul.mubr.bf16.gmra.mrb[0].mxu0 %v3136
      %v3315 = vpop.f32.mrb[0].mxu0
      %v3316 = vadd.f32 0.0, %v3315
      %v3317 = vpop.f32.mrb[0].mxu0
      %v3318 = vpop.f32.mrb[0].mxu0
      %v3319 = vadd.f32 0.0, %v3318
      %v3320 = vpop.f32.mrb[0].mxu0
      %3321 = vmatprep.mubr.bf16.mxu0 0
      %3322 = vmatmul.mubr.bf16.gmra.mrb[0].mxu0 %v3139
      %v3323 = vpop.f32.mrb[0].mxu0
      %v3324 = vadd.f32 0.0, %v3323
      %v3325 = vpop.f32.mrb[0].mxu0
      %v3326 = vpop.f32.mrb[0].mxu0
      %v3327 = vadd.f32 0.0, %v3326
      %v3328 = vpop.f32.mrb[0].mxu0
      %3329 = vmatprep.mubr.bf16.mxu0 0
      %3330 = vmatmul.mubr.bf16.gmra.mrb[0].mxu0 %v3142
      %v3331 = vpop.f32.mrb[0].mxu0
      %v3332 = vadd.f32 0.0, %v3331
      %v3333 = vpop.f32.mrb[0].mxu0
      %v3334 = vpop.f32.mrb[0].mxu0
      %v3335 = vadd.f32 0.0, %v3334
      %v3336 = vpop.f32.mrb[0].mxu0
      %3337 = vmatprep.mubr.bf16.mxu0 0
      %3338 = vmatmul.mubr.bf16.gmra.mrb[0].mxu0 %v3145
      %v3339 = vpop.f32.mrb[0].mxu0
      %v3340 = vadd.f32 0.0, %v3339
      %v3341 = vpop.f32.mrb[0].mxu0
      %v3342 = vpop.f32.mrb[0].mxu0
      %v3343 = vadd.f32 0.0, %v3342
      %v3344 = vpop.f32.mrb[0].mxu0
      %3345 = vmatprep.mubr.bf16.mxu0 0
      %3346 = vmatmul.mubr.bf16.gmra.mrb[0].mxu0 %v3148
      %v3347 = vpop.f32.mrb[0].mxu0
      %v3348 = vadd.f32 0.0, %v3347
      %v3349 = vpop.f32.mrb[0].mxu0
      %v3350 = vpop.f32.mrb[0].mxu0
      %v3351 = vpop.f32.mrb[0].mxu0
      %3352 = vdwg.mxu0
      %v3353 = vadd.f32 %v3002, %v3188
      %v3354 = vadd.f32 %v3003, %v3191
      %v3355 = vadd.f32 %v3004, %v3196
      %v3356 = vadd.f32 %v3005, %v3199
      %v3357 = vadd.f32 %v3006, %v3204
      %v3358 = vadd.f32 %v3007, %v3207
      %v3359 = vadd.f32 %v3008, %v3212
      %v3360 = vadd.f32 %v3009, %v3215
      %v3361 = vadd.f32 %v3010, %v3220
      %v3362 = vadd.f32 %v3011, %v3223
      %v3363 = vadd.f32 %v3012, %v3228
      %v3364 = vadd.f32 %v3013, %v3231
      %v3365 = vadd.f32 %v3014, %v3236
      %v3366 = vadd.f32 %v3015, %v3239
      %v3367 = vadd.f32 %v3016, %v3244
      %v3368 = vadd.f32 %v3017, %v3247
      %v3369 = vadd.f32 %v3018, %v3252
      %v3370 = vadd.f32 %v3019, %v3255
      %v3371 = vadd.f32 %v3020, %v3260
      %v3372 = vadd.f32 %v3021, %v3263
      %v3373 = vadd.f32 %v3022, %v3268
      %v3374 = vadd.f32 %v3023, %v3271
      %v3375 = vadd.f32 %v3024, %v3276
      %v3376 = vadd.f32 %v3025, %v3279
      %v3377 = vadd.f32 %v3026, %v3284
      %v3378 = vadd.f32 %v3027, %v3287
      %v3379 = vadd.f32 %v3028, %v3292
      %v3380 = vadd.f32 %v3029, %v3295
      %v3381 = vadd.f32 %v3030, %v3300
      %v3382 = vadd.f32 %v3031, %v3303
      %v3383 = vadd.f32 %v3032, %v3308
      %v3384 = vadd.f32 %v3033, %v3311
      %v3385 = vadd.f32 %v3034, %v3316
      %v3386 = vadd.f32 %v3035, %v3319
      %v3387 = vadd.f32 %v3036, %v3324
      %v3388 = vadd.f32 %v3037, %v3327
      %v3389 = vadd.f32 %v3038, %v3332
      %v3390 = vadd.f32 %v3039, %v3335
      %v3391 = vadd.f32 %v3040, %v3340
      %v3392 = vadd.f32 %v3041, %v3343
      %v3393 = vadd.f32 %v3042, %v3348
      %s3394 = scalar_lea.vmem %s4, 24
      %v3395 = vld [vmem:[%s3394] sm:$0xf]
      %v3397 = vrot.slane %v1333, 2
      %v3398 = vsel %vm3045, %v3085, %v3397
      %v3400 = vsel %vm1505, %v3398, 0
      %v3403 = vsel %vm1505, %v3397, 0
      %v3406 = vsel %vm1569, %v3395, 0
      %3408 = vmatprep.subr.bf16.mxu0 0
      %3409 = vmatpush1.bf16.msra.mxu0 %v3406
      %3410 = vmatprep.subr.bf16.mxu0 0
      %3411 = vmatpush1.bf16.msra.mxu0 0
      %3412 = vmatprep.subr.bf16.mxu0 0
      %3413 = vmatpush1.bf16.msra.mxu0 0
      %3414 = vmatprep.subr.bf16.mxu0 0
      %3415 = vmatpush1.bf16.msra.mxu0 0
      %3416 = vmatprep.subr.bf16.mxu0 0
      %3417 = vmatpush1.bf16.msra.mxu0 0
      %3418 = vmatprep.subr.bf16.mxu0 0
      %3419 = vmatpush1.bf16.msra.mxu0 0
      %3420 = vmatprep.subr.bf16.mxu0 0
      %3421 = vmatpush1.bf16.msra.mxu0 0
      %3422 = vmatprep.subr.bf16.mxu0 0
      %3423 = vmatpush1.bf16.msra.mxu0 0
      %3424 = vmatprep.subr.bf16.mxu0 0
      %3425 = vmatpush1.bf16.msra.mxu0 0
      %3426 = vmatprep.subr.bf16.mxu0 0
      %3427 = vmatpush1.bf16.msra.mxu0 0
      %3428 = vmatprep.subr.bf16.mxu0 0
      %3429 = vmatpush1.bf16.msra.mxu0 0
      %3430 = vmatprep.subr.bf16.mxu0 0
      %3431 = vmatpush1.bf16.msra.mxu0 0
      %3432 = vmatprep.subr.bf16.mxu0 0
      %3433 = vmatpush1.bf16.msra.mxu0 0
      %3434 = vmatprep.subr.bf16.mxu0 0
      %3435 = vmatpush1.bf16.msra.mxu0 0
      %3436 = vmatprep.subr.bf16.mxu0 0
      %3437 = vmatpush1.bf16.msra.mxu0 0
      %3438 = vmatprep.subr.bf16.mxu0 0
      %3439 = vmatpush1.bf16.msra.mxu0 0
      %3440 = vmatprep.mubr.bf16.mxu0 0
      %3441 = vmatmul.mubr.bf16.gmra.mrb[0].mxu0 %v3091
      %v3442 = vpop.f32.mrb[0].mxu0
      %v3443 = vadd.f32 0.0, %v3442
      %v3444 = vpop.f32.mrb[0].mxu0
      %v3445 = vpop.f32.mrb[0].mxu0
      %v3446 = vadd.f32 0.0, %v3445
      %v3447 = vpop.f32.mrb[0].mxu0
      %3448 = vmatprep.mubr.bf16.mxu0 0
      %3449 = vmatmul.mubr.bf16.gmra.mrb[0].mxu0 %v3094
      %v3450 = vpop.f32.mrb[0].mxu0
      %v3451 = vadd.f32 0.0, %v3450
      %v3452 = vpop.f32.mrb[0].mxu0
      %v3453 = vpop.f32.mrb[0].mxu0
      %v3454 = vadd.f32 0.0, %v3453
      %v3455 = vpop.f32.mrb[0].mxu0
      %3456 = vmatprep.mubr.bf16.mxu0 0
      %3457 = vmatmul.mubr.bf16.gmra.mrb[0].mxu0 %v3097
      %v3458 = vpop.f32.mrb[0].mxu0
      %v3459 = vadd.f32 0.0, %v3458
      %v3460 = vpop.f32.mrb[0].mxu0
      %v3461 = vpop.f32.mrb[0].mxu0
      %v3462 = vadd.f32 0.0, %v3461
      %v3463 = vpop.f32.mrb[0].mxu0
      %3464 = vmatprep.mubr.bf16.mxu0 0
      %3465 = vmatmul.mubr.bf16.gmra.mrb[0].mxu0 %v3100
      %v3466 = vpop.f32.mrb[0].mxu0
      %v3467 = vadd.f32 0.0, %v3466
      %v3468 = vpop.f32.mrb[0].mxu0
      %v3469 = vpop.f32.mrb[0].mxu0
      %v3470 = vadd.f32 0.0, %v3469
      %v3471 = vpop.f32.mrb[0].mxu0
      %3472 = vmatprep.mubr.bf16.mxu0 0
      %3473 = vmatmul.mubr.bf16.gmra.mrb[0].mxu0 %v3103
      %v3474 = vpop.f32.mrb[0].mxu0
      %v3475 = vadd.f32 0.0, %v3474
      %v3476 = vpop.f32.mrb[0].mxu0
      %v3477 = vpop.f32.mrb[0].mxu0
      %v3478 = vadd.f32 0.0, %v3477
      %v3479 = vpop.f32.mrb[0].mxu0
      %3480 = vmatprep.mubr.bf16.mxu0 0
      %3481 = vmatmul.mubr.bf16.gmra.mrb[0].mxu0 %v3106
      %v3482 = vpop.f32.mrb[0].mxu0
      %v3483 = vadd.f32 0.0, %v3482
      %v3484 = vpop.f32.mrb[0].mxu0
      %v3485 = vpop.f32.mrb[0].mxu0
      %v3486 = vadd.f32 0.0, %v3485
      %v3487 = vpop.f32.mrb[0].mxu0
      %3488 = vmatprep.mubr.bf16.mxu0 0
      %3489 = vmatmul.mubr.bf16.gmra.mrb[0].mxu0 %v3109
      %v3490 = vpop.f32.mrb[0].mxu0
      %v3491 = vadd.f32 0.0, %v3490
      %v3492 = vpop.f32.mrb[0].mxu0
      %v3493 = vpop.f32.mrb[0].mxu0
      %v3494 = vadd.f32 0.0, %v3493
      %v3495 = vpop.f32.mrb[0].mxu0
      %3496 = vmatprep.mubr.bf16.mxu0 0
      %3497 = vmatmul.mubr.bf16.gmra.mrb[0].mxu0 %v3112
      %v3498 = vpop.f32.mrb[0].mxu0
      %v3499 = vadd.f32 0.0, %v3498
      %v3500 = vpop.f32.mrb[0].mxu0
      %v3501 = vpop.f32.mrb[0].mxu0
      %v3502 = vadd.f32 0.0, %v3501
      %v3503 = vpop.f32.mrb[0].mxu0
      %3504 = vmatprep.mubr.bf16.mxu0 0
      %3505 = vmatmul.mubr.bf16.gmra.mrb[0].mxu0 %v3115
      %v3506 = vpop.f32.mrb[0].mxu0
      %v3507 = vadd.f32 0.0, %v3506
      %v3508 = vpop.f32.mrb[0].mxu0
      %v3509 = vpop.f32.mrb[0].mxu0
      %v3510 = vadd.f32 0.0, %v3509
      %v3511 = vpop.f32.mrb[0].mxu0
      %3512 = vmatprep.mubr.bf16.mxu0 0
      %3513 = vmatmul.mubr.bf16.gmra.mrb[0].mxu0 %v3118
      %v3514 = vpop.f32.mrb[0].mxu0
      %v3515 = vadd.f32 0.0, %v3514
      %v3516 = vpop.f32.mrb[0].mxu0
      %v3517 = vpop.f32.mrb[0].mxu0
      %v3518 = vadd.f32 0.0, %v3517
      %v3519 = vpop.f32.mrb[0].mxu0
      %3520 = vmatprep.mubr.bf16.mxu0 0
      %3521 = vmatmul.mubr.bf16.gmra.mrb[0].mxu0 %v3121
      %v3522 = vpop.f32.mrb[0].mxu0
      %v3523 = vadd.f32 0.0, %v3522
      %v3524 = vpop.f32.mrb[0].mxu0
      %v3525 = vpop.f32.mrb[0].mxu0
      %v3526 = vadd.f32 0.0, %v3525
      %v3527 = vpop.f32.mrb[0].mxu0
      %3528 = vmatprep.mubr.bf16.mxu0 0
      %3529 = vmatmul.mubr.bf16.gmra.mrb[0].mxu0 %v3124
      %v3530 = vpop.f32.mrb[0].mxu0
      %v3531 = vadd.f32 0.0, %v3530
      %v3532 = vpop.f32.mrb[0].mxu0
      %v3533 = vpop.f32.mrb[0].mxu0
      %v3534 = vadd.f32 0.0, %v3533
      %v3535 = vpop.f32.mrb[0].mxu0
      %3536 = vmatprep.mubr.bf16.mxu0 0
      %3537 = vmatmul.mubr.bf16.gmra.mrb[0].mxu0 %v3127
      %v3538 = vpop.f32.mrb[0].mxu0
      %v3539 = vadd.f32 0.0, %v3538
      %v3540 = vpop.f32.mrb[0].mxu0
      %v3541 = vpop.f32.mrb[0].mxu0
      %v3542 = vadd.f32 0.0, %v3541
      %v3543 = vpop.f32.mrb[0].mxu0
      %3544 = vmatprep.mubr.bf16.mxu0 0
      %3545 = vmatmul.mubr.bf16.gmra.mrb[0].mxu0 %v3130
      %v3546 = vpop.f32.mrb[0].mxu0
      %v3547 = vadd.f32 0.0, %v3546
      %v3548 = vpop.f32.mrb[0].mxu0
      %v3549 = vpop.f32.mrb[0].mxu0
      %v3550 = vadd.f32 0.0, %v3549
      %v3551 = vpop.f32.mrb[0].mxu0
      %3552 = vmatprep.mubr.bf16.mxu0 0
      %3553 = vmatmul.mubr.bf16.gmra.mrb[0].mxu0 %v3133
      %v3554 = vpop.f32.mrb[0].mxu0
      %v3555 = vadd.f32 0.0, %v3554
      %v3556 = vpop.f32.mrb[0].mxu0
      %v3557 = vpop.f32.mrb[0].mxu0
      %v3558 = vadd.f32 0.0, %v3557
      %v3559 = vpop.f32.mrb[0].mxu0
      %3560 = vmatprep.mubr.bf16.mxu0 0
      %3561 = vmatmul.mubr.bf16.gmra.mrb[0].mxu0 %v3136
      %v3562 = vpop.f32.mrb[0].mxu0
      %v3563 = vadd.f32 0.0, %v3562
      %v3564 = vpop.f32.mrb[0].mxu0
      %v3565 = vpop.f32.mrb[0].mxu0
      %v3566 = vadd.f32 0.0, %v3565
      %v3567 = vpop.f32.mrb[0].mxu0
      %3568 = vmatprep.mubr.bf16.mxu0 0
      %3569 = vmatmul.mubr.bf16.gmra.mrb[0].mxu0 %v3139
      %v3570 = vpop.f32.mrb[0].mxu0
      %v3571 = vadd.f32 0.0, %v3570
      %v3572 = vpop.f32.mrb[0].mxu0
      %v3573 = vpop.f32.mrb[0].mxu0
      %v3574 = vadd.f32 0.0, %v3573
      %v3575 = vpop.f32.mrb[0].mxu0
      %3576 = vmatprep.mubr.bf16.mxu0 0
      %3577 = vmatmul.mubr.bf16.gmra.mrb[0].mxu0 %v3142
      %v3578 = vpop.f32.mrb[0].mxu0
      %v3579 = vadd.f32 0.0, %v3578
      %v3580 = vpop.f32.mrb[0].mxu0
      %v3581 = vpop.f32.mrb[0].mxu0
      %v3582 = vadd.f32 0.0, %v3581
      %v3583 = vpop.f32.mrb[0].mxu0
      %3584 = vmatprep.mubr.bf16.mxu0 0
      %3585 = vmatmul.mubr.bf16.gmra.mrb[0].mxu0 %v3145
      %v3586 = vpop.f32.mrb[0].mxu0
      %v3587 = vadd.f32 0.0, %v3586
      %v3588 = vpop.f32.mrb[0].mxu0
      %v3589 = vpop.f32.mrb[0].mxu0
      %v3590 = vadd.f32 0.0, %v3589
      %v3591 = vpop.f32.mrb[0].mxu0
      %3592 = vmatprep.mubr.bf16.mxu0 0
      %3593 = vmatmul.mubr.bf16.gmra.mrb[0].mxu0 %v3400
      %v3594 = vpop.f32.mrb[0].mxu0
      %v3595 = vadd.f32 0.0, %v3594
      %v3596 = vpop.f32.mrb[0].mxu0
      %v3597 = vpop.f32.mrb[0].mxu0
      %v3598 = vadd.f32 0.0, %v3597
      %v3599 = vpop.f32.mrb[0].mxu0
      %3600 = vmatprep.mubr.bf16.mxu0 0
      %3601 = vmatmul.mubr.bf16.gmra.mrb[0].mxu0 %v3403
      %v3602 = vpop.f32.mrb[0].mxu0
      %v3603 = vadd.f32 0.0, %v3602
      %v3604 = vpop.f32.mrb[0].mxu0
      %v3605 = vpop.f32.mrb[0].mxu0
      %v3606 = vpop.f32.mrb[0].mxu0
      %3607 = vdwg.mxu0
      %v3608 = vadd.f32 %v3353, %v3443
      %v3609 = vadd.f32 %v3354, %v3446
      %v3610 = vadd.f32 %v3355, %v3451
      %v3611 = vadd.f32 %v3356, %v3454
      %v3612 = vadd.f32 %v3357, %v3459
      %v3613 = vadd.f32 %v3358, %v3462
      %v3614 = vadd.f32 %v3359, %v3467
      %v3615 = vadd.f32 %v3360, %v3470
      %v3616 = vadd.f32 %v3361, %v3475
      %v3617 = vadd.f32 %v3362, %v3478
      %v3618 = vadd.f32 %v3363, %v3483
      %v3619 = vadd.f32 %v3364, %v3486
      %v3620 = vadd.f32 %v3365, %v3491
      %v3621 = vadd.f32 %v3366, %v3494
      %v3622 = vadd.f32 %v3367, %v3499
      %v3623 = vadd.f32 %v3368, %v3502
      %v3624 = vadd.f32 %v3369, %v3507
      %v3625 = vadd.f32 %v3370, %v3510
      %v3626 = vadd.f32 %v3371, %v3515
      %v3627 = vadd.f32 %v3372, %v3518
      %v3628 = vadd.f32 %v3373, %v3523
      %v3629 = vadd.f32 %v3374, %v3526
      %v3630 = vadd.f32 %v3375, %v3531
      %v3631 = vadd.f32 %v3376, %v3534
      %v3632 = vadd.f32 %v3377, %v3539
      %v3633 = vadd.f32 %v3378, %v3542
      %v3634 = vadd.f32 %v3379, %v3547
      %v3635 = vadd.f32 %v3380, %v3550
      %v3636 = vadd.f32 %v3381, %v3555
      %v3637 = vadd.f32 %v3382, %v3558
      %v3638 = vadd.f32 %v3383, %v3563
      %v3639 = vadd.f32 %v3384, %v3566
      %v3640 = vadd.f32 %v3385, %v3571
      %v3641 = vadd.f32 %v3386, %v3574
      %v3642 = vadd.f32 %v3387, %v3579
      %v3643 = vadd.f32 %v3388, %v3582
      %v3644 = vadd.f32 %v3389, %v3587
      %v3645 = vadd.f32 %v3390, %v3590
      %v3646 = vadd.f32 %v3391, %v3595
      %v3647 = vadd.f32 %v3392, %v3598
      %v3648 = vadd.f32 %v3393, %v3603
      %s3649 = scalar_lea.vmem %s4, 28
      %v3650 = vld [vmem:[%s3649] sm:$0xf]
      %vm3651 = vsmask.f32 5376
      %v3652 = vrot.slane %v1358, 2
      %v3653 = vrot.slane %v1354, 3
      %v3654 = vor.u32 %v3652, %v3653
      %v3655 = vrot.slane %v1366, 2
      %v3656 = vrot.slane %v1362, 3
      %v3657 = vor.u32 %v3655, %v3656
      %v3658 = vsel %vm3651, %v3654, %v3657
      %v3659 = vrot.slane %v1374, 2
      %v3660 = vrot.slane %v1370, 3
      %v3661 = vor.u32 %v3659, %v3660
      %v3662 = vsel %vm3651, %v3657, %v3661
      %v3663 = vrot.slane %v1382, 2
      %v3664 = vrot.slane %v1378, 3
      %v3665 = vor.u32 %v3663, %v3664
      %v3666 = vsel %vm3651, %v3661, %v3665
      %v3667 = vrot.slane %v1390, 2
      %v3668 = vrot.slane %v1386, 3
      %v3669 = vor.u32 %v3667, %v3668
      %v3670 = vsel %vm3651, %v3665, %v3669
      %v3671 = vrot.slane %v1398, 2
      %v3672 = vrot.slane %v1394, 3
      %v3673 = vor.u32 %v3671, %v3672
      %v3674 = vsel %vm3651, %v3669, %v3673
      %v3675 = vrot.slane %v1406, 2
      %v3676 = vrot.slane %v1402, 3
      %v3677 = vor.u32 %v3675, %v3676
      %v3678 = vsel %vm3651, %v3673, %v3677
      %v3679 = vrot.slane %v1414, 2
      %v3680 = vrot.slane %v1410, 3
      %v3681 = vor.u32 %v3679, %v3680
      %v3682 = vsel %vm3651, %v3677, %v3681
      %v3683 = vrot.slane %v1422, 2
      %v3684 = vrot.slane %v1418, 3
      %v3685 = vor.u32 %v3683, %v3684
      %v3686 = vsel %vm3651, %v3681, %v3685
      %v3687 = vrot.slane %v1430, 2
      %v3688 = vrot.slane %v1426, 3
      %v3689 = vor.u32 %v3687, %v3688
      %v3690 = vsel %vm3651, %v3685, %v3689
      %v3691 = vrot.slane %v1438, 2
      %v3692 = vrot.slane %v1434, 3
      %v3693 = vor.u32 %v3691, %v3692
      %v3694 = vsel %vm3651, %v3689, %v3693
      %v3695 = vrot.slane %v1446, 2
      %v3696 = vrot.slane %v1442, 3
      %v3697 = vor.u32 %v3695, %v3696
      %v3698 = vsel %vm3651, %v3693, %v3697
      %v3699 = vrot.slane %v1454, 2
      %v3700 = vrot.slane %v1450, 3
      %v3701 = vor.u32 %v3699, %v3700
      %v3702 = vsel %vm3651, %v3697, %v3701
      %v3703 = vrot.slane %v1462, 2
      %v3704 = vrot.slane %v1458, 3
      %v3705 = vor.u32 %v3703, %v3704
      %v3706 = vsel %vm3651, %v3701, %v3705
      %v3707 = vrot.slane %v1470, 2
      %v3708 = vrot.slane %v1466, 3
      %v3709 = vor.u32 %v3707, %v3708
      %v3710 = vsel %vm3651, %v3705, %v3709
      %v3711 = vrot.slane %v1478, 2
      %v3712 = vrot.slane %v1474, 3
      %v3713 = vor.u32 %v3711, %v3712
      %v3714 = vsel %vm3651, %v3709, %v3713
      %v3715 = vrot.slane %v1486, 2
      %v3716 = vrot.slane %v1482, 3
      %v3717 = vor.u32 %v3715, %v3716
      %v3718 = vsel %vm3651, %v3713, %v3717
      %v3719 = vrot.slane %v1494, 2
      %v3720 = vrot.slane %v1490, 3
      %v3721 = vor.u32 %v3719, %v3720
      %v3722 = vsel %vm3651, %v3717, %v3721
      %v3723 = vrot.slane %v1502, 2
      %v3724 = vrot.slane %v1498, 3
      %v3725 = vor.u32 %v3723, %v3724
      %v3726 = vsel %vm3651, %v3721, %v3725
      %v3727 = vrot.slane %v2728, 2
      %v3728 = vrot.slane %v2731, 3
      %v3729 = vor.u32 %v3727, %v3728
      %v3730 = vsel %vm3651, %v3725, %v3729
      %v3732 = vshrl.u32 %v1333, 16
      %v3734 = vrot.slane %v3732, 2
      %v3735 = vshll.u32 %v1333, 16
      %v3737 = vrot.slane %v3735, 3
      %v3738 = vor.u32 %v3734, %v3737
      %v3739 = vsel %vm3651, %v3729, %v3738
      %v3741 = vsel %vm1505, %v3658, 0
      %v3744 = vsel %vm1505, %v3662, 0
      %v3747 = vsel %vm1505, %v3666, 0
      %v3750 = vsel %vm1505, %v3670, 0
      %v3753 = vsel %vm1505, %v3674, 0
      %v3756 = vsel %vm1505, %v3678, 0
      %v3759 = vsel %vm1505, %v3682, 0
      %v3762 = vsel %vm1505, %v3686, 0
      %v3765 = vsel %vm1505, %v3690, 0
      %v3768 = vsel %vm1505, %v3694, 0
      %v3771 = vsel %vm1505, %v3698, 0
      %v3774 = vsel %vm1505, %v3702, 0
      %v3777 = vsel %vm1505, %v3706, 0
      %v3780 = vsel %vm1505, %v3710, 0
      %v3783 = vsel %vm1505, %v3714, 0
      %v3786 = vsel %vm1505, %v3718, 0
      %v3789 = vsel %vm1505, %v3722, 0
      %v3792 = vsel %vm1505, %v3726, 0
      %v3795 = vsel %vm1505, %v3730, 0
      %v3798 = vsel %vm1505, %v3739, 0
      %v3801 = vsel %vm1505, %v3738, 0
      %v3804 = vsel %vm1569, %v3650, 0
      %3806 = vmatprep.subr.bf16.mxu0 0
      %3807 = vmatpush1.bf16.msra.mxu0 %v3804
      %3808 = vmatprep.subr.bf16.mxu0 0
      %3809 = vmatpush1.bf16.msra.mxu0 0
      %3810 = vmatprep.subr.bf16.mxu0 0
      %3811 = vmatpush1.bf16.msra.mxu0 0
      %3812 = vmatprep.subr.bf16.mxu0 0
      %3813 = vmatpush1.bf16.msra.mxu0 0
      %3814 = vmatprep.subr.bf16.mxu0 0
      %3815 = vmatpush1.bf16.msra.mxu0 0
      %3816 = vmatprep.subr.bf16.mxu0 0
      %3817 = vmatpush1.bf16.msra.mxu0 0
      %3818 = vmatprep.subr.bf16.mxu0 0
      %3819 = vmatpush1.bf16.msra.mxu0 0
      %3820 = vmatprep.subr.bf16.mxu0 0
      %3821 = vmatpush1.bf16.msra.mxu0 0
      %3822 = vmatprep.subr.bf16.mxu0 0
      %3823 = vmatpush1.bf16.msra.mxu0 0
      %3824 = vmatprep.subr.bf16.mxu0 0
      %3825 = vmatpush1.bf16.msra.mxu0 0
      %3826 = vmatprep.subr.bf16.mxu0 0
      %3827 = vmatpush1.bf16.msra.mxu0 0
      %3828 = vmatprep.subr.bf16.mxu0 0
      %3829 = vmatpush1.bf16.msra.mxu0 0
      %3830 = vmatprep.subr.bf16.mxu0 0
      %3831 = vmatpush1.bf16.msra.mxu0 0
      %3832 = vmatprep.subr.bf16.mxu0 0
      %3833 = vmatpush1.bf16.msra.mxu0 0
      %3834 = vmatprep.subr.bf16.mxu0 0
      %3835 = vmatpush1.bf16.msra.mxu0 0
      %3836 = vmatprep.subr.bf16.mxu0 0
      %3837 = vmatpush1.bf16.msra.mxu0 0
      %3838 = vmatprep.mubr.bf16.mxu0 0
      %3839 = vmatmul.mubr.bf16.gmra.mrb[0].mxu0 %v3741
      %v3840 = vpop.f32.mrb[0].mxu0
      %v3841 = vadd.f32 0.0, %v3840
      %v3842 = vpop.f32.mrb[0].mxu0
      %v3843 = vpop.f32.mrb[0].mxu0
      %v3844 = vadd.f32 0.0, %v3843
      %v3845 = vpop.f32.mrb[0].mxu0
      %3846 = vmatprep.mubr.bf16.mxu0 0
      %3847 = vmatmul.mubr.bf16.gmra.mrb[0].mxu0 %v3744
      %v3848 = vpop.f32.mrb[0].mxu0
      %v3849 = vadd.f32 0.0, %v3848
      %v3850 = vpop.f32.mrb[0].mxu0
      %v3851 = vpop.f32.mrb[0].mxu0
      %v3852 = vadd.f32 0.0, %v3851
      %v3853 = vpop.f32.mrb[0].mxu0
      %3854 = vmatprep.mubr.bf16.mxu0 0
      %3855 = vmatmul.mubr.bf16.gmra.mrb[0].mxu0 %v3747
      %v3856 = vpop.f32.mrb[0].mxu0
      %v3857 = vadd.f32 0.0, %v3856
      %v3858 = vpop.f32.mrb[0].mxu0
      %v3859 = vpop.f32.mrb[0].mxu0
      %v3860 = vadd.f32 0.0, %v3859
      %v3861 = vpop.f32.mrb[0].mxu0
      %3862 = vmatprep.mubr.bf16.mxu0 0
      %3863 = vmatmul.mubr.bf16.gmra.mrb[0].mxu0 %v3750
      %v3864 = vpop.f32.mrb[0].mxu0
      %v3865 = vadd.f32 0.0, %v3864
      %v3866 = vpop.f32.mrb[0].mxu0
      %v3867 = vpop.f32.mrb[0].mxu0
      %v3868 = vadd.f32 0.0, %v3867
      %v3869 = vpop.f32.mrb[0].mxu0
      %3870 = vmatprep.mubr.bf16.mxu0 0
      %3871 = vmatmul.mubr.bf16.gmra.mrb[0].mxu0 %v3753
      %v3872 = vpop.f32.mrb[0].mxu0
      %v3873 = vadd.f32 0.0, %v3872
      %v3874 = vpop.f32.mrb[0].mxu0
      %v3875 = vpop.f32.mrb[0].mxu0
      %v3876 = vadd.f32 0.0, %v3875
      %v3877 = vpop.f32.mrb[0].mxu0
      %3878 = vmatprep.mubr.bf16.mxu0 0
      %3879 = vmatmul.mubr.bf16.gmra.mrb[0].mxu0 %v3756
      %v3880 = vpop.f32.mrb[0].mxu0
      %v3881 = vadd.f32 0.0, %v3880
      %v3882 = vpop.f32.mrb[0].mxu0
      %v3883 = vpop.f32.mrb[0].mxu0
      %v3884 = vadd.f32 0.0, %v3883
      %v3885 = vpop.f32.mrb[0].mxu0
      %3886 = vmatprep.mubr.bf16.mxu0 0
      %3887 = vmatmul.mubr.bf16.gmra.mrb[0].mxu0 %v3759
      %v3888 = vpop.f32.mrb[0].mxu0
      %v3889 = vadd.f32 0.0, %v3888
      %v3890 = vpop.f32.mrb[0].mxu0
      %v3891 = vpop.f32.mrb[0].mxu0
      %v3892 = vadd.f32 0.0, %v3891
      %v3893 = vpop.f32.mrb[0].mxu0
      %3894 = vmatprep.mubr.bf16.mxu0 0
      %3895 = vmatmul.mubr.bf16.gmra.mrb[0].mxu0 %v3762
      %v3896 = vpop.f32.mrb[0].mxu0
      %v3897 = vadd.f32 0.0, %v3896
      %v3898 = vpop.f32.mrb[0].mxu0
      %v3899 = vpop.f32.mrb[0].mxu0
      %v3900 = vadd.f32 0.0, %v3899
      %v3901 = vpop.f32.mrb[0].mxu0
      %3902 = vmatprep.mubr.bf16.mxu0 0
      %3903 = vmatmul.mubr.bf16.gmra.mrb[0].mxu0 %v3765
      %v3904 = vpop.f32.mrb[0].mxu0
      %v3905 = vadd.f32 0.0, %v3904
      %v3906 = vpop.f32.mrb[0].mxu0
      %v3907 = vpop.f32.mrb[0].mxu0
      %v3908 = vadd.f32 0.0, %v3907
      %v3909 = vpop.f32.mrb[0].mxu0
      %3910 = vmatprep.mubr.bf16.mxu0 0
      %3911 = vmatmul.mubr.bf16.gmra.mrb[0].mxu0 %v3768
      %v3912 = vpop.f32.mrb[0].mxu0
      %v3913 = vadd.f32 0.0, %v3912
      %v3914 = vpop.f32.mrb[0].mxu0
      %v3915 = vpop.f32.mrb[0].mxu0
      %v3916 = vadd.f32 0.0, %v3915
      %v3917 = vpop.f32.mrb[0].mxu0
      %3918 = vmatprep.mubr.bf16.mxu0 0
      %3919 = vmatmul.mubr.bf16.gmra.mrb[0].mxu0 %v3771
      %v3920 = vpop.f32.mrb[0].mxu0
      %v3921 = vadd.f32 0.0, %v3920
      %v3922 = vpop.f32.mrb[0].mxu0
      %v3923 = vpop.f32.mrb[0].mxu0
      %v3924 = vadd.f32 0.0, %v3923
      %v3925 = vpop.f32.mrb[0].mxu0
      %3926 = vmatprep.mubr.bf16.mxu0 0
      %3927 = vmatmul.mubr.bf16.gmra.mrb[0].mxu0 %v3774
      %v3928 = vpop.f32.mrb[0].mxu0
      %v3929 = vadd.f32 0.0, %v3928
      %v3930 = vpop.f32.mrb[0].mxu0
      %v3931 = vpop.f32.mrb[0].mxu0
      %v3932 = vadd.f32 0.0, %v3931
      %v3933 = vpop.f32.mrb[0].mxu0
      %3934 = vmatprep.mubr.bf16.mxu0 0
      %3935 = vmatmul.mubr.bf16.gmra.mrb[0].mxu0 %v3777
      %v3936 = vpop.f32.mrb[0].mxu0
      %v3937 = vadd.f32 0.0, %v3936
      %v3938 = vpop.f32.mrb[0].mxu0
      %v3939 = vpop.f32.mrb[0].mxu0
      %v3940 = vadd.f32 0.0, %v3939
      %v3941 = vpop.f32.mrb[0].mxu0
      %3942 = vmatprep.mubr.bf16.mxu0 0
      %3943 = vmatmul.mubr.bf16.gmra.mrb[0].mxu0 %v3780
      %v3944 = vpop.f32.mrb[0].mxu0
      %v3945 = vadd.f32 0.0, %v3944
      %v3946 = vpop.f32.mrb[0].mxu0
      %v3947 = vpop.f32.mrb[0].mxu0
      %v3948 = vadd.f32 0.0, %v3947
      %v3949 = vpop.f32.mrb[0].mxu0
      %3950 = vmatprep.mubr.bf16.mxu0 0
      %3951 = vmatmul.mubr.bf16.gmra.mrb[0].mxu0 %v3783
      %v3952 = vpop.f32.mrb[0].mxu0
      %v3953 = vadd.f32 0.0, %v3952
      %v3954 = vpop.f32.mrb[0].mxu0
      %v3955 = vpop.f32.mrb[0].mxu0
      %v3956 = vadd.f32 0.0, %v3955
      %v3957 = vpop.f32.mrb[0].mxu0
      %3958 = vmatprep.mubr.bf16.mxu0 0
      %3959 = vmatmul.mubr.bf16.gmra.mrb[0].mxu0 %v3786
      %v3960 = vpop.f32.mrb[0].mxu0
      %v3961 = vadd.f32 0.0, %v3960
      %v3962 = vpop.f32.mrb[0].mxu0
      %v3963 = vpop.f32.mrb[0].mxu0
      %v3964 = vadd.f32 0.0, %v3963
      %v3965 = vpop.f32.mrb[0].mxu0
      %3966 = vmatprep.mubr.bf16.mxu0 0
      %3967 = vmatmul.mubr.bf16.gmra.mrb[0].mxu0 %v3789
      %v3968 = vpop.f32.mrb[0].mxu0
      %v3969 = vadd.f32 0.0, %v3968
      %v3970 = vpop.f32.mrb[0].mxu0
      %v3971 = vpop.f32.mrb[0].mxu0
      %v3972 = vadd.f32 0.0, %v3971
      %v3973 = vpop.f32.mrb[0].mxu0
      %3974 = vmatprep.mubr.bf16.mxu0 0
      %3975 = vmatmul.mubr.bf16.gmra.mrb[0].mxu0 %v3792
      %v3976 = vpop.f32.mrb[0].mxu0
      %v3977 = vadd.f32 0.0, %v3976
      %v3978 = vpop.f32.mrb[0].mxu0
      %v3979 = vpop.f32.mrb[0].mxu0
      %v3980 = vadd.f32 0.0, %v3979
      %v3981 = vpop.f32.mrb[0].mxu0
      %3982 = vmatprep.mubr.bf16.mxu0 0
      %3983 = vmatmul.mubr.bf16.gmra.mrb[0].mxu0 %v3795
      %v3984 = vpop.f32.mrb[0].mxu0
      %v3985 = vadd.f32 0.0, %v3984
      %v3986 = vpop.f32.mrb[0].mxu0
      %v3987 = vpop.f32.mrb[0].mxu0
      %v3988 = vadd.f32 0.0, %v3987
      %v3989 = vpop.f32.mrb[0].mxu0
      %3990 = vmatprep.mubr.bf16.mxu0 0
      %3991 = vmatmul.mubr.bf16.gmra.mrb[0].mxu0 %v3798
      %v3992 = vpop.f32.mrb[0].mxu0
      %v3993 = vadd.f32 0.0, %v3992
      %v3994 = vpop.f32.mrb[0].mxu0
      %v3995 = vpop.f32.mrb[0].mxu0
      %v3996 = vadd.f32 0.0, %v3995
      %v3997 = vpop.f32.mrb[0].mxu0
      %3998 = vmatprep.mubr.bf16.mxu0 0
      %3999 = vmatmul.mubr.bf16.gmra.mrb[0].mxu0 %v3801
      %v4000 = vpop.f32.mrb[0].mxu0
      %v4001 = vadd.f32 0.0, %v4000
      %v4002 = vpop.f32.mrb[0].mxu0
      %v4003 = vpop.f32.mrb[0].mxu0
      %v4004 = vpop.f32.mrb[0].mxu0
      %4005 = vdwg.mxu0
      %v4006 = vadd.f32 %v3608, %v3841
      %v4007 = vadd.f32 %v3609, %v3844
      %v4008 = vadd.f32 %v3610, %v3849
      %v4009 = vadd.f32 %v3611, %v3852
      %v4010 = vadd.f32 %v3612, %v3857
      %v4011 = vadd.f32 %v3613, %v3860
      %v4012 = vadd.f32 %v3614, %v3865
      %v4013 = vadd.f32 %v3615, %v3868
      %v4014 = vadd.f32 %v3616, %v3873
      %v4015 = vadd.f32 %v3617, %v3876
      %v4016 = vadd.f32 %v3618, %v3881
      %v4017 = vadd.f32 %v3619, %v3884
      %v4018 = vadd.f32 %v3620, %v3889
      %v4019 = vadd.f32 %v3621, %v3892
      %v4020 = vadd.f32 %v3622, %v3897
      %v4021 = vadd.f32 %v3623, %v3900
      %v4022 = vadd.f32 %v3624, %v3905
      %v4023 = vadd.f32 %v3625, %v3908
      %v4024 = vadd.f32 %v3626, %v3913
      %v4025 = vadd.f32 %v3627, %v3916
      %v4026 = vadd.f32 %v3628, %v3921
      %v4027 = vadd.f32 %v3629, %v3924
      %v4028 = vadd.f32 %v3630, %v3929
      %v4029 = vadd.f32 %v3631, %v3932
      %v4030 = vadd.f32 %v3632, %v3937
      %v4031 = vadd.f32 %v3633, %v3940
      %v4032 = vadd.f32 %v3634, %v3945
      %v4033 = vadd.f32 %v3635, %v3948
      %v4034 = vadd.f32 %v3636, %v3953
      %v4035 = vadd.f32 %v3637, %v3956
      %v4036 = vadd.f32 %v3638, %v3961
      %v4037 = vadd.f32 %v3639, %v3964
      %v4038 = vadd.f32 %v3640, %v3969
      %v4039 = vadd.f32 %v3641, %v3972
      %v4040 = vadd.f32 %v3642, %v3977
      %v4041 = vadd.f32 %v3643, %v3980
      %v4042 = vadd.f32 %v3644, %v3985
      %v4043 = vadd.f32 %v3645, %v3988
      %v4044 = vadd.f32 %v3646, %v3993
      %v4045 = vadd.f32 %v3647, %v3996
      %v4046 = vadd.f32 %v3648, %v4001
      %s4047 = scalar_lea.vmem %s4, 32
      %v4048 = vld [vmem:[%s4047] sm:$0xf]
      %vm4049 = vcmask 1044480
      %v4050 = vrot.slane %v1313, 3
      %v4051 = vrot.slane %v1314, 3
      %v4052 = vsel %vm4049, %v4050, %v4051
      %v4053 = vrot.slane %v1315, 3
      %v4054 = vsel %vm4049, %v4051, %v4053
      %v4055 = vrot.slane %v1316, 3
      %v4056 = vsel %vm4049, %v4053, %v4055
      %v4057 = vrot.slane %v1317, 3
      %v4058 = vsel %vm4049, %v4055, %v4057
      %v4059 = vrot.slane %v1318, 3
      %v4060 = vsel %vm4049, %v4057, %v4059
      %v4061 = vrot.slane %v1319, 3
      %v4062 = vsel %vm4049, %v4059, %v4061
      %v4063 = vrot.slane %v1320, 3
      %v4064 = vsel %vm4049, %v4061, %v4063
      %v4065 = vrot.slane %v1321, 3
      %v4066 = vsel %vm4049, %v4063, %v4065
      %v4067 = vrot.slane %v1322, 3
      %v4068 = vsel %vm4049, %v4065, %v4067
      %v4069 = vrot.slane %v1323, 3
      %v4070 = vsel %vm4049, %v4067, %v4069
      %v4071 = vrot.slane %v1324, 3
      %v4072 = vsel %vm4049, %v4069, %v4071
      %v4073 = vrot.slane %v1325, 3
      %v4074 = vsel %vm4049, %v4071, %v4073
      %v4075 = vrot.slane %v1326, 3
      %v4076 = vsel %vm4049, %v4073, %v4075
      %v4077 = vrot.slane %v1327, 3
      %v4078 = vsel %vm4049, %v4075, %v4077
      %v4079 = vrot.slane %v1328, 3
      %v4080 = vsel %vm4049, %v4077, %v4079
      %v4081 = vrot.slane %v1329, 3
      %v4082 = vsel %vm4049, %v4079, %v4081
      %v4083 = vrot.slane %v1330, 3
      %v4084 = vsel %vm4049, %v4081, %v4083
      %v4085 = vrot.slane %v1331, 3
      %v4086 = vsel %vm4049, %v4083, %v4085
      %v4087 = vrot.slane %v1332, 3
      %v4088 = vsel %vm4049, %v4085, %v4087
      %v4089 = vrot.slane %v1333, 3
      %v4090 = vsel %vm4049, %v4087, %v4089
      %v4092 = vsel %vm1505, %v4052, 0
      %v4095 = vsel %vm1505, %v4054, 0
      %v4098 = vsel %vm1505, %v4056, 0
      %v4101 = vsel %vm1505, %v4058, 0
      %v4104 = vsel %vm1505, %v4060, 0
      %v4107 = vsel %vm1505, %v4062, 0
      %v4110 = vsel %vm1505, %v4064, 0
      %v4113 = vsel %vm1505, %v4066, 0
      %v4116 = vsel %vm1505, %v4068, 0
      %v4119 = vsel %vm1505, %v4070, 0
      %v4122 = vsel %vm1505, %v4072, 0
      %v4125 = vsel %vm1505, %v4074, 0
      %v4128 = vsel %vm1505, %v4076, 0
      %v4131 = vsel %vm1505, %v4078, 0
      %v4134 = vsel %vm1505, %v4080, 0
      %v4137 = vsel %vm1505, %v4082, 0
      %v4140 = vsel %vm1505, %v4084, 0
      %v4143 = vsel %vm1505, %v4086, 0
      %v4146 = vsel %vm1505, %v4088, 0
      %v4149 = vsel %vm1505, %v4090, 0
      %v4152 = vsel %vm1505, %v4089, 0
      %v4155 = vsel %vm1569, %v4048, 0
      %4157 = vmatprep.subr.bf16.mxu0 0
      %4158 = vmatpush1.bf16.msra.mxu0 %v4155
      %4159 = vmatprep.subr.bf16.mxu0 0
      %4160 = vmatpush1.bf16.msra.mxu0 0
      %4161 = vmatprep.subr.bf16.mxu0 0
      %4162 = vmatpush1.bf16.msra.mxu0 0
      %4163 = vmatprep.subr.bf16.mxu0 0
      %4164 = vmatpush1.bf16.msra.mxu0 0
      %4165 = vmatprep.subr.bf16.mxu0 0
      %4166 = vmatpush1.bf16.msra.mxu0 0
      %4167 = vmatprep.subr.bf16.mxu0 0
      %4168 = vmatpush1.bf16.msra.mxu0 0
      %4169 = vmatprep.subr.bf16.mxu0 0
      %4170 = vmatpush1.bf16.msra.mxu0 0
      %4171 = vmatprep.subr.bf16.mxu0 0
      %4172 = vmatpush1.bf16.msra.mxu0 0
      %4173 = vmatprep.subr.bf16.mxu0 0
      %4174 = vmatpush1.bf16.msra.mxu0 0
      %4175 = vmatprep.subr.bf16.mxu0 0
      %4176 = vmatpush1.bf16.msra.mxu0 0
      %4177 = vmatprep.subr.bf16.mxu0 0
      %4178 = vmatpush1.bf16.msra.mxu0 0
      %4179 = vmatprep.subr.bf16.mxu0 0
      %4180 = vmatpush1.bf16.msra.mxu0 0
      %4181 = vmatprep.subr.bf16.mxu0 0
      %4182 = vmatpush1.bf16.msra.mxu0 0
      %4183 = vmatprep.subr.bf16.mxu0 0
      %4184 = vmatpush1.bf16.msra.mxu0 0
      %4185 = vmatprep.subr.bf16.mxu0 0
      %4186 = vmatpush1.bf16.msra.mxu0 0
      %4187 = vmatprep.subr.bf16.mxu0 0
      %4188 = vmatpush1.bf16.msra.mxu0 0
      %4189 = vmatprep.mubr.bf16.mxu0 0
      %4190 = vmatmul.mubr.bf16.gmra.mrb[0].mxu0 %v4092
      %v4191 = vpop.f32.mrb[0].mxu0
      %v4192 = vadd.f32 0.0, %v4191
      %v4193 = vpop.f32.mrb[0].mxu0
      %v4194 = vpop.f32.mrb[0].mxu0
      %v4195 = vadd.f32 0.0, %v4194
      %v4196 = vpop.f32.mrb[0].mxu0
      %4197 = vmatprep.mubr.bf16.mxu0 0
      %4198 = vmatmul.mubr.bf16.gmra.mrb[0].mxu0 %v4095
      %v4199 = vpop.f32.mrb[0].mxu0
      %v4200 = vadd.f32 0.0, %v4199
      %v4201 = vpop.f32.mrb[0].mxu0
      %v4202 = vpop.f32.mrb[0].mxu0
      %v4203 = vadd.f32 0.0, %v4202
      %v4204 = vpop.f32.mrb[0].mxu0
      %4205 = vmatprep.mubr.bf16.mxu0 0
      %4206 = vmatmul.mubr.bf16.gmra.mrb[0].mxu0 %v4098
      %v4207 = vpop.f32.mrb[0].mxu0
      %v4208 = vadd.f32 0.0, %v4207
      %v4209 = vpop.f32.mrb[0].mxu0
      %v4210 = vpop.f32.mrb[0].mxu0
      %v4211 = vadd.f32 0.0, %v4210
      %v4212 = vpop.f32.mrb[0].mxu0
      %4213 = vmatprep.mubr.bf16.mxu0 0
      %4214 = vmatmul.mubr.bf16.gmra.mrb[0].mxu0 %v4101
      %v4215 = vpop.f32.mrb[0].mxu0
      %v4216 = vadd.f32 0.0, %v4215
      %v4217 = vpop.f32.mrb[0].mxu0
      %v4218 = vpop.f32.mrb[0].mxu0
      %v4219 = vadd.f32 0.0, %v4218
      %v4220 = vpop.f32.mrb[0].mxu0
      %4221 = vmatprep.mubr.bf16.mxu0 0
      %4222 = vmatmul.mubr.bf16.gmra.mrb[0].mxu0 %v4104
      %v4223 = vpop.f32.mrb[0].mxu0
      %v4224 = vadd.f32 0.0, %v4223
      %v4225 = vpop.f32.mrb[0].mxu0
      %v4226 = vpop.f32.mrb[0].mxu0
      %v4227 = vadd.f32 0.0, %v4226
      %v4228 = vpop.f32.mrb[0].mxu0
      %4229 = vmatprep.mubr.bf16.mxu0 0
      %4230 = vmatmul.mubr.bf16.gmra.mrb[0].mxu0 %v4107
      %v4231 = vpop.f32.mrb[0].mxu0
      %v4232 = vadd.f32 0.0, %v4231
      %v4233 = vpop.f32.mrb[0].mxu0
      %v4234 = vpop.f32.mrb[0].mxu0
      %v4235 = vadd.f32 0.0, %v4234
      %v4236 = vpop.f32.mrb[0].mxu0
      %4237 = vmatprep.mubr.bf16.mxu0 0
      %4238 = vmatmul.mubr.bf16.gmra.mrb[0].mxu0 %v4110
      %v4239 = vpop.f32.mrb[0].mxu0
      %v4240 = vadd.f32 0.0, %v4239
      %v4241 = vpop.f32.mrb[0].mxu0
      %v4242 = vpop.f32.mrb[0].mxu0
      %v4243 = vadd.f32 0.0, %v4242
      %v4244 = vpop.f32.mrb[0].mxu0
      %4245 = vmatprep.mubr.bf16.mxu0 0
      %4246 = vmatmul.mubr.bf16.gmra.mrb[0].mxu0 %v4113
      %v4247 = vpop.f32.mrb[0].mxu0
      %v4248 = vadd.f32 0.0, %v4247
      %v4249 = vpop.f32.mrb[0].mxu0
      %v4250 = vpop.f32.mrb[0].mxu0
      %v4251 = vadd.f32 0.0, %v4250
      %v4252 = vpop.f32.mrb[0].mxu0
      %4253 = vmatprep.mubr.bf16.mxu0 0
      %4254 = vmatmul.mubr.bf16.gmra.mrb[0].mxu0 %v4116
      %v4255 = vpop.f32.mrb[0].mxu0
      %v4256 = vadd.f32 0.0, %v4255
      %v4257 = vpop.f32.mrb[0].mxu0
      %v4258 = vpop.f32.mrb[0].mxu0
      %v4259 = vadd.f32 0.0, %v4258
      %v4260 = vpop.f32.mrb[0].mxu0
      %4261 = vmatprep.mubr.bf16.mxu0 0
      %4262 = vmatmul.mubr.bf16.gmra.mrb[0].mxu0 %v4119
      %v4263 = vpop.f32.mrb[0].mxu0
      %v4264 = vadd.f32 0.0, %v4263
      %v4265 = vpop.f32.mrb[0].mxu0
      %v4266 = vpop.f32.mrb[0].mxu0
      %v4267 = vadd.f32 0.0, %v4266
      %v4268 = vpop.f32.mrb[0].mxu0
      %4269 = vmatprep.mubr.bf16.mxu0 0
      %4270 = vmatmul.mubr.bf16.gmra.mrb[0].mxu0 %v4122
      %v4271 = vpop.f32.mrb[0].mxu0
      %v4272 = vadd.f32 0.0, %v4271
      %v4273 = vpop.f32.mrb[0].mxu0
      %v4274 = vpop.f32.mrb[0].mxu0
      %v4275 = vadd.f32 0.0, %v4274
      %v4276 = vpop.f32.mrb[0].mxu0
      %4277 = vmatprep.mubr.bf16.mxu0 0
      %4278 = vmatmul.mubr.bf16.gmra.mrb[0].mxu0 %v4125
      %v4279 = vpop.f32.mrb[0].mxu0
      %v4280 = vadd.f32 0.0, %v4279
      %v4281 = vpop.f32.mrb[0].mxu0
      %v4282 = vpop.f32.mrb[0].mxu0
      %v4283 = vadd.f32 0.0, %v4282
      %v4284 = vpop.f32.mrb[0].mxu0
      %4285 = vmatprep.mubr.bf16.mxu0 0
      %4286 = vmatmul.mubr.bf16.gmra.mrb[0].mxu0 %v4128
      %v4287 = vpop.f32.mrb[0].mxu0
      %v4288 = vadd.f32 0.0, %v4287
      %v4289 = vpop.f32.mrb[0].mxu0
      %v4290 = vpop.f32.mrb[0].mxu0
      %v4291 = vadd.f32 0.0, %v4290
      %v4292 = vpop.f32.mrb[0].mxu0
      %4293 = vmatprep.mubr.bf16.mxu0 0
      %4294 = vmatmul.mubr.bf16.gmra.mrb[0].mxu0 %v4131
      %v4295 = vpop.f32.mrb[0].mxu0
      %v4296 = vadd.f32 0.0, %v4295
      %v4297 = vpop.f32.mrb[0].mxu0
      %v4298 = vpop.f32.mrb[0].mxu0
      %v4299 = vadd.f32 0.0, %v4298
      %v4300 = vpop.f32.mrb[0].mxu0
      %4301 = vmatprep.mubr.bf16.mxu0 0
      %4302 = vmatmul.mubr.bf16.gmra.mrb[0].mxu0 %v4134
      %v4303 = vpop.f32.mrb[0].mxu0
      %v4304 = vadd.f32 0.0, %v4303
      %v4305 = vpop.f32.mrb[0].mxu0
      %v4306 = vpop.f32.mrb[0].mxu0
      %v4307 = vadd.f32 0.0, %v4306
      %v4308 = vpop.f32.mrb[0].mxu0
      %4309 = vmatprep.mubr.bf16.mxu0 0
      %4310 = vmatmul.mubr.bf16.gmra.mrb[0].mxu0 %v4137
      %v4311 = vpop.f32.mrb[0].mxu0
      %v4312 = vadd.f32 0.0, %v4311
      %v4313 = vpop.f32.mrb[0].mxu0
      %v4314 = vpop.f32.mrb[0].mxu0
      %v4315 = vadd.f32 0.0, %v4314
      %v4316 = vpop.f32.mrb[0].mxu0
      %4317 = vmatprep.mubr.bf16.mxu0 0
      %4318 = vmatmul.mubr.bf16.gmra.mrb[0].mxu0 %v4140
      %v4319 = vpop.f32.mrb[0].mxu0
      %v4320 = vadd.f32 0.0, %v4319
      %v4321 = vpop.f32.mrb[0].mxu0
      %v4322 = vpop.f32.mrb[0].mxu0
      %v4323 = vadd.f32 0.0, %v4322
      %v4324 = vpop.f32.mrb[0].mxu0
      %4325 = vmatprep.mubr.bf16.mxu0 0
      %4326 = vmatmul.mubr.bf16.gmra.mrb[0].mxu0 %v4143
      %v4327 = vpop.f32.mrb[0].mxu0
      %v4328 = vadd.f32 0.0, %v4327
      %v4329 = vpop.f32.mrb[0].mxu0
      %v4330 = vpop.f32.mrb[0].mxu0
      %v4331 = vadd.f32 0.0, %v4330
      %v4332 = vpop.f32.mrb[0].mxu0
      %4333 = vmatprep.mubr.bf16.mxu0 0
      %4334 = vmatmul.mubr.bf16.gmra.mrb[0].mxu0 %v4146
      %v4335 = vpop.f32.mrb[0].mxu0
      %v4336 = vadd.f32 0.0, %v4335
      %v4337 = vpop.f32.mrb[0].mxu0
      %v4338 = vpop.f32.mrb[0].mxu0
      %v4339 = vadd.f32 0.0, %v4338
      %v4340 = vpop.f32.mrb[0].mxu0
      %4341 = vmatprep.mubr.bf16.mxu0 0
      %4342 = vmatmul.mubr.bf16.gmra.mrb[0].mxu0 %v4149
      %v4343 = vpop.f32.mrb[0].mxu0
      %v4344 = vadd.f32 0.0, %v4343
      %v4345 = vpop.f32.mrb[0].mxu0
      %v4346 = vpop.f32.mrb[0].mxu0
      %v4347 = vadd.f32 0.0, %v4346
      %v4348 = vpop.f32.mrb[0].mxu0
      %4349 = vmatprep.mubr.bf16.mxu0 0
      %4350 = vmatmul.mubr.bf16.gmra.mrb[0].mxu0 %v4152
      %v4351 = vpop.f32.mrb[0].mxu0
      %v4352 = vadd.f32 0.0, %v4351
      %v4353 = vpop.f32.mrb[0].mxu0
      %v4354 = vpop.f32.mrb[0].mxu0
      %v4355 = vpop.f32.mrb[0].mxu0
      %4356 = vdwg.mxu0
      %v4357 = vadd.f32 %v4006, %v4192
      %v4358 = vadd.f32 %v4007, %v4195
      %v4359 = vadd.f32 %v4008, %v4200
      %v4360 = vadd.f32 %v4009, %v4203
      %v4361 = vadd.f32 %v4010, %v4208
      %v4362 = vadd.f32 %v4011, %v4211
      %v4363 = vadd.f32 %v4012, %v4216
      %v4364 = vadd.f32 %v4013, %v4219
      %v4365 = vadd.f32 %v4014, %v4224
      %v4366 = vadd.f32 %v4015, %v4227
      %v4367 = vadd.f32 %v4016, %v4232
      %v4368 = vadd.f32 %v4017, %v4235
      %v4369 = vadd.f32 %v4018, %v4240
      %v4370 = vadd.f32 %v4019, %v4243
      %v4371 = vadd.f32 %v4020, %v4248
      %v4372 = vadd.f32 %v4021, %v4251
      %v4373 = vadd.f32 %v4022, %v4256
      %v4374 = vadd.f32 %v4023, %v4259
      %v4375 = vadd.f32 %v4024, %v4264
      %v4376 = vadd.f32 %v4025, %v4267
      %v4377 = vadd.f32 %v4026, %v4272
      %v4378 = vadd.f32 %v4027, %v4275
      %v4379 = vadd.f32 %v4028, %v4280
      %v4380 = vadd.f32 %v4029, %v4283
      %v4381 = vadd.f32 %v4030, %v4288
      %v4382 = vadd.f32 %v4031, %v4291
      %v4383 = vadd.f32 %v4032, %v4296
      %v4384 = vadd.f32 %v4033, %v4299
      %v4385 = vadd.f32 %v4034, %v4304
      %v4386 = vadd.f32 %v4035, %v4307
      %v4387 = vadd.f32 %v4036, %v4312
      %v4388 = vadd.f32 %v4037, %v4315
      %v4389 = vadd.f32 %v4038, %v4320
      %v4390 = vadd.f32 %v4039, %v4323
      %v4391 = vadd.f32 %v4040, %v4328
      %v4392 = vadd.f32 %v4041, %v4331
      %v4393 = vadd.f32 %v4042, %v4336
      %v4394 = vadd.f32 %v4043, %v4339
      %v4395 = vadd.f32 %v4044, %v4344
      %v4396 = vadd.f32 %v4045, %v4347
      %v4397 = vadd.f32 %v4046, %v4352
      %v4398 = vld [vmem:[%s5] sm:$0x1]
      %v4400 = vlaneseq
      %v4401 = vshrl.u32 %v4400, 7
      %v4402 = vsub.s32 0, %v4401
      %v4403 = vrot.slane %v4398, %v4402
      %v4405 = vadd.f32 %v4357, %v4403
      %v4406 = vadd.f32 %v4358, %v4403
      %v4407 = vadd.f32 %v4359, %v4403
      %v4408 = vadd.f32 %v4360, %v4403
      %v4409 = vadd.f32 %v4361, %v4403
      %v4410 = vadd.f32 %v4362, %v4403
      %v4411 = vadd.f32 %v4363, %v4403
      %v4412 = vadd.f32 %v4364, %v4403
      %v4413 = vadd.f32 %v4365, %v4403
      %v4414 = vadd.f32 %v4366, %v4403
      %v4415 = vadd.f32 %v4367, %v4403
      %v4416 = vadd.f32 %v4368, %v4403
      %v4417 = vadd.f32 %v4369, %v4403
      %v4418 = vadd.f32 %v4370, %v4403
      %v4419 = vadd.f32 %v4371, %v4403
      %v4420 = vadd.f32 %v4372, %v4403
      %v4421 = vadd.f32 %v4373, %v4403
      %v4422 = vadd.f32 %v4374, %v4403
      %v4423 = vadd.f32 %v4375, %v4403
      %v4424 = vadd.f32 %v4376, %v4403
      %v4425 = vadd.f32 %v4377, %v4403
      %v4426 = vadd.f32 %v4378, %v4403
      %v4427 = vadd.f32 %v4379, %v4403
      %v4428 = vadd.f32 %v4380, %v4403
      %v4429 = vadd.f32 %v4381, %v4403
      %v4430 = vadd.f32 %v4382, %v4403
      %v4431 = vadd.f32 %v4383, %v4403
      %v4432 = vadd.f32 %v4384, %v4403
      %v4433 = vadd.f32 %v4385, %v4403
      %v4434 = vadd.f32 %v4386, %v4403
      %v4435 = vadd.f32 %v4387, %v4403
      %v4436 = vadd.f32 %v4388, %v4403
      %v4437 = vadd.f32 %v4389, %v4403
      %v4438 = vadd.f32 %v4390, %v4403
      %v4439 = vadd.f32 %v4391, %v4403
      %v4440 = vadd.f32 %v4392, %v4403
      %v4441 = vadd.f32 %v4393, %v4403
      %v4442 = vadd.f32 %v4394, %v4403
      %v4443 = vadd.f32 %v4395, %v4403
      %v4444 = vadd.f32 %v4396, %v4403
      %v4445 = vadd.f32 %v4397, %v4403
      %v4446 = vsub.f32 0.0, %v4405
      %v4447 = vsub.f32 0.0, %v4406
      %v4448 = vsub.f32 0.0, %v4407
      %v4449 = vsub.f32 0.0, %v4408
      %v4450 = vsub.f32 0.0, %v4409
      %v4451 = vsub.f32 0.0, %v4410
      %v4452 = vsub.f32 0.0, %v4411
      %v4453 = vsub.f32 0.0, %v4412
      %v4454 = vsub.f32 0.0, %v4413
      %v4455 = vsub.f32 0.0, %v4414
      %v4456 = vsub.f32 0.0, %v4415
      %v4457 = vsub.f32 0.0, %v4416
      %v4458 = vsub.f32 0.0, %v4417
      %v4459 = vsub.f32 0.0, %v4418
      %v4460 = vsub.f32 0.0, %v4419
      %v4461 = vsub.f32 0.0, %v4420
      %v4462 = vsub.f32 0.0, %v4421
      %v4463 = vsub.f32 0.0, %v4422
      %v4464 = vsub.f32 0.0, %v4423
      %v4465 = vsub.f32 0.0, %v4424
      %v4466 = vsub.f32 0.0, %v4425
      %v4467 = vsub.f32 0.0, %v4426
      %v4468 = vsub.f32 0.0, %v4427
      %v4469 = vsub.f32 0.0, %v4428
      %v4470 = vsub.f32 0.0, %v4429
      %v4471 = vsub.f32 0.0, %v4430
      %v4472 = vsub.f32 0.0, %v4431
      %v4473 = vsub.f32 0.0, %v4432
      %v4474 = vsub.f32 0.0, %v4433
      %v4475 = vsub.f32 0.0, %v4434
      %v4476 = vsub.f32 0.0, %v4435
      %v4477 = vsub.f32 0.0, %v4436
      %v4478 = vsub.f32 0.0, %v4437
      %v4479 = vsub.f32 0.0, %v4438
      %v4480 = vsub.f32 0.0, %v4439
      %v4481 = vsub.f32 0.0, %v4440
      %v4482 = vsub.f32 0.0, %v4441
      %v4483 = vsub.f32 0.0, %v4442
      %v4484 = vsub.f32 0.0, %v4443
      %v4485 = vsub.f32 0.0, %v4444
      %v4486 = vsub.f32 0.0, %v4445
      %v4487 = vmul.f32 %v4446, 1.442695
      %v4488 = vpow.pop %v4487
      %v4489 = vmul.f32 %v4447, 1.442695
      %v4490 = vpow.pop %v4489
      %v4491 = vmul.f32 %v4448, 1.442695
      %v4492 = vpow.pop %v4491
      %v4493 = vmul.f32 %v4449, 1.442695
      %v4494 = vpow.pop %v4493
      %v4495 = vmul.f32 %v4450, 1.442695
      %v4496 = vpow.pop %v4495
      %v4497 = vmul.f32 %v4451, 1.442695
      %v4498 = vpow.pop %v4497
      %v4499 = vmul.f32 %v4452, 1.442695
      %v4500 = vpow.pop %v4499
      %v4501 = vmul.f32 %v4453, 1.442695
      %v4502 = vpow.pop %v4501
      %v4503 = vmul.f32 %v4454, 1.442695
      %v4504 = vpow.pop %v4503
      %v4505 = vmul.f32 %v4455, 1.442695
      %v4506 = vpow.pop %v4505
      %v4507 = vmul.f32 %v4456, 1.442695
      %v4508 = vpow.pop %v4507
      %v4509 = vmul.f32 %v4457, 1.442695
      %v4510 = vpow.pop %v4509
      %v4511 = vmul.f32 %v4458, 1.442695
      %v4512 = vpow.pop %v4511
      %v4513 = vmul.f32 %v4459, 1.442695
      %v4514 = vpow.pop %v4513
      %v4515 = vmul.f32 %v4460, 1.442695
      %v4516 = vpow.pop %v4515
      %v4517 = vmul.f32 %v4461, 1.442695
      %v4518 = vpow.pop %v4517
      %v4519 = vmul.f32 %v4462, 1.442695
      %v4520 = vpow.pop %v4519
      %v4521 = vmul.f32 %v4463, 1.442695
      %v4522 = vpow.pop %v4521
      %v4523 = vmul.f32 %v4464, 1.442695
      %v4524 = vpow.pop %v4523
      %v4525 = vmul.f32 %v4465, 1.442695
      %v4526 = vpow.pop %v4525
      %v4527 = vmul.f32 %v4466, 1.442695
      %v4528 = vpow.pop %v4527
      %v4529 = vmul.f32 %v4467, 1.442695
      %v4530 = vpow.pop %v4529
      %v4531 = vmul.f32 %v4468, 1.442695
      %v4532 = vpow.pop %v4531
      %v4533 = vmul.f32 %v4469, 1.442695
      %v4534 = vpow.pop %v4533
      %v4535 = vmul.f32 %v4470, 1.442695
      %v4536 = vpow.pop %v4535
      %v4537 = vmul.f32 %v4471, 1.442695
      %v4538 = vpow.pop %v4537
      %v4539 = vmul.f32 %v4472, 1.442695
      %v4540 = vpow.pop %v4539
      %v4541 = vmul.f32 %v4473, 1.442695
      %v4542 = vpow.pop %v4541
      %v4543 = vmul.f32 %v4474, 1.442695
      %v4544 = vpow.pop %v4543
      %v4545 = vmul.f32 %v4475, 1.442695
      %v4546 = vpow.pop %v4545
      %v4547 = vmul.f32 %v4476, 1.442695
      %v4548 = vpow.pop %v4547
      %v4549 = vmul.f32 %v4477, 1.442695
      %v4550 = vpow.pop %v4549
      %v4551 = vmul.f32 %v4478, 1.442695
      %v4552 = vpow.pop %v4551
      %v4553 = vmul.f32 %v4479, 1.442695
      %v4554 = vpow.pop %v4553
      %v4555 = vmul.f32 %v4480, 1.442695
      %v4556 = vpow.pop %v4555
      %v4557 = vmul.f32 %v4481, 1.442695
      %v4558 = vpow.pop %v4557
      %v4559 = vmul.f32 %v4482, 1.442695
      %v4560 = vpow.pop %v4559
      %v4561 = vmul.f32 %v4483, 1.442695
      %v4562 = vpow.pop %v4561
      %v4563 = vmul.f32 %v4484, 1.442695
      %v4564 = vpow.pop %v4563
      %v4565 = vmul.f32 %v4485, 1.442695
      %v4566 = vpow.pop %v4565
      %v4567 = vmul.f32 %v4486, 1.442695
      %v4568 = vpow.pop %v4567
      %v4569 = vadd.f32 %v4488, 1.0
      %v4570 = vadd.f32 %v4490, 1.0
      %v4571 = vadd.f32 %v4492, 1.0
      %v4572 = vadd.f32 %v4494, 1.0
      %v4573 = vadd.f32 %v4496, 1.0
      %v4574 = vadd.f32 %v4498, 1.0
      %v4575 = vadd.f32 %v4500, 1.0
      %v4576 = vadd.f32 %v4502, 1.0
      %v4577 = vadd.f32 %v4504, 1.0
      %v4578 = vadd.f32 %v4506, 1.0
      %v4579 = vadd.f32 %v4508, 1.0
      %v4580 = vadd.f32 %v4510, 1.0
      %v4581 = vadd.f32 %v4512, 1.0
      %v4582 = vadd.f32 %v4514, 1.0
      %v4583 = vadd.f32 %v4516, 1.0
      %v4584 = vadd.f32 %v4518, 1.0
      %v4585 = vadd.f32 %v4520, 1.0
      %v4586 = vadd.f32 %v4522, 1.0
      %v4587 = vadd.f32 %v4524, 1.0
      %v4588 = vadd.f32 %v4526, 1.0
      %v4589 = vadd.f32 %v4528, 1.0
      %v4590 = vadd.f32 %v4530, 1.0
      %v4591 = vadd.f32 %v4532, 1.0
      %v4592 = vadd.f32 %v4534, 1.0
      %v4593 = vadd.f32 %v4536, 1.0
      %v4594 = vadd.f32 %v4538, 1.0
      %v4595 = vadd.f32 %v4540, 1.0
      %v4596 = vadd.f32 %v4542, 1.0
      %v4597 = vadd.f32 %v4544, 1.0
      %v4598 = vadd.f32 %v4546, 1.0
      %v4599 = vadd.f32 %v4548, 1.0
      %v4600 = vadd.f32 %v4550, 1.0
      %v4601 = vadd.f32 %v4552, 1.0
      %v4602 = vadd.f32 %v4554, 1.0
      %v4603 = vadd.f32 %v4556, 1.0
      %v4604 = vadd.f32 %v4558, 1.0
      %v4605 = vadd.f32 %v4560, 1.0
      %v4606 = vadd.f32 %v4562, 1.0
      %v4607 = vadd.f32 %v4564, 1.0
      %v4608 = vadd.f32 %v4566, 1.0
      %v4609 = vadd.f32 %v4568, 1.0
      %v4610 = vrcp.pop %v4569
      %v4611 = vrcp.pop %v4570
      %v4612 = vrcp.pop %v4571
      %v4613 = vrcp.pop %v4572
      %v4614 = vrcp.pop %v4573
      %v4615 = vrcp.pop %v4574
      %v4616 = vrcp.pop %v4575
      %v4617 = vrcp.pop %v4576
      %v4618 = vrcp.pop %v4577
      %v4619 = vrcp.pop %v4578
      %v4620 = vrcp.pop %v4579
      %v4621 = vrcp.pop %v4580
      %v4622 = vrcp.pop %v4581
      %v4623 = vrcp.pop %v4582
      %v4624 = vrcp.pop %v4583
      %v4625 = vrcp.pop %v4584
      %v4626 = vrcp.pop %v4585
      %v4627 = vrcp.pop %v4586
      %v4628 = vrcp.pop %v4587
      %v4629 = vrcp.pop %v4588
      %v4630 = vrcp.pop %v4589
      %v4631 = vrcp.pop %v4590
      %v4632 = vrcp.pop %v4591
      %v4633 = vrcp.pop %v4592
      %v4634 = vrcp.pop %v4593
      %v4635 = vrcp.pop %v4594
      %v4636 = vrcp.pop %v4595
      %v4637 = vrcp.pop %v4596
      %v4638 = vrcp.pop %v4597
      %v4639 = vrcp.pop %v4598
      %v4640 = vrcp.pop %v4599
      %v4641 = vrcp.pop %v4600
      %v4642 = vrcp.pop %v4601
      %v4643 = vrcp.pop %v4602
      %v4644 = vrcp.pop %v4603
      %v4645 = vrcp.pop %v4604
      %v4646 = vrcp.pop %v4605
      %v4647 = vrcp.pop %v4606
      %v4648 = vrcp.pop %v4607
      %v4649 = vrcp.pop %v4608
      %v4650 = vrcp.pop %v4609
      %v4651 = vmul.f32 %v4405, %v4610
      %v4652 = vmul.f32 %v4406, %v4611
      %v4653 = vmul.f32 %v4407, %v4612
      %v4654 = vmul.f32 %v4408, %v4613
      %v4655 = vmul.f32 %v4409, %v4614
      %v4656 = vmul.f32 %v4410, %v4615
      %v4657 = vmul.f32 %v4411, %v4616
      %v4658 = vmul.f32 %v4412, %v4617
      %v4659 = vmul.f32 %v4413, %v4618
      %v4660 = vmul.f32 %v4414, %v4619
      %v4661 = vmul.f32 %v4415, %v4620
      %v4662 = vmul.f32 %v4416, %v4621
      %v4663 = vmul.f32 %v4417, %v4622
      %v4664 = vmul.f32 %v4418, %v4623
      %v4665 = vmul.f32 %v4419, %v4624
      %v4666 = vmul.f32 %v4420, %v4625
      %v4667 = vmul.f32 %v4421, %v4626
      %v4668 = vmul.f32 %v4422, %v4627
      %v4669 = vmul.f32 %v4423, %v4628
      %v4670 = vmul.f32 %v4424, %v4629
      %v4671 = vmul.f32 %v4425, %v4630
      %v4672 = vmul.f32 %v4426, %v4631
      %v4673 = vmul.f32 %v4427, %v4632
      %v4674 = vmul.f32 %v4428, %v4633
      %v4675 = vmul.f32 %v4429, %v4634
      %v4676 = vmul.f32 %v4430, %v4635
      %v4677 = vmul.f32 %v4431, %v4636
      %v4678 = vmul.f32 %v4432, %v4637
      %v4679 = vmul.f32 %v4433, %v4638
      %v4680 = vmul.f32 %v4434, %v4639
      %v4681 = vmul.f32 %v4435, %v4640
      %v4682 = vmul.f32 %v4436, %v4641
      %v4683 = vmul.f32 %v4437, %v4642
      %v4684 = vmul.f32 %v4438, %v4643
      %v4685 = vmul.f32 %v4439, %v4644
      %v4686 = vmul.f32 %v4440, %v4645
      %v4687 = vmul.f32 %v4441, %v4646
      %v4688 = vmul.f32 %v4442, %v4647
      %v4689 = vmul.f32 %v4443, %v4648
      %v4690 = vmul.f32 %v4444, %v4649
      %v4691 = vmul.f32 %v4445, %v4650
      %vm4733 = vcmask 1044480
      %v4734 = vrot.slane %v1267, 3
      %v4735 = vrot.slane %v1268, 3
      %v4736 = vsel %vm4733, %v4734, %v4735
      %v4737 = vrot.slane %v1269, 3
      %v4738 = vsel %vm4733, %v4735, %v4737
      %v4739 = vrot.slane %v1270, 3
      %v4740 = vsel %vm4733, %v4737, %v4739
      %v4741 = vrot.slane %v1271, 3
      %v4742 = vsel %vm4733, %v4739, %v4741
      %v4743 = vrot.slane %v1272, 3
      %v4744 = vsel %vm4733, %v4741, %v4743
      %v4745 = vrot.slane %v1273, 3
      %v4746 = vsel %vm4733, %v4743, %v4745
      %v4747 = vrot.slane %v1274, 3
      %v4748 = vsel %vm4733, %v4745, %v4747
      %v4749 = vrot.slane %v1275, 3
      %v4750 = vsel %vm4733, %v4747, %v4749
      %v4751 = vrot.slane %v1276, 3
      %v4752 = vsel %vm4733, %v4749, %v4751
      %v4753 = vrot.slane %v1277, 3
      %v4754 = vsel %vm4733, %v4751, %v4753
      %v4755 = vrot.slane %v1278, 3
      %v4756 = vsel %vm4733, %v4753, %v4755
      %v4757 = vrot.slane %v1279, 3
      %v4758 = vsel %vm4733, %v4755, %v4757
      %v4759 = vrot.slane %v1280, 3
      %v4760 = vsel %vm4733, %v4757, %v4759
      %v4761 = vrot.slane %v1281, 3
      %v4762 = vsel %vm4733, %v4759, %v4761
      %v4763 = vrot.slane %v1282, 3
      %v4764 = vsel %vm4733, %v4761, %v4763
      %v4765 = vrot.slane %v1283, 3
      %v4766 = vsel %vm4733, %v4763, %v4765
      %v4767 = vrot.slane %v1284, 3
      %v4768 = vsel %vm4733, %v4765, %v4767
      %v4769 = vrot.slane %v1285, 3
      %v4770 = vsel %vm4733, %v4767, %v4769
      %v4771 = vrot.slane %v1286, 3
      %v4772 = vsel %vm4733, %v4769, %v4771
      %v4773 = vrot.slane %v1287, 3
      %v4774 = vsel %vm4733, %v4771, %v4773
      %v4775 = vrot.slane %v1288, 3
      %v4776 = vsel %vm4733, %v4773, %v4775
      %v4777 = vrot.slane %v1289, 3
      %v4778 = vsel %vm4733, %v4775, %v4777
      %v4779 = vrot.slane %v1290, 3
      %v4780 = vsel %vm4733, %v4777, %v4779
      %v4781 = vrot.slane %v1291, 3
      %v4782 = vsel %vm4733, %v4779, %v4781
      %v4783 = vrot.slane %v1292, 3
      %v4784 = vsel %vm4733, %v4781, %v4783
      %v4785 = vrot.slane %v1293, 3
      %v4786 = vsel %vm4733, %v4783, %v4785
      %v4787 = vrot.slane %v1294, 3
      %v4788 = vsel %vm4733, %v4785, %v4787
      %v4789 = vrot.slane %v1295, 3
      %v4790 = vsel %vm4733, %v4787, %v4789
      %v4791 = vrot.slane %v1296, 3
      %v4792 = vsel %vm4733, %v4789, %v4791
      %v4793 = vrot.slane %v1297, 3
      %v4794 = vsel %vm4733, %v4791, %v4793
      %v4795 = vrot.slane %v1298, 3
      %v4796 = vsel %vm4733, %v4793, %v4795
      %v4797 = vrot.slane %v1299, 3
      %v4798 = vsel %vm4733, %v4795, %v4797
      %v4799 = vrot.slane %v1300, 3
      %v4800 = vsel %vm4733, %v4797, %v4799
      %v4801 = vrot.slane %v1301, 3
      %v4802 = vsel %vm4733, %v4799, %v4801
      %v4803 = vrot.slane %v1302, 3
      %v4804 = vsel %vm4733, %v4801, %v4803
      %v4805 = vrot.slane %v1303, 3
      %v4806 = vsel %vm4733, %v4803, %v4805
      %v4807 = vrot.slane %v1304, 3
      %v4808 = vsel %vm4733, %v4805, %v4807
      %v4809 = vrot.slane %v1305, 3
      %v4810 = vsel %vm4733, %v4807, %v4809
      %v4811 = vrot.slane %v1306, 3
      %v4812 = vsel %vm4733, %v4809, %v4811
      %v4813 = vrot.slane %v1307, 3
      %v4814 = vsel %vm4733, %v4811, %v4813
      %v4856 = vadd.f32 %v4651, %v4736
      %v4857 = vadd.f32 %v4652, %v4738
      %v4858 = vadd.f32 %v4653, %v4740
      %v4859 = vadd.f32 %v4654, %v4742
      %v4860 = vadd.f32 %v4655, %v4744
      %v4861 = vadd.f32 %v4656, %v4746
      %v4862 = vadd.f32 %v4657, %v4748
      %v4863 = vadd.f32 %v4658, %v4750
      %v4864 = vadd.f32 %v4659, %v4752
      %v4865 = vadd.f32 %v4660, %v4754
      %v4866 = vadd.f32 %v4661, %v4756
      %v4867 = vadd.f32 %v4662, %v4758
      %v4868 = vadd.f32 %v4663, %v4760
      %v4869 = vadd.f32 %v4664, %v4762
      %v4870 = vadd.f32 %v4665, %v4764
      %v4871 = vadd.f32 %v4666, %v4766
      %v4872 = vadd.f32 %v4667, %v4768
      %v4873 = vadd.f32 %v4668, %v4770
      %v4874 = vadd.f32 %v4669, %v4772
      %v4875 = vadd.f32 %v4670, %v4774
      %v4876 = vadd.f32 %v4671, %v4776
      %v4877 = vadd.f32 %v4672, %v4778
      %v4878 = vadd.f32 %v4673, %v4780
      %v4879 = vadd.f32 %v4674, %v4782
      %v4880 = vadd.f32 %v4675, %v4784
      %v4881 = vadd.f32 %v4676, %v4786
      %v4882 = vadd.f32 %v4677, %v4788
      %v4883 = vadd.f32 %v4678, %v4790
      %v4884 = vadd.f32 %v4679, %v4792
      %v4885 = vadd.f32 %v4680, %v4794
      %v4886 = vadd.f32 %v4681, %v4796
      %v4887 = vadd.f32 %v4682, %v4798
      %v4888 = vadd.f32 %v4683, %v4800
      %v4889 = vadd.f32 %v4684, %v4802
      %v4890 = vadd.f32 %v4685, %v4804
      %v4891 = vadd.f32 %v4686, %v4806
      %v4892 = vadd.f32 %v4687, %v4808
      %v4893 = vadd.f32 %v4688, %v4810
      %v4894 = vadd.f32 %v4689, %v4812
      %v4895 = vadd.f32 %v4690, %v4814
      %v4896 = vadd.f32 %v4691, %v4813
      %4897 = vst.msk [vmem:[%s251] sm:$0xff] %vm1505, %v4856
      %4898 = vst.msk [vmem:[%s251 + $0x8] sm:$0xff] %vm1505, %v4857
      %4899 = vst.msk [vmem:[%s251 + $0x10] sm:$0xff] %vm1505, %v4858
      %4900 = vst.msk [vmem:[%s251 + $0x18] sm:$0xff] %vm1505, %v4859
      %4901 = vst.msk [vmem:[%s251 + $0x20] sm:$0xff] %vm1505, %v4860
      %4902 = vst.msk [vmem:[%s251 + $0x28] sm:$0xff] %vm1505, %v4861
      %4903 = vst.msk [vmem:[%s251 + $0x30] sm:$0xff] %vm1505, %v4862
      %4904 = vst.msk [vmem:[%s251 + $0x38] sm:$0xff] %vm1505, %v4863
      %4905 = vst.msk [vmem:[%s251 + $0x40] sm:$0xff] %vm1505, %v4864
      %4906 = vst.msk [vmem:[%s251 + $0x48] sm:$0xff] %vm1505, %v4865
      %4907 = vst.msk [vmem:[%s251 + $0x50] sm:$0xff] %vm1505, %v4866
      %4908 = vst.msk [vmem:[%s251 + $0x58] sm:$0xff] %vm1505, %v4867
      %4909 = vst.msk [vmem:[%s251 + $0x60] sm:$0xff] %vm1505, %v4868
      %4910 = vst.msk [vmem:[%s251 + $0x68] sm:$0xff] %vm1505, %v4869
      %4911 = vst.msk [vmem:[%s251 + $0x70] sm:$0xff] %vm1505, %v4870
      %4912 = vst.msk [vmem:[%s251 + $0x78] sm:$0xff] %vm1505, %v4871
      %4913 = vst.msk [vmem:[%s251 + $0x80] sm:$0xff] %vm1505, %v4872
      %4914 = vst.msk [vmem:[%s251 + $0x88] sm:$0xff] %vm1505, %v4873
      %4915 = vst.msk [vmem:[%s251 + $0x90] sm:$0xff] %vm1505, %v4874
      %4916 = vst.msk [vmem:[%s251 + $0x98] sm:$0xff] %vm1505, %v4875
      %4917 = vst.msk [vmem:[%s251 + $0xa0] sm:$0xff] %vm1505, %v4876
      %4918 = vst.msk [vmem:[%s251 + $0xa8] sm:$0xff] %vm1505, %v4877
      %4919 = vst.msk [vmem:[%s251 + $0xb0] sm:$0xff] %vm1505, %v4878
      %4920 = vst.msk [vmem:[%s251 + $0xb8] sm:$0xff] %vm1505, %v4879
      %4921 = vst.msk [vmem:[%s251 + $0xc0] sm:$0xff] %vm1505, %v4880
      %4922 = vst.msk [vmem:[%s251 + $0xc8] sm:$0xff] %vm1505, %v4881
      %4923 = vst.msk [vmem:[%s251 + $0xd0] sm:$0xff] %vm1505, %v4882
      %4924 = vst.msk [vmem:[%s251 + $0xd8] sm:$0xff] %vm1505, %v4883
      %4925 = vst.msk [vmem:[%s251 + $0xe0] sm:$0xff] %vm1505, %v4884
      %4926 = vst.msk [vmem:[%s251 + $0xe8] sm:$0xff] %vm1505, %v4885
      %4927 = vst.msk [vmem:[%s251 + $0xf0] sm:$0xff] %vm1505, %v4886
      %4928 = vst.msk [vmem:[%s251 + $0xf8] sm:$0xff] %vm1505, %v4887
      %4929 = vst.msk [vmem:[%s251 + $0x100] sm:$0xff] %vm1505, %v4888
      %4930 = vst.msk [vmem:[%s251 + $0x108] sm:$0xff] %vm1505, %v4889
      %4931 = vst.msk [vmem:[%s251 + $0x110] sm:$0xff] %vm1505, %v4890
      %4932 = vst.msk [vmem:[%s251 + $0x118] sm:$0xff] %vm1505, %v4891
      %4933 = vst.msk [vmem:[%s251 + $0x120] sm:$0xff] %vm1505, %v4892
      %4934 = vst.msk [vmem:[%s251 + $0x128] sm:$0xff] %vm1505, %v4893
      %4935 = vst.msk [vmem:[%s251 + $0x130] sm:$0xff] %vm1505, %v4894
      %4936 = vst.msk [vmem:[%s251 + $0x138] sm:$0xff] %vm1505, %v4895
      %vm4937 = vcmask 60416
      %4938 = vst.msk [vmem:[%s251 + $0x140] sm:$0xf] %vm4937, %v4896
      %p4939 = scmp.lt.s32.totalorder %s17, 1
      %s4940 = scalar_select %p4939, %s17, 1
      %s4941 = smul.addr %s4940, 41
      %s4942 = smul.addr %s4941, 8
      %s4943 = scalar_lea.vmem %s6, %s4942
      // Predicated region
      $region45: #{_lambda_.1} parent=43 // pred_check
        %p4944 = pneg %p166
      $region46: #{_lambda_.1} parent=43 // pred_check_branch
        %4946 = sbr.rel (%p4944) target = $region48
      $region47: #{_lambda_.1} parent=43 // pred_region
        _
      $region48: #{_lambda_.1} parent=43 // pred_fallthru
        _
    $region44: #{_lambda_.1} parent=5 // pred_fallthru
      _
    %p4947 = scmp.le.s32.totalorder 2, %s12
    // Predicated region
    $region49: #{_lambda_.1} parent=5 // pred_check
      %p4948 = pneg %p4947
    $region50: #{_lambda_.1} parent=5 // pred_check_branch
      %4950 = sbr.rel (%p4948) target = $region52
    $region51: #{_lambda_.1} parent=5 // pred_region
      %s4951 = ssub.s32 %s12, 2
      // Predicated region
      $region53: #{_lambda_.1} parent=51 // pred_check
        %p4952 = pneg %p172
      $region54: #{_lambda_.1} parent=51 // pred_check_branch
        %4954 = sbr.rel (%p4952) target = $region56
      $region55: #{_lambda_.1} parent=51 // pred_region
        %p4955 = scmp.lt.s32.totalorder %s18, 1
        %s4956 = scalar_select %p4955, %s18, 1
        %s4957 = smul.addr %s4956, 41
        %s4958 = smul.addr %s4957, 8
        %s4959 = scalar_lea.vmem %s6, %s4958
      $region56: #{_lambda_.1} parent=51 // pred_fallthru
        _
    $region52: #{_lambda_.1} parent=5 // pred_fallthru
      _
  $region6: #{_lambda_.1} parent=0 // loop_footer
    %s16 = sadd.s32 1, %s12
  $region7: #{_lambda_.1} parent=0 // loop_footer_branch
    %11 = sbr.rel target = $region3
  $region8: #{_lambda_.1} parent=0 // loop_exit
    _

</llo_original>
